<compile_context>
chip_gen: v7x
topology: tpu7x:2x2x1
jax: 0.10.0
libtpu: 0.0.40
codegen_flags: <defaults>
</compile_context>

<pallas_src>
import math
import functools

import jax
import jax.numpy as jnp
from jax import lax
from jax.experimental import pallas as pl
from jax.experimental.pallas import tpu as pltpu


# ----------------------------------------------------------------------------
# Config
# ----------------------------------------------------------------------------

CFG = dict(
    vocab_size=64,
    max_position=32,
    type_vocab=2,
    hidden=128,
    num_heads=4,
    intermediate=256,
    num_layers=2,
    output_dim=8,     # classifier classes (Linear(768 -> output_dim) analogue)
    seq=8,
    batch=2,
)

LANE = 128            # classifier logits padded to a lane-dense width
LN_EPS = 1e-12


# ----------------------------------------------------------------------------
# In-kernel helpers
# ----------------------------------------------------------------------------

def _ln(x, g, b, eps=LN_EPS):
    """LayerNorm over the last axis (f32 statistics)."""
    mu = jnp.mean(x, axis=-1, keepdims=True)
    d = x - mu
    var = jnp.mean(d * d, axis=-1, keepdims=True)
    return d * lax.rsqrt(var + eps) * g + b


# ----------------------------------------------------------------------------
# Pallas kernels
# ----------------------------------------------------------------------------

def _emb_ln_kernel(x_ref, g_ref, b_ref, o_ref):
    o_ref[...] = _ln(x_ref[...], g_ref[...], b_ref[...]).astype(o_ref.dtype)


def embedding_layernorm(x2d, gamma2d, beta2d):
    """x2d: (M, H) -> LayerNorm(x2d) in one grid-less pallas_call."""
    M, H = x2d.shape
    return pl.pallas_call(
        _emb_ln_kernel,
        out_shape=jax.ShapeDtypeStruct((M, H), jnp.float32),
        in_specs=[
            pl.BlockSpec((M, H), lambda: (0, 0)),
            pl.BlockSpec((1, H), lambda: (0, 0)),
            pl.BlockSpec((1, H), lambda: (0, 0)),
        ],
        out_specs=pl.BlockSpec((M, H), lambda: (0, 0)),
    )(x2d, gamma2d, beta2d)


def _encoder_layer_kernel(x_ref, bias_ref,
                          wqkv_ref, bqkv_ref, wo_ref, bo_ref,
                          ln1_g_ref, ln1_b_ref,
                          wi_ref, bi_ref, wo2_ref, bo2_ref,
                          ln2_g_ref, ln2_b_ref,
                          o_ref, *, num_heads, head_dim):
    """One full BERT encoder layer for a single sequence, fully in VMEM."""
    H = num_heads * head_dim
    x = x_ref[0]                      # (S, H) f32
    S = x.shape[0]
    bias = bias_ref[0]                # (1, S) additive key-mask bias
    x_bf = x.astype(jnp.bfloat16)

    # --- fused Q|K|V projection: one (S,H)x(H,3H) matmul on the MXU ---
    qkv = jnp.dot(x_bf, wqkv_ref[...],
                  preferred_element_type=jnp.float32) + bqkv_ref[...]   # (S, 3H)

    wo = wo_ref[...]                  # (H, H) bf16
    scale = 1.0 / math.sqrt(head_dim)

    # --- multi-head attention, output projection folded into the head loop:
    #     attn_out = sum_h softmax(q_h k_h^T + bias) v_h @ wo[h*dh:(h+1)*dh, :]
    attn_out = jnp.zeros((S, H), jnp.float32)
    for h in range(num_heads):        # static loop, nH=4
        lo = h * head_dim
        qh = qkv[:, lo:lo + head_dim]                 # (S, dh)
        kh = qkv[:, H + lo:H + lo + head_dim]         # (S, dh)
        vh = qkv[:, 2 * H + lo:2 * H + lo + head_dim]  # (S, dh)

        s = jnp.dot(qh, kh.T, preferred_element_type=jnp.float32) * scale + bias
        m = jnp.max(s, axis=-1, keepdims=True)
        p = jnp.exp(s - m)
        denom = jnp.sum(p, axis=-1, keepdims=True)
        p = p * pl.reciprocal(denom, approx=True)     # EUP reciprocal

        ctx_h = jnp.dot(p, vh, preferred_element_type=jnp.float32)     # (S, dh)
        attn_out = attn_out + jnp.dot(
            ctx_h.astype(jnp.bfloat16), wo[lo:lo + head_dim, :],
            preferred_element_type=jnp.float32)
    attn_out = attn_out + bo_ref[...]

    # --- residual add + LayerNorm (fused epilogue, stays in VMEM) ---
    h1 = _ln(attn_out + x, ln1_g_ref[...], ln1_b_ref[...])

    # --- FFN with GELU ---
    # TODO(synk): PyTorch BertIntermediate uses erf-GELU; tanh approximation here.
    inter = jnp.dot(h1.astype(jnp.bfloat16), wi_ref[...],
                    preferred_element_type=jnp.float32) + bi_ref[...]
    inter = jax.nn.gelu(inter, approximate=True)
    ffn = jnp.dot(inter.astype(jnp.bfloat16), wo2_ref[...],
                  preferred_element_type=jnp.float32) + bo2_ref[...]

    # --- residual add + LayerNorm epilogue ---
    o_ref[0] = _ln(ffn + h1, ln2_g_ref[...], ln2_b_ref[...]).astype(o_ref.dtype)


def encoder_layer(x, bias, lyr, cfg):
    """x: (B, S, H) f32, bias: (B, 1, S) f32. One fused pallas_call, grid over B."""
    B, S, H = x.shape
    nH = cfg["num_heads"]
    dh = H // nH
    I = cfg["intermediate"]
    kernel = functools.partial(_encoder_layer_kernel, num_heads=nH, head_dim=dh)
    full = lambda b: (0, 0)   # weights: same block every grid step -> stay resident
    return pl.pallas_call(
        kernel,
        out_shape=jax.ShapeDtypeStruct((B, S, H), jnp.float32),
        grid=(B,),
        in_specs=[
            pl.BlockSpec((1, S, H), lambda b: (b, 0, 0)),   # activations
            pl.BlockSpec((1, 1, S), lambda b: (b, 0, 0)),   # attention mask bias
            pl.BlockSpec((H, 3 * H), full),                 # wqkv (bf16)
            pl.BlockSpec((1, 3 * H), full),                 # bqkv
            pl.BlockSpec((H, H), full),                     # wo (bf16)
            pl.BlockSpec((1, H), full),                     # bo
            pl.BlockSpec((1, H), full),                     # ln1 gamma
            pl.BlockSpec((1, H), full),                     # ln1 beta
            pl.BlockSpec((H, I), full),                     # wi (bf16)
            pl.BlockSpec((1, I), full),                     # bi
            pl.BlockSpec((I, H), full),                     # wo2 (bf16)
            pl.BlockSpec((1, H), full),                     # bo2
            pl.BlockSpec((1, H), full),                     # ln2 gamma
            pl.BlockSpec((1, H), full),                     # ln2 beta
        ],
        out_specs=pl.BlockSpec((1, S, H), lambda b: (b, 0, 0)),
        compiler_params=pltpu.CompilerParams(
            dimension_semantics=("parallel",)),             # v7x: split batch over 2 TCs
    )(x, bias, lyr["wqkv"], lyr["bqkv"], lyr["wo"], lyr["bo"],
      lyr["ln1_g"], lyr["ln1_b"], lyr["wi"], lyr["bi"],
      lyr["wo2"], lyr["bo2"], lyr["ln2_g"], lyr["ln2_b"])


def _pool_cls_kernel(cls_ref, pw_ref, pb_ref, cw_ref, cb_ref, o_ref):
    pooled = jnp.tanh(
        jnp.dot(cls_ref[...].astype(jnp.bfloat16), pw_ref[...],
                preferred_element_type=jnp.float32) + pb_ref[...])
    # dropout is identity in eval mode
    logits = jnp.dot(pooled.astype(jnp.bfloat16), cw_ref[...],
                     preferred_element_type=jnp.float32) + cb_ref[...]
    o_ref[...] = logits.astype(o_ref.dtype)


def pooler_classifier(cls_tok, pool_w, pool_b2, cls_w_pad, cls_b_pad):
    """Fused pooler(tanh) + classifier head; lane-dense padded logits (B, 128)."""
    B, H = cls_tok.shape
    P = cls_w_pad.shape[1]
    return pl.pallas_call(
        _pool_cls_kernel,
        out_shape=jax.ShapeDtypeStruct((B, P), jnp.float32),
        in_specs=[
            pl.BlockSpec((B, H), lambda: (0, 0)),
            pl.BlockSpec((H, H), lambda: (0, 0)),
            pl.BlockSpec((1, H), lambda: (0, 0)),
            pl.BlockSpec((H, P), lambda: (0, 0)),
            pl.BlockSpec((1, P), lambda: (0, 0)),
        ],
        out_specs=pl.BlockSpec((B, P), lambda: (0, 0)),
    )(cls_tok, pool_w, pool_b2, cls_w_pad, cls_b_pad)


# ----------------------------------------------------------------------------
# Parameters (deterministic init) and weight packing for the fused kernels
# ----------------------------------------------------------------------------

def init_params(key, cfg):
    H = cfg["hidden"]
    I = cfg["intermediate"]
    std = 0.02

    def nrm(k, shape):
        return jax.random.normal(k, shape, dtype=jnp.float32) * std

    keys = iter(jax.random.split(key, 64))
    p = {
        "word_emb": nrm(next(keys), (cfg["vocab_size"], H)),
        "pos_emb": nrm(next(keys), (cfg["max_position"], H)),
        "type_emb": nrm(next(keys), (cfg["type_vocab"], H)),
        "emb_ln_g": jnp.ones((H,), jnp.float32),
        "emb_ln_b": jnp.zeros((H,), jnp.float32),
        "layers": [],
        "pool_w": nrm(next(keys), (H, H)),
        "pool_b": jnp.zeros((H,), jnp.float32),
        "cls_w": nrm(next(keys), (H, cfg["output_dim"])),   # linear1 weight (in, out)
        "cls_b": jnp.zeros((cfg["output_dim"],), jnp.float32),
    }
    for _ in range(cfg["num_layers"]):
        p["layers"].append({
            "wq": nrm(next(keys), (H, H)), "bq": jnp.zeros((H,), jnp.float32),
            "wk": nrm(next(keys), (H, H)), "bk": jnp.zeros((H,), jnp.float32),
            "wv": nrm(next(keys), (H, H)), "bv": jnp.zeros((H,), jnp.float32),
            "wo": nrm(next(keys), (H, H)), "bo": jnp.zeros((H,), jnp.float32),
            "attn_ln_g": jnp.ones((H,), jnp.float32),
            "attn_ln_b": jnp.zeros((H,), jnp.float32),
            "wi": nrm(next(keys), (H, I)), "bi": jnp.zeros((I,), jnp.float32),
            "wo2": nrm(next(keys), (I, H)), "bo2": jnp.zeros((H,), jnp.float32),
            "out_ln_g": jnp.ones((H,), jnp.float32),
            "out_ln_b": jnp.zeros((H,), jnp.float32),
        })
    return p


def prepare_params(params, cfg):
    """Pack weights for the fused kernels: QKV concat, bf16 matmul weights,
    2-D biases/LN params, lane-dense padded classifier head."""
    H = cfg["hidden"]
    I = cfg["intermediate"]
    P = LANE
    out_dim = cfg["output_dim"]
    prepped = {
        "word_emb": params["word_emb"],
        "pos_emb": params["pos_emb"],
        "type_emb": params["type_emb"],
        "emb_ln_g": params["emb_ln_g"].reshape(1, H),
        "emb_ln_b": params["emb_ln_b"].reshape(1, H),
        "pool_w": params["pool_w"].astype(jnp.bfloat16),
        "pool_b": params["pool_b"].reshape(1, H),
        "cls_w_pad": jnp.zeros((H, P), jnp.bfloat16).at[:, :out_dim].set(
            params["cls_w"].astype(jnp.bfloat16)),
        "cls_b_pad": jnp.zeros((1, P), jnp.float32).at[0, :out_dim].set(
            params["cls_b"]),
        "layers": [],
    }
    for lyr in params["layers"]:
        prepped["layers"].append({
            "wqkv": jnp.concatenate(
                [lyr["wq"], lyr["wk"], lyr["wv"]], axis=1).astype(jnp.bfloat16),
            "bqkv": jnp.concatenate(
                [lyr["bq"], lyr["bk"], lyr["bv"]]).reshape(1, 3 * H),
            "wo": lyr["wo"].astype(jnp.bfloat16),
            "bo": lyr["bo"].reshape(1, H),
            "ln1_g": lyr["attn_ln_g"].reshape(1, H),
            "ln1_b": lyr["attn_ln_b"].reshape(1, H),
            "wi": lyr["wi"].astype(jnp.bfloat16),
            "bi": lyr["bi"].reshape(1, I),
            "wo2": lyr["wo2"].astype(jnp.bfloat16),
            "bo2": lyr["bo2"].reshape(1, H),
            "ln2_g": lyr["out_ln_g"].reshape(1, H),
            "ln2_b": lyr["out_ln_b"].reshape(1, H),
        })
    return prepped


# ----------------------------------------------------------------------------
# Forward pass (embedding gather in JAX glue; everything else in Pallas)
# ----------------------------------------------------------------------------

def bert_classifier_forward(prepped, input_ids, mask, cfg):
    B, S = input_ids.shape
    H = cfg["hidden"]

    # --- embeddings: gather (XLA glue) + fused LayerNorm (Pallas) ---
    tok = jnp.take(prepped["word_emb"], input_ids, axis=0)        # (B, S, H)
    pos = prepped["pos_emb"][:S][None, :, :]                      # (1, S, H)
    typ = prepped["type_emb"][0][None, None, :]                   # token_type_ids == 0
    emb = (tok + pos + typ).astype(jnp.float32)
    h = embedding_layernorm(emb.reshape(B * S, H),
                            prepped["emb_ln_g"],
                            prepped["emb_ln_b"]).reshape(B, S, H)

    # additive attention mask: (1 - mask) * -1e9, shape (B, 1, S)
    bias = ((1.0 - mask.astype(jnp.float32)) * -1e9).reshape(B, 1, S)

    # --- encoder: one fused Pallas kernel per layer ---
    for lyr in prepped["layers"]:
        h = encoder_layer(h, bias, lyr, cfg)

    # --- pooler (tanh on [CLS]) + dropout(identity) + classifier, fused ---
    cls_tok = h[:, 0, :]                                          # (B, H)
    logits_pad = pooler_classifier(cls_tok, prepped["pool_w"], prepped["pool_b"],
                                   prepped["cls_w_pad"], prepped["cls_b_pad"])
    return logits_pad[:, :cfg["output_dim"]]                      # (B, output_dim)


# ----------------------------------------------------------------------------
# Main
# ----------------------------------------------------------------------------

if __name__ == "__main__":
    cfg = CFG
    key = jax.random.PRNGKey(0)
    k_param, k_ids = jax.random.split(key)

    params = init_params(k_param, cfg)
    prepped = prepare_params(params, cfg)

    B, S = cfg["batch"], cfg["seq"]
    input_ids = jax.random.randint(k_ids, (B, S), 0, cfg["vocab_size"], dtype=jnp.int32)
    # attention mask: second example has 2 padded positions at the tail
    mask = jnp.array([[1] * S, [1] * (S - 2) + [0, 0]], dtype=jnp.int32)

    fwd = jax.jit(functools.partial(bert_classifier_forward, cfg=cfg))
    logits = fwd(prepped, input_ids, mask)
    jax.block_until_ready(logits)

    assert logits.shape == (B, cfg["output_dim"])
    assert jnp.all(jnp.isfinite(logits))
    print("KERNEL_OK")
</pallas_src>

<mosaic_0001>
module attributes {stable_mosaic.version = 11 : i64} {
  func.func @_emb_ln_kernel(%arg0: memref<16x128xf32, #tpu.memory_space<vmem>>, %arg1: memref<1x128xf32, #tpu.memory_space<vmem>>, %arg2: memref<1x128xf32, #tpu.memory_space<vmem>>, %arg3: memref<16x128xf32, #tpu.memory_space<vmem>>) attributes {dimension_semantics = [], scalar_prefetch = 0 : i64, scratch_operands = 0 : i64, tpu.core_type = #tpu.core_type<tc>} {
    %c0 = arith.constant 0 : index
    %c0_0 = arith.constant 0 : index
    %0 = vector.load %arg0[%c0, %c0_0] : memref<16x128xf32, #tpu.memory_space<vmem>>, vector<16x128xf32>
    %c0_1 = arith.constant 0 : index
    %c0_2 = arith.constant 0 : index
    %1 = vector.load %arg1[%c0_1, %c0_2] : memref<1x128xf32, #tpu.memory_space<vmem>>, vector<1x128xf32>
    %c0_3 = arith.constant 0 : index
    %c0_4 = arith.constant 0 : index
    %2 = vector.load %arg2[%c0_3, %c0_4] : memref<1x128xf32, #tpu.memory_space<vmem>>, vector<1x128xf32>
    %cst = arith.constant dense<0.000000e+00> : vector<16xf32>
    %3 = vector.multi_reduction <add>, %0, %cst [1] : vector<16x128xf32> to vector<16xf32>
    %4 = vector.shape_cast %3 : vector<16xf32> to vector<16x1xf32>
    %cst_5 = arith.constant 1.280000e+02 : f32
    %5 = vector.broadcast %cst_5 : f32 to vector<16x1xf32>
    %6 = arith.divf %4, %5 : vector<16x1xf32>
    %7 = vector.broadcast %6 : vector<16x1xf32> to vector<16x128xf32>
    %8 = arith.subf %0, %7 : vector<16x128xf32>
    %9 = arith.mulf %8, %8 : vector<16x128xf32>
    %cst_6 = arith.constant dense<0.000000e+00> : vector<16xf32>
    %10 = vector.multi_reduction <add>, %9, %cst_6 [1] : vector<16x128xf32> to vector<16xf32>
    %11 = vector.shape_cast %10 : vector<16xf32> to vector<16x1xf32>
    %cst_7 = arith.constant 1.280000e+02 : f32
    %12 = vector.broadcast %cst_7 : f32 to vector<16x1xf32>
    %13 = arith.divf %11, %12 : vector<16x1xf32>
    %cst_8 = arith.constant 9.99999996E-13 : f32
    %14 = vector.broadcast %cst_8 : f32 to vector<16x1xf32>
    %15 = arith.addf %13, %14 : vector<16x1xf32>
    %16 = math.rsqrt %15 : vector<16x1xf32>
    %17 = vector.broadcast %16 : vector<16x1xf32> to vector<16x128xf32>
    %18 = arith.mulf %8, %17 : vector<16x128xf32>
    %19 = vector.broadcast %1 : vector<1x128xf32> to vector<16x128xf32>
    %20 = arith.mulf %18, %19 : vector<16x128xf32>
    %21 = vector.broadcast %2 : vector<1x128xf32> to vector<16x128xf32>
    %22 = arith.addf %20, %21 : vector<16x128xf32>
    %c0_9 = arith.constant 0 : index
    %c0_10 = arith.constant 0 : index
    %23 = vector.load %arg3[%c0_9, %c0_10] : memref<16x128xf32, #tpu.memory_space<vmem>>, vector<16x128xf32>
    tpu.vector_store %arg3[%c0_9, %c0_10], %22 {strides = array<i32>} : memref<16x128xf32, #tpu.memory_space<vmem>>, vector<16x128xf32>,
    return
  }
}

module attributes {stable_mosaic.version = 11 : i64} {
  func.func @_pool_cls_kernel(%arg0: memref<2x128xf32, #tpu.memory_space<vmem>>, %arg1: memref<128x128xbf16, #tpu.memory_space<vmem>>, %arg2: memref<1x128xf32, #tpu.memory_space<vmem>>, %arg3: memref<128x128xbf16, #tpu.memory_space<vmem>>, %arg4: memref<1x128xf32, #tpu.memory_space<vmem>>, %arg5: memref<2x128xf32, #tpu.memory_space<vmem>>) attributes {dimension_semantics = [], scalar_prefetch = 0 : i64, scratch_operands = 0 : i64, tpu.core_type = #tpu.core_type<tc>} {
    %c0 = arith.constant 0 : index
    %c0_0 = arith.constant 0 : index
    %0 = vector.load %arg0[%c0, %c0_0] : memref<2x128xf32, #tpu.memory_space<vmem>>, vector<2x128xf32>
    %1 = arith.truncf %0 : vector<2x128xf32> to vector<2x128xbf16>
    %c0_1 = arith.constant 0 : index
    %c0_2 = arith.constant 0 : index
    %2 = vector.load %arg1[%c0_1, %c0_2] : memref<128x128xbf16, #tpu.memory_space<vmem>>, vector<128x128xbf16>
    %cst = arith.constant dense<0.000000e+00> : vector<2x128xf32>
    %3 = tpu.matmul %1, %2, %cst {dimension_numbers = #tpu.dot_dimension_numbers<[1], [0], [0], [1], [0, 0, 1, 1], [], []>} : vector<2x128xbf16>, vector<128x128xbf16>, vector<2x128xf32> -> vector<2x128xf32>
    %c0_3 = arith.constant 0 : index
    %c0_4 = arith.constant 0 : index
    %4 = vector.load %arg2[%c0_3, %c0_4] : memref<1x128xf32, #tpu.memory_space<vmem>>, vector<1x128xf32>
    %5 = vector.broadcast %4 : vector<1x128xf32> to vector<2x128xf32>
    %6 = arith.addf %3, %5 : vector<2x128xf32>
    %7 = math.tanh %6 : vector<2x128xf32>
    %8 = arith.truncf %7 : vector<2x128xf32> to vector<2x128xbf16>
    %c0_5 = arith.constant 0 : index
    %c0_6 = arith.constant 0 : index
    %9 = vector.load %arg3[%c0_5, %c0_6] : memref<128x128xbf16, #tpu.memory_space<vmem>>, vector<128x128xbf16>
    %cst_7 = arith.constant dense<0.000000e+00> : vector<2x128xf32>
    %10 = tpu.matmul %8, %9, %cst_7 {dimension_numbers = #tpu.dot_dimension_numbers<[1], [0], [0], [1], [0, 0, 1, 1], [], []>} : vector<2x128xbf16>, vector<128x128xbf16>, vector<2x128xf32> -> vector<2x128xf32>
    %c0_8 = arith.constant 0 : index
    %c0_9 = arith.constant 0 : index
    %11 = vector.load %arg4[%c0_8, %c0_9] : memref<1x128xf32, #tpu.memory_space<vmem>>, vector<1x128xf32>
    %12 = vector.broadcast %11 : vector<1x128xf32> to vector<2x128xf32>
    %13 = arith.addf %10, %12 : vector<2x128xf32>
    %c0_10 = arith.constant 0 : index
    %c0_11 = arith.constant 0 : index
    %14 = vector.load %arg5[%c0_10, %c0_11] : memref<2x128xf32, #tpu.memory_space<vmem>>, vector<2x128xf32>
    tpu.vector_store %arg5[%c0_10, %c0_11], %13 {strides = array<i32>} : memref<2x128xf32, #tpu.memory_space<vmem>>, vector<2x128xf32>,
    return
  }
}

module attributes {stable_mosaic.version = 11 : i64} {
  func.func @_encoder_layer_kernel(%arg0: i32, %arg1: memref<1x8x128xf32, #tpu.memory_space<vmem>>, %arg2: memref<1x1x8xf32, #tpu.memory_space<vmem>>, %arg3: memref<128x384xbf16, #tpu.memory_space<vmem>>, %arg4: memref<1x384xf32, #tpu.memory_space<vmem>>, %arg5: memref<128x128xbf16, #tpu.memory_space<vmem>>, %arg6: memref<1x128xf32, #tpu.memory_space<vmem>>, %arg7: memref<1x128xf32, #tpu.memory_space<vmem>>, %arg8: memref<1x128xf32, #tpu.memory_space<vmem>>, %arg9: memref<128x256xbf16, #tpu.memory_space<vmem>>, %arg10: memref<1x256xf32, #tpu.memory_space<vmem>>, %arg11: memref<256x128xbf16, #tpu.memory_space<vmem>>, %arg12: memref<1x128xf32, #tpu.memory_space<vmem>>, %arg13: memref<1x128xf32, #tpu.memory_space<vmem>>, %arg14: memref<1x128xf32, #tpu.memory_space<vmem>>, %arg15: memref<1x8x128xf32, #tpu.memory_space<vmem>>) attributes {dimension_semantics = [#tpu.dimension_semantics<parallel>], iteration_bounds = array<i64: 2>, scalar_prefetch = 0 : i64, scratch_operands = 0 : i64, tpu.core_type = #tpu.core_type<tc>, window_params = [{transform_indices = @transform_0, window_bounds = array<i64: 1, 8, 128>}, {transform_indices = @transform_1, window_bounds = array<i64: 1, 1, 8>}, {pipeline_mode = #tpu.pipeline_mode<synchronous>, transform_indices = @transform_2, window_bounds = array<i64: 128, 384>}, {pipeline_mode = #tpu.pipeline_mode<synchronous>, transform_indices = @transform_3, window_bounds = array<i64: 1, 384>}, {pipeline_mode = #tpu.pipeline_mode<synchronous>, transform_indices = @transform_4, window_bounds = array<i64: 128, 128>}, {pipeline_mode = #tpu.pipeline_mode<synchronous>, transform_indices = @transform_5, window_bounds = array<i64: 1, 128>}, {pipeline_mode = #tpu.pipeline_mode<synchronous>, transform_indices = @transform_6, window_bounds = array<i64: 1, 128>}, {pipeline_mode = #tpu.pipeline_mode<synchronous>, transform_indices = @transform_7, window_bounds = array<i64: 1, 128>}, {pipeline_mode = #tpu.pipeline_mode<synchronous>, transform_indices = @transform_8, window_bounds = array<i64: 128, 256>}, {pipeline_mode = #tpu.pipeline_mode<synchronous>, transform_indices = @transform_9, window_bounds = array<i64: 1, 256>}, {pipeline_mode = #tpu.pipeline_mode<synchronous>, transform_indices = @transform_10, window_bounds = array<i64: 256, 128>}, {pipeline_mode = #tpu.pipeline_mode<synchronous>, transform_indices = @transform_11, window_bounds = array<i64: 1, 128>}, {pipeline_mode = #tpu.pipeline_mode<synchronous>, transform_indices = @transform_12, window_bounds = array<i64: 1, 128>}, {pipeline_mode = #tpu.pipeline_mode<synchronous>, transform_indices = @transform_13, window_bounds = array<i64: 1, 128>}, {transform_indices = @transform_14, window_bounds = array<i64: 1, 8, 128>}]} {
    %c0 = arith.constant 0 : index
    %c0_0 = arith.constant 0 : index
    %c0_1 = arith.constant 0 : index
    %0 = vector.load %arg1[%c0, %c0_0, %c0_1] : memref<1x8x128xf32, #tpu.memory_space<vmem>>, vector<1x8x128xf32>
    %1 = vector.shape_cast %0 : vector<1x8x128xf32> to vector<8x128xf32>
    %c0_2 = arith.constant 0 : index
    %c0_3 = arith.constant 0 : index
    %c0_4 = arith.constant 0 : index
    %2 = vector.load %arg2[%c0_2, %c0_3, %c0_4] : memref<1x1x8xf32, #tpu.memory_space<vmem>>, vector<1x1x8xf32>
    %3 = vector.shape_cast %2 : vector<1x1x8xf32> to vector<1x8xf32>
    %4 = arith.truncf %1 : vector<8x128xf32> to vector<8x128xbf16>
    %c0_5 = arith.constant 0 : index
    %c0_6 = arith.constant 0 : index
    %5 = vector.load %arg3[%c0_5, %c0_6] : memref<128x384xbf16, #tpu.memory_space<vmem>>, vector<128x384xbf16>
    %cst = arith.constant dense<0.000000e+00> : vector<8x384xf32>
    %6 = tpu.matmul %4, %5, %cst {dimension_numbers = #tpu.dot_dimension_numbers<[1], [0], [0], [1], [0, 0, 1, 1], [], []>} : vector<8x128xbf16>, vector<128x384xbf16>, vector<8x384xf32> -> vector<8x384xf32>
    %c0_7 = arith.constant 0 : index
    %c0_8 = arith.constant 0 : index
    %7 = vector.load %arg4[%c0_7, %c0_8] : memref<1x384xf32, #tpu.memory_space<vmem>>, vector<1x384xf32>
    %8 = vector.broadcast %7 : vector<1x384xf32> to vector<8x384xf32>
    %9 = arith.addf %6, %8 : vector<8x384xf32>
    %c0_9 = arith.constant 0 : index
    %c0_10 = arith.constant 0 : index
    %10 = vector.load %arg5[%c0_9, %c0_10] : memref<128x128xbf16, #tpu.memory_space<vmem>>, vector<128x128xbf16>
    %cst_11 = arith.constant 0.000000e+00 : f32
    %11 = vector.broadcast %cst_11 : f32 to vector<8x128xf32>
    %12 = vector.extract_strided_slice %9 {offsets = [0, 0], sizes = [8, 32], strides = [1, 1]} : vector<8x384xf32> to vector<8x32xf32>
    %13 = vector.extract_strided_slice %9 {offsets = [0, 128], sizes = [8, 32], strides = [1, 1]} : vector<8x384xf32> to vector<8x32xf32>
    %14 = vector.extract_strided_slice %9 {offsets = [0, 256], sizes = [8, 32], strides = [1, 1]} : vector<8x384xf32> to vector<8x32xf32>
    %15 = tpu.transpose %13, [1, 0] : vector<8x32xf32> -> vector<32x8xf32>
    %cst_12 = arith.constant dense<0.000000e+00> : vector<8x8xf32>
    %16 = tpu.matmul %12, %15, %cst_12 {dimension_numbers = #tpu.dot_dimension_numbers<[1], [0], [0], [1], [0, 0, 1, 1], [], []>} : vector<8x32xf32>, vector<32x8xf32>, vector<8x8xf32> -> vector<8x8xf32>
    %cst_13 = arith.constant 0.176776692 : f32
    %17 = vector.broadcast %cst_13 : f32 to vector<8x8xf32>
    %18 = arith.mulf %16, %17 : vector<8x8xf32>
    %19 = vector.broadcast %3 : vector<1x8xf32> to vector<8x8xf32>
    %20 = arith.addf %18, %19 : vector<8x8xf32>
    %cst_14 = arith.constant dense<0xFF800000> : vector<8xf32>
    %21 = vector.multi_reduction <maximumf>, %20, %cst_14 [1] : vector<8x8xf32> to vector<8xf32>
    %22 = vector.shape_cast %21 : vector<8xf32> to vector<8x1xf32>
    %23 = vector.broadcast %22 : vector<8x1xf32> to vector<8x8xf32>
    %24 = arith.subf %20, %23 : vector<8x8xf32>
    %25 = math.exp %24 : vector<8x8xf32>
    %cst_15 = arith.constant dense<0.000000e+00> : vector<8xf32>
    %26 = vector.multi_reduction <add>, %25, %cst_15 [1] : vector<8x8xf32> to vector<8xf32>
    %27 = vector.shape_cast %26 : vector<8xf32> to vector<8x1xf32>
    %28 = tpu.reciprocal %27 {approx = true} : vector<8x1xf32> -> vector<8x1xf32>
    %29 = vector.broadcast %28 : vector<8x1xf32> to vector<8x8xf32>
    %30 = arith.mulf %25, %29 : vector<8x8xf32>
    %cst_16 = arith.constant dense<0.000000e+00> : vector<8x32xf32>
    %31 = tpu.matmul %30, %14, %cst_16 {dimension_numbers = #tpu.dot_dimension_numbers<[1], [0], [0], [1], [0, 0, 1, 1], [], []>} : vector<8x8xf32>, vector<8x32xf32>, vector<8x32xf32> -> vector<8x32xf32>
    %32 = arith.truncf %31 : vector<8x32xf32> to vector<8x32xbf16>
    %33 = vector.extract_strided_slice %10 {offsets = [0, 0], sizes = [32, 128], strides = [1, 1]} : vector<128x128xbf16> to vector<32x128xbf16>
    %cst_17 = arith.constant dense<0.000000e+00> : vector<8x128xf32>
    %34 = tpu.matmul %32, %33, %cst_17 {dimension_numbers = #tpu.dot_dimension_numbers<[1], [0], [0], [1], [0, 0, 1, 1], [], []>} : vector<8x32xbf16>, vector<32x128xbf16>, vector<8x128xf32> -> vector<8x128xf32>
    %35 = arith.addf %11, %34 : vector<8x128xf32>
    %36 = vector.extract_strided_slice %9 {offsets = [0, 32], sizes = [8, 32], strides = [1, 1]} : vector<8x384xf32> to vector<8x32xf32>
    %37 = vector.extract_strided_slice %9 {offsets = [0, 160], sizes = [8, 32], strides = [1, 1]} : vector<8x384xf32> to vector<8x32xf32>
    %38 = vector.extract_strided_slice %9 {offsets = [0, 288], sizes = [8, 32], strides = [1, 1]} : vector<8x384xf32> to vector<8x32xf32>
    %39 = tpu.transpose %37, [1, 0] : vector<8x32xf32> -> vector<32x8xf32>
    %cst_18 = arith.constant dense<0.000000e+00> : vector<8x8xf32>
    %40 = tpu.matmul %36, %39, %cst_18 {dimension_numbers = #tpu.dot_dimension_numbers<[1], [0], [0], [1], [0, 0, 1, 1], [], []>} : vector<8x32xf32>, vector<32x8xf32>, vector<8x8xf32> -> vector<8x8xf32>
    %cst_19 = arith.constant 0.176776692 : f32
    %41 = vector.broadcast %cst_19 : f32 to vector<8x8xf32>
    %42 = arith.mulf %40, %41 : vector<8x8xf32>
    %43 = vector.broadcast %3 : vector<1x8xf32> to vector<8x8xf32>
    %44 = arith.addf %42, %43 : vector<8x8xf32>
    %cst_20 = arith.constant dense<0xFF800000> : vector<8xf32>
    %45 = vector.multi_reduction <maximumf>, %44, %cst_20 [1] : vector<8x8xf32> to vector<8xf32>
    %46 = vector.shape_cast %45 : vector<8xf32> to vector<8x1xf32>
    %47 = vector.broadcast %46 : vector<8x1xf32> to vector<8x8xf32>
    %48 = arith.subf %44, %47 : vector<8x8xf32>
    %49 = math.exp %48 : vector<8x8xf32>
    %cst_21 = arith.constant dense<0.000000e+00> : vector<8xf32>
    %50 = vector.multi_reduction <add>, %49, %cst_21 [1] : vector<8x8xf32> to vector<8xf32>
    %51 = vector.shape_cast %50 : vector<8xf32> to vector<8x1xf32>
    %52 = tpu.reciprocal %51 {approx = true} : vector<8x1xf32> -> vector<8x1xf32>
    %53 = vector.broadcast %52 : vector<8x1xf32> to vector<8x8xf32>
    %54 = arith.mulf %49, %53 : vector<8x8xf32>
    %cst_22 = arith.constant dense<0.000000e+00> : vector<8x32xf32>
    %55 = tpu.matmul %54, %38, %cst_22 {dimension_numbers = #tpu.dot_dimension_numbers<[1], [0], [0], [1], [0, 0, 1, 1], [], []>} : vector<8x8xf32>, vector<8x32xf32>, vector<8x32xf32> -> vector<8x32xf32>
    %56 = arith.truncf %55 : vector<8x32xf32> to vector<8x32xbf16>
    %57 = vector.extract_strided_slice %10 {offsets = [32, 0], sizes = [32, 128], strides = [1, 1]} : vector<128x128xbf16> to vector<32x128xbf16>
    %cst_23 = arith.constant dense<0.000000e+00> : vector<8x128xf32>
    %58 = tpu.matmul %56, %57, %cst_23 {dimension_numbers = #tpu.dot_dimension_numbers<[1], [0], [0], [1], [0, 0, 1, 1], [], []>} : vector<8x32xbf16>, vector<32x128xbf16>, vector<8x128xf32> -> vector<8x128xf32>
    %59 = arith.addf %35, %58 : vector<8x128xf32>
    %60 = vector.extract_strided_slice %9 {offsets = [0, 64], sizes = [8, 32], strides = [1, 1]} : vector<8x384xf32> to vector<8x32xf32>
    %61 = vector.extract_strided_slice %9 {offsets = [0, 192], sizes = [8, 32], strides = [1, 1]} : vector<8x384xf32> to vector<8x32xf32>
    %62 = vector.extract_strided_slice %9 {offsets = [0, 320], sizes = [8, 32], strides = [1, 1]} : vector<8x384xf32> to vector<8x32xf32>
    %63 = tpu.transpose %61, [1, 0] : vector<8x32xf32> -> vector<32x8xf32>
    %cst_24 = arith.constant dense<0.000000e+00> : vector<8x8xf32>
    %64 = tpu.matmul %60, %63, %cst_24 {dimension_numbers = #tpu.dot_dimension_numbers<[1], [0], [0], [1], [0, 0, 1, 1], [], []>} : vector<8x32xf32>, vector<32x8xf32>, vector<8x8xf32> -> vector<8x8xf32>
    %cst_25 = arith.constant 0.176776692 : f32
    %65 = vector.broadcast %cst_25 : f32 to vector<8x8xf32>
    %66 = arith.mulf %64, %65 : vector<8x8xf32>
    %67 = vector.broadcast %3 : vector<1x8xf32> to vector<8x8xf32>
    %68 = arith.addf %66, %67 : vector<8x8xf32>
    %cst_26 = arith.constant dense<0xFF800000> : vector<8xf32>
    %69 = vector.multi_reduction <maximumf>, %68, %cst_26 [1] : vector<8x8xf32> to vector<8xf32>
    %70 = vector.shape_cast %69 : vector<8xf32> to vector<8x1xf32>
    %71 = vector.broadcast %70 : vector<8x1xf32> to vector<8x8xf32>
    %72 = arith.subf %68, %71 : vector<8x8xf32>
    %73 = math.exp %72 : vector<8x8xf32>
    %cst_27 = arith.constant dense<0.000000e+00> : vector<8xf32>
    %74 = vector.multi_reduction <add>, %73, %cst_27 [1] : vector<8x8xf32> to vector<8xf32>
    %75 = vector.shape_cast %74 : vector<8xf32> to vector<8x1xf32>
    %76 = tpu.reciprocal %75 {approx = true} : vector<8x1xf32> -> vector<8x1xf32>
    %77 = vector.broadcast %76 : vector<8x1xf32> to vector<8x8xf32>
    %78 = arith.mulf %73, %77 : vector<8x8xf32>
    %cst_28 = arith.constant dense<0.000000e+00> : vector<8x32xf32>
    %79 = tpu.matmul %78, %62, %cst_28 {dimension_numbers = #tpu.dot_dimension_numbers<[1], [0], [0], [1], [0, 0, 1, 1], [], []>} : vector<8x8xf32>, vector<8x32xf32>, vector<8x32xf32> -> vector<8x32xf32>
    %80 = arith.truncf %79 : vector<8x32xf32> to vector<8x32xbf16>
    %81 = vector.extract_strided_slice %10 {offsets = [64, 0], sizes = [32, 128], strides = [1, 1]} : vector<128x128xbf16> to vector<32x128xbf16>
    %cst_29 = arith.constant dense<0.000000e+00> : vector<8x128xf32>
    %82 = tpu.matmul %80, %81, %cst_29 {dimension_numbers = #tpu.dot_dimension_numbers<[1], [0], [0], [1], [0, 0, 1, 1], [], []>} : vector<8x32xbf16>, vector<32x128xbf16>, vector<8x128xf32> -> vector<8x128xf32>
    %83 = arith.addf %59, %82 : vector<8x128xf32>
    %84 = vector.extract_strided_slice %9 {offsets = [0, 96], sizes = [8, 32], strides = [1, 1]} : vector<8x384xf32> to vector<8x32xf32>
    %85 = vector.extract_strided_slice %9 {offsets = [0, 224], sizes = [8, 32], strides = [1, 1]} : vector<8x384xf32> to vector<8x32xf32>
    %86 = vector.extract_strided_slice %9 {offsets = [0, 352], sizes = [8, 32], strides = [1, 1]} : vector<8x384xf32> to vector<8x32xf32>
    %87 = tpu.transpose %85, [1, 0] : vector<8x32xf32> -> vector<32x8xf32>
    %cst_30 = arith.constant dense<0.000000e+00> : vector<8x8xf32>
    %88 = tpu.matmul %84, %87, %cst_30 {dimension_numbers = #tpu.dot_dimension_numbers<[1], [0], [0], [1], [0, 0, 1, 1], [], []>} : vector<8x32xf32>, vector<32x8xf32>, vector<8x8xf32> -> vector<8x8xf32>
    %cst_31 = arith.constant 0.176776692 : f32
    %89 = vector.broadcast %cst_31 : f32 to vector<8x8xf32>
    %90 = arith.mulf %88, %89 : vector<8x8xf32>
    %91 = vector.broadcast %3 : vector<1x8xf32> to vector<8x8xf32>
    %92 = arith.addf %90, %91 : vector<8x8xf32>
    %cst_32 = arith.constant dense<0xFF800000> : vector<8xf32>
    %93 = vector.multi_reduction <maximumf>, %92, %cst_32 [1] : vector<8x8xf32> to vector<8xf32>
    %94 = vector.shape_cast %93 : vector<8xf32> to vector<8x1xf32>
    %95 = vector.broadcast %94 : vector<8x1xf32> to vector<8x8xf32>
    %96 = arith.subf %92, %95 : vector<8x8xf32>
    %97 = math.exp %96 : vector<8x8xf32>
    %cst_33 = arith.constant dense<0.000000e+00> : vector<8xf32>
    %98 = vector.multi_reduction <add>, %97, %cst_33 [1] : vector<8x8xf32> to vector<8xf32>
    %99 = vector.shape_cast %98 : vector<8xf32> to vector<8x1xf32>
    %100 = tpu.reciprocal %99 {approx = true} : vector<8x1xf32> -> vector<8x1xf32>
    %101 = vector.broadcast %100 : vector<8x1xf32> to vector<8x8xf32>
    %102 = arith.mulf %97, %101 : vector<8x8xf32>
    %cst_34 = arith.constant dense<0.000000e+00> : vector<8x32xf32>
    %103 = tpu.matmul %102, %86, %cst_34 {dimension_numbers = #tpu.dot_dimension_numbers<[1], [0], [0], [1], [0, 0, 1, 1], [], []>} : vector<8x8xf32>, vector<8x32xf32>, vector<8x32xf32> -> vector<8x32xf32>
    %104 = arith.truncf %103 : vector<8x32xf32> to vector<8x32xbf16>
    %105 = vector.extract_strided_slice %10 {offsets = [96, 0], sizes = [32, 128], strides = [1, 1]} : vector<128x128xbf16> to vector<32x128xbf16>
    %cst_35 = arith.constant dense<0.000000e+00> : vector<8x128xf32>
    %106 = tpu.matmul %104, %105, %cst_35 {dimension_numbers = #tpu.dot_dimension_numbers<[1], [0], [0], [1], [0, 0, 1, 1], [], []>} : vector<8x32xbf16>, vector<32x128xbf16>, vector<8x128xf32> -> vector<8x128xf32>
    %107 = arith.addf %83, %106 : vector<8x128xf32>
    %c0_36 = arith.constant 0 : index
    %c0_37 = arith.constant 0 : index
    %108 = vector.load %arg6[%c0_36, %c0_37] : memref<1x128xf32, #tpu.memory_space<vmem>>, vector<1x128xf32>
    %109 = vector.broadcast %108 : vector<1x128xf32> to vector<8x128xf32>
    %110 = arith.addf %107, %109 : vector<8x128xf32>
    %111 = arith.addf %110, %1 : vector<8x128xf32>
    %c0_38 = arith.constant 0 : index
    %c0_39 = arith.constant 0 : index
    %112 = vector.load %arg7[%c0_38, %c0_39] : memref<1x128xf32, #tpu.memory_space<vmem>>, vector<1x128xf32>
    %c0_40 = arith.constant 0 : index
    %c0_41 = arith.constant 0 : index
    %113 = vector.load %arg8[%c0_40, %c0_41] : memref<1x128xf32, #tpu.memory_space<vmem>>, vector<1x128xf32>
    %cst_42 = arith.constant dense<0.000000e+00> : vector<8xf32>
    %114 = vector.multi_reduction <add>, %111, %cst_42 [1] : vector<8x128xf32> to vector<8xf32>
    %115 = vector.shape_cast %114 : vector<8xf32> to vector<8x1xf32>
    %cst_43 = arith.constant 1.280000e+02 : f32
    %116 = vector.broadcast %cst_43 : f32 to vector<8x1xf32>
    %117 = arith.divf %115, %116 : vector<8x1xf32>
    %118 = vector.broadcast %117 : vector<8x1xf32> to vector<8x128xf32>
    %119 = arith.subf %111, %118 : vector<8x128xf32>
    %120 = arith.mulf %119, %119 : vector<8x128xf32>
    %cst_44 = arith.constant dense<0.000000e+00> : vector<8xf32>
    %121 = vector.multi_reduction <add>, %120, %cst_44 [1] : vector<8x128xf32> to vector<8xf32>
    %122 = vector.shape_cast %121 : vector<8xf32> to vector<8x1xf32>
    %cst_45 = arith.constant 1.280000e+02 : f32
    %123 = vector.broadcast %cst_45 : f32 to vector<8x1xf32>
    %124 = arith.divf %122, %123 : vector<8x1xf32>
    %cst_46 = arith.constant 9.99999996E-13 : f32
    %125 = vector.broadcast %cst_46 : f32 to vector<8x1xf32>
    %126 = arith.addf %124, %125 : vector<8x1xf32>
    %127 = math.rsqrt %126 : vector<8x1xf32>
    %128 = vector.broadcast %127 : vector<8x1xf32> to vector<8x128xf32>
    %129 = arith.mulf %119, %128 : vector<8x128xf32>
    %130 = vector.broadcast %112 : vector<1x128xf32> to vector<8x128xf32>
    %131 = arith.mulf %129, %130 : vector<8x128xf32>
    %132 = vector.broadcast %113 : vector<1x128xf32> to vector<8x128xf32>
    %133 = arith.addf %131, %132 : vector<8x128xf32>
    %134 = arith.truncf %133 : vector<8x128xf32> to vector<8x128xbf16>
    %c0_47 = arith.constant 0 : index
    %c0_48 = arith.constant 0 : index
    %135 = vector.load %arg9[%c0_47, %c0_48] : memref<128x256xbf16, #tpu.memory_space<vmem>>, vector<128x256xbf16>
    %cst_49 = arith.constant dense<0.000000e+00> : vector<8x256xf32>
    %136 = tpu.matmul %134, %135, %cst_49 {dimension_numbers = #tpu.dot_dimension_numbers<[1], [0], [0], [1], [0, 0, 1, 1], [], []>} : vector<8x128xbf16>, vector<128x256xbf16>, vector<8x256xf32> -> vector<8x256xf32>
    %c0_50 = arith.constant 0 : index
    %c0_51 = arith.constant 0 : index
    %137 = vector.load %arg10[%c0_50, %c0_51] : memref<1x256xf32, #tpu.memory_space<vmem>>, vector<1x256xf32>
    %138 = vector.broadcast %137 : vector<1x256xf32> to vector<8x256xf32>
    %139 = arith.addf %136, %138 : vector<8x256xf32>
    %140 = arith.mulf %139, %139 : vector<8x256xf32>
    %141 = arith.mulf %139, %140 : vector<8x256xf32>
    %cst_52 = arith.constant 4.471500e-02 : f32
    %142 = vector.broadcast %cst_52 : f32 to vector<8x256xf32>
    %143 = arith.mulf %142, %141 : vector<8x256xf32>
    %144 = arith.addf %139, %143 : vector<8x256xf32>
    %cst_53 = arith.constant 0.797884583 : f32
    %145 = vector.broadcast %cst_53 : f32 to vector<8x256xf32>
    %146 = arith.mulf %145, %144 : vector<8x256xf32>
    %147 = math.tanh %146 : vector<8x256xf32>
    %cst_54 = arith.constant 1.000000e+00 : f32
    %148 = vector.broadcast %cst_54 : f32 to vector<8x256xf32>
    %149 = arith.addf %148, %147 : vector<8x256xf32>
    %cst_55 = arith.constant 5.000000e-01 : f32
    %150 = vector.broadcast %cst_55 : f32 to vector<8x256xf32>
    %151 = arith.mulf %150, %149 : vector<8x256xf32>
    %152 = arith.mulf %139, %151 : vector<8x256xf32>
    %153 = arith.truncf %152 : vector<8x256xf32> to vector<8x256xbf16>
    %c0_56 = arith.constant 0 : index
    %c0_57 = arith.constant 0 : index
    %154 = vector.load %arg11[%c0_56, %c0_57] : memref<256x128xbf16, #tpu.memory_space<vmem>>, vector<256x128xbf16>
    %cst_58 = arith.constant dense<0.000000e+00> : vector<8x128xf32>
    %155 = tpu.matmul %153, %154, %cst_58 {dimension_numbers = #tpu.dot_dimension_numbers<[1], [0], [0], [1], [0, 0, 1, 1], [], []>} : vector<8x256xbf16>, vector<256x128xbf16>, vector<8x128xf32> -> vector<8x128xf32>
    %c0_59 = arith.constant 0 : index
    %c0_60 = arith.constant 0 : index
    %156 = vector.load %arg12[%c0_59, %c0_60] : memref<1x128xf32, #tpu.memory_space<vmem>>, vector<1x128xf32>
    %157 = vector.broadcast %156 : vector<1x128xf32> to vector<8x128xf32>
    %158 = arith.addf %155, %157 : vector<8x128xf32>
    %159 = arith.addf %158, %133 : vector<8x128xf32>
    %c0_61 = arith.constant 0 : index
    %c0_62 = arith.constant 0 : index
    %160 = vector.load %arg13[%c0_61, %c0_62] : memref<1x128xf32, #tpu.memory_space<vmem>>, vector<1x128xf32>
    %c0_63 = arith.constant 0 : index
    %c0_64 = arith.constant 0 : index
    %161 = vector.load %arg14[%c0_63, %c0_64] : memref<1x128xf32, #tpu.memory_space<vmem>>, vector<1x128xf32>
    %cst_65 = arith.constant dense<0.000000e+00> : vector<8xf32>
    %162 = vector.multi_reduction <add>, %159, %cst_65 [1] : vector<8x128xf32> to vector<8xf32>
    %163 = vector.shape_cast %162 : vector<8xf32> to vector<8x1xf32>
    %cst_66 = arith.constant 1.280000e+02 : f32
    %164 = vector.broadcast %cst_66 : f32 to vector<8x1xf32>
    %165 = arith.divf %163, %164 : vector<8x1xf32>
    %166 = vector.broadcast %165 : vector<8x1xf32> to vector<8x128xf32>
    %167 = arith.subf %159, %166 : vector<8x128xf32>
    %168 = arith.mulf %167, %167 : vector<8x128xf32>
    %cst_67 = arith.constant dense<0.000000e+00> : vector<8xf32>
    %169 = vector.multi_reduction <add>, %168, %cst_67 [1] : vector<8x128xf32> to vector<8xf32>
    %170 = vector.shape_cast %169 : vector<8xf32> to vector<8x1xf32>
    %cst_68 = arith.constant 1.280000e+02 : f32
    %171 = vector.broadcast %cst_68 : f32 to vector<8x1xf32>
    %172 = arith.divf %170, %171 : vector<8x1xf32>
    %cst_69 = arith.constant 9.99999996E-13 : f32
    %173 = vector.broadcast %cst_69 : f32 to vector<8x1xf32>
    %174 = arith.addf %172, %173 : vector<8x1xf32>
    %175 = math.rsqrt %174 : vector<8x1xf32>
    %176 = vector.broadcast %175 : vector<8x1xf32> to vector<8x128xf32>
    %177 = arith.mulf %167, %176 : vector<8x128xf32>
    %178 = vector.broadcast %160 : vector<1x128xf32> to vector<8x128xf32>
    %179 = arith.mulf %177, %178 : vector<8x128xf32>
    %180 = vector.broadcast %161 : vector<1x128xf32> to vector<8x128xf32>
    %181 = arith.addf %179, %180 : vector<8x128xf32>
    %c0_70 = arith.constant 0 : index
    %c0_71 = arith.constant 0 : index
    %c0_72 = arith.constant 0 : index
    %182 = vector.load %arg15[%c0_70, %c0_71, %c0_72] : memref<1x8x128xf32, #tpu.memory_space<vmem>>, vector<1x8x128xf32>
    %183 = vector.shape_cast %182 : vector<1x8x128xf32> to vector<8x128xf32>
    %184 = vector.shape_cast %181 : vector<8x128xf32> to vector<1x8x128xf32>
    tpu.vector_store %arg15[%c0_70, %c0_71, %c0_72], %184 {strides = array<i32>} : memref<1x8x128xf32, #tpu.memory_space<vmem>>, vector<1x8x128xf32>,
    return
  }
  func.func @transform_0(%arg0: i32) -> (i32, i32, i32) {
    %c0_i32 = arith.constant 0 : i32
    %c0_i32_0 = arith.constant 0 : i32
    %c0_i32_1 = arith.constant 0 : i32
    return %arg0, %c0_i32, %c0_i32_0 : i32, i32, i32
  }
  func.func @transform_1(%arg0: i32) -> (i32, i32, i32) {
    %c0_i32 = arith.constant 0 : i32
    %c0_i32_0 = arith.constant 0 : i32
    %c0_i32_1 = arith.constant 0 : i32
    return %arg0, %c0_i32, %c0_i32_0 : i32, i32, i32
  }
  func.func @transform_2(%arg0: i32) -> (i32, i32) {
    %c0_i32 = arith.constant 0 : i32
    %c0_i32_0 = arith.constant 0 : i32
    %c0_i32_1 = arith.constant 0 : i32
    return %c0_i32, %c0_i32_0 : i32, i32
  }
  func.func @transform_3(%arg0: i32) -> (i32, i32) {
    %c0_i32 = arith.constant 0 : i32
    %c0_i32_0 = arith.constant 0 : i32
    %c0_i32_1 = arith.constant 0 : i32
    return %c0_i32, %c0_i32_0 : i32, i32
  }
  func.func @transform_4(%arg0: i32) -> (i32, i32) {
    %c0_i32 = arith.constant 0 : i32
    %c0_i32_0 = arith.constant 0 : i32
    %c0_i32_1 = arith.constant 0 : i32
    return %c0_i32, %c0_i32_0 : i32, i32
  }
  func.func @transform_5(%arg0: i32) -> (i32, i32) {
    %c0_i32 = arith.constant 0 : i32
    %c0_i32_0 = arith.constant 0 : i32
    %c0_i32_1 = arith.constant 0 : i32
    return %c0_i32, %c0_i32_0 : i32, i32
  }
  func.func @transform_6(%arg0: i32) -> (i32, i32) {
    %c0_i32 = arith.constant 0 : i32
    %c0_i32_0 = arith.constant 0 : i32
    %c0_i32_1 = arith.constant 0 : i32
    return %c0_i32, %c0_i32_0 : i32, i32
  }
  func.func @transform_7(%arg0: i32) -> (i32, i32) {
    %c0_i32 = arith.constant 0 : i32
    %c0_i32_0 = arith.constant 0 : i32
    %c0_i32_1 = arith.constant 0 : i32
    return %c0_i32, %c0_i32_0 : i32, i32
  }
  func.func @transform_8(%arg0: i32) -> (i32, i32) {
    %c0_i32 = arith.constant 0 : i32
    %c0_i32_0 = arith.constant 0 : i32
    %c0_i32_1 = arith.constant 0 : i32
    return %c0_i32, %c0_i32_0 : i32, i32
  }
  func.func @transform_9(%arg0: i32) -> (i32, i32) {
    %c0_i32 = arith.constant 0 : i32
    %c0_i32_0 = arith.constant 0 : i32
    %c0_i32_1 = arith.constant 0 : i32
    return %c0_i32, %c0_i32_0 : i32, i32
  }
  func.func @transform_10(%arg0: i32) -> (i32, i32) {
    %c0_i32 = arith.constant 0 : i32
    %c0_i32_0 = arith.constant 0 : i32
    %c0_i32_1 = arith.constant 0 : i32
    return %c0_i32, %c0_i32_0 : i32, i32
  }
  func.func @transform_11(%arg0: i32) -> (i32, i32) {
    %c0_i32 = arith.constant 0 : i32
    %c0_i32_0 = arith.constant 0 : i32
    %c0_i32_1 = arith.constant 0 : i32
    return %c0_i32, %c0_i32_0 : i32, i32
  }
  func.func @transform_12(%arg0: i32) -> (i32, i32) {
    %c0_i32 = arith.constant 0 : i32
    %c0_i32_0 = arith.constant 0 : i32
    %c0_i32_1 = arith.constant 0 : i32
    return %c0_i32, %c0_i32_0 : i32, i32
  }
  func.func @transform_13(%arg0: i32) -> (i32, i32) {
    %c0_i32 = arith.constant 0 : i32
    %c0_i32_0 = arith.constant 0 : i32
    %c0_i32_1 = arith.constant 0 : i32
    return %c0_i32, %c0_i32_0 : i32, i32
  }
  func.func @transform_14(%arg0: i32) -> (i32, i32, i32) {
    %c0_i32 = arith.constant 0 : i32
    %c0_i32_0 = arith.constant 0 : i32
    %c0_i32_1 = arith.constant 0 : i32
    return %arg0, %c0_i32, %c0_i32_0 : i32, i32, i32
  }
}

module attributes {stable_mosaic.version = 11 : i64} {
  func.func @_encoder_layer_kernel(%arg0: i32, %arg1: memref<1x8x128xf32, #tpu.memory_space<vmem>>, %arg2: memref<1x1x8xf32, #tpu.memory_space<vmem>>, %arg3: memref<128x384xbf16, #tpu.memory_space<vmem>>, %arg4: memref<1x384xf32, #tpu.memory_space<vmem>>, %arg5: memref<128x128xbf16, #tpu.memory_space<vmem>>, %arg6: memref<1x128xf32, #tpu.memory_space<vmem>>, %arg7: memref<1x128xf32, #tpu.memory_space<vmem>>, %arg8: memref<1x128xf32, #tpu.memory_space<vmem>>, %arg9: memref<128x256xbf16, #tpu.memory_space<vmem>>, %arg10: memref<1x256xf32, #tpu.memory_space<vmem>>, %arg11: memref<256x128xbf16, #tpu.memory_space<vmem>>, %arg12: memref<1x128xf32, #tpu.memory_space<vmem>>, %arg13: memref<1x128xf32, #tpu.memory_space<vmem>>, %arg14: memref<1x128xf32, #tpu.memory_space<vmem>>, %arg15: memref<1x8x128xf32, #tpu.memory_space<vmem>>) attributes {dimension_semantics = [#tpu.dimension_semantics<parallel>], iteration_bounds = array<i64: 2>, scalar_prefetch = 0 : i64, scratch_operands = 0 : i64, tpu.core_type = #tpu.core_type<tc>, window_params = [{transform_indices = @transform_0, window_bounds = array<i64: 1, 8, 128>}, {transform_indices = @transform_1, window_bounds = array<i64: 1, 1, 8>}, {pipeline_mode = #tpu.pipeline_mode<synchronous>, transform_indices = @transform_2, window_bounds = array<i64: 128, 384>}, {pipeline_mode = #tpu.pipeline_mode<synchronous>, transform_indices = @transform_3, window_bounds = array<i64: 1, 384>}, {pipeline_mode = #tpu.pipeline_mode<synchronous>, transform_indices = @transform_4, window_bounds = array<i64: 128, 128>}, {pipeline_mode = #tpu.pipeline_mode<synchronous>, transform_indices = @transform_5, window_bounds = array<i64: 1, 128>}, {pipeline_mode = #tpu.pipeline_mode<synchronous>, transform_indices = @transform_6, window_bounds = array<i64: 1, 128>}, {pipeline_mode = #tpu.pipeline_mode<synchronous>, transform_indices = @transform_7, window_bounds = array<i64: 1, 128>}, {pipeline_mode = #tpu.pipeline_mode<synchronous>, transform_indices = @transform_8, window_bounds = array<i64: 128, 256>}, {pipeline_mode = #tpu.pipeline_mode<synchronous>, transform_indices = @transform_9, window_bounds = array<i64: 1, 256>}, {pipeline_mode = #tpu.pipeline_mode<synchronous>, transform_indices = @transform_10, window_bounds = array<i64: 256, 128>}, {pipeline_mode = #tpu.pipeline_mode<synchronous>, transform_indices = @transform_11, window_bounds = array<i64: 1, 128>}, {pipeline_mode = #tpu.pipeline_mode<synchronous>, transform_indices = @transform_12, window_bounds = array<i64: 1, 128>}, {pipeline_mode = #tpu.pipeline_mode<synchronous>, transform_indices = @transform_13, window_bounds = array<i64: 1, 128>}, {transform_indices = @transform_14, window_bounds = array<i64: 1, 8, 128>}]} {
    %c0 = arith.constant 0 : index
    %c0_0 = arith.constant 0 : index
    %c0_1 = arith.constant 0 : index
    %0 = vector.load %arg1[%c0, %c0_0, %c0_1] : memref<1x8x128xf32, #tpu.memory_space<vmem>>, vector<1x8x128xf32>
    %1 = vector.shape_cast %0 : vector<1x8x128xf32> to vector<8x128xf32>
    %c0_2 = arith.constant 0 : index
    %c0_3 = arith.constant 0 : index
    %c0_4 = arith.constant 0 : index
    %2 = vector.load %arg2[%c0_2, %c0_3, %c0_4] : memref<1x1x8xf32, #tpu.memory_space<vmem>>, vector<1x1x8xf32>
    %3 = vector.shape_cast %2 : vector<1x1x8xf32> to vector<1x8xf32>
    %4 = arith.truncf %1 : vector<8x128xf32> to vector<8x128xbf16>
    %c0_5 = arith.constant 0 : index
    %c0_6 = arith.constant 0 : index
    %5 = vector.load %arg3[%c0_5, %c0_6] : memref<128x384xbf16, #tpu.memory_space<vmem>>, vector<128x384xbf16>
    %cst = arith.constant dense<0.000000e+00> : vector<8x384xf32>
    %6 = tpu.matmul %4, %5, %cst {dimension_numbers = #tpu.dot_dimension_numbers<[1], [0], [0], [1], [0, 0, 1, 1], [], []>} : vector<8x128xbf16>, vector<128x384xbf16>, vector<8x384xf32> -> vector<8x384xf32>
    %c0_7 = arith.constant 0 : index
    %c0_8 = arith.constant 0 : index
    %7 = vector.load %arg4[%c0_7, %c0_8] : memref<1x384xf32, #tpu.memory_space<vmem>>, vector<1x384xf32>
    %8 = vector.broadcast %7 : vector<1x384xf32> to vector<8x384xf32>
    %9 = arith.addf %6, %8 : vector<8x384xf32>
    %c0_9 = arith.constant 0 : index
    %c0_10 = arith.constant 0 : index
    %10 = vector.load %arg5[%c0_9, %c0_10] : memref<128x128xbf16, #tpu.memory_space<vmem>>, vector<128x128xbf16>
    %cst_11 = arith.constant 0.000000e+00 : f32
    %11 = vector.broadcast %cst_11 : f32 to vector<8x128xf32>
    %12 = vector.extract_strided_slice %9 {offsets = [0, 0], sizes = [8, 32], strides = [1, 1]} : vector<8x384xf32> to vector<8x32xf32>
    %13 = vector.extract_strided_slice %9 {offsets = [0, 128], sizes = [8, 32], strides = [1, 1]} : vector<8x384xf32> to vector<8x32xf32>
    %14 = vector.extract_strided_slice %9 {offsets = [0, 256], sizes = [8, 32], strides = [1, 1]} : vector<8x384xf32> to vector<8x32xf32>
    %15 = tpu.transpose %13, [1, 0] : vector<8x32xf32> -> vector<32x8xf32>
    %cst_12 = arith.constant dense<0.000000e+00> : vector<8x8xf32>
    %16 = tpu.matmul %12, %15, %cst_12 {dimension_numbers = #tpu.dot_dimension_numbers<[1], [0], [0], [1], [0, 0, 1, 1], [], []>} : vector<8x32xf32>, vector<32x8xf32>, vector<8x8xf32> -> vector<8x8xf32>
    %cst_13 = arith.constant 0.176776692 : f32
    %17 = vector.broadcast %cst_13 : f32 to vector<8x8xf32>
    %18 = arith.mulf %16, %17 : vector<8x8xf32>
    %19 = vector.broadcast %3 : vector<1x8xf32> to vector<8x8xf32>
    %20 = arith.addf %18, %19 : vector<8x8xf32>
    %cst_14 = arith.constant dense<0xFF800000> : vector<8xf32>
    %21 = vector.multi_reduction <maximumf>, %20, %cst_14 [1] : vector<8x8xf32> to vector<8xf32>
    %22 = vector.shape_cast %21 : vector<8xf32> to vector<8x1xf32>
    %23 = vector.broadcast %22 : vector<8x1xf32> to vector<8x8xf32>
    %24 = arith.subf %20, %23 : vector<8x8xf32>
    %25 = math.exp %24 : vector<8x8xf32>
    %cst_15 = arith.constant dense<0.000000e+00> : vector<8xf32>
    %26 = vector.multi_reduction <add>, %25, %cst_15 [1] : vector<8x8xf32> to vector<8xf32>
    %27 = vector.shape_cast %26 : vector<8xf32> to vector<8x1xf32>
    %28 = tpu.reciprocal %27 {approx = true} : vector<8x1xf32> -> vector<8x1xf32>
    %29 = vector.broadcast %28 : vector<8x1xf32> to vector<8x8xf32>
    %30 = arith.mulf %25, %29 : vector<8x8xf32>
    %cst_16 = arith.constant dense<0.000000e+00> : vector<8x32xf32>
    %31 = tpu.matmul %30, %14, %cst_16 {dimension_numbers = #tpu.dot_dimension_numbers<[1], [0], [0], [1], [0, 0, 1, 1], [], []>} : vector<8x8xf32>, vector<8x32xf32>, vector<8x32xf32> -> vector<8x32xf32>
    %32 = arith.truncf %31 : vector<8x32xf32> to vector<8x32xbf16>
    %33 = vector.extract_strided_slice %10 {offsets = [0, 0], sizes = [32, 128], strides = [1, 1]} : vector<128x128xbf16> to vector<32x128xbf16>
    %cst_17 = arith.constant dense<0.000000e+00> : vector<8x128xf32>
    %34 = tpu.matmul %32, %33, %cst_17 {dimension_numbers = #tpu.dot_dimension_numbers<[1], [0], [0], [1], [0, 0, 1, 1], [], []>} : vector<8x32xbf16>, vector<32x128xbf16>, vector<8x128xf32> -> vector<8x128xf32>
    %35 = arith.addf %11, %34 : vector<8x128xf32>
    %36 = vector.extract_strided_slice %9 {offsets = [0, 32], sizes = [8, 32], strides = [1, 1]} : vector<8x384xf32> to vector<8x32xf32>
    %37 = vector.extract_strided_slice %9 {offsets = [0, 160], sizes = [8, 32], strides = [1, 1]} : vector<8x384xf32> to vector<8x32xf32>
    %38 = vector.extract_strided_slice %9 {offsets = [0, 288], sizes = [8, 32], strides = [1, 1]} : vector<8x384xf32> to vector<8x32xf32>
    %39 = tpu.transpose %37, [1, 0] : vector<8x32xf32> -> vector<32x8xf32>
    %cst_18 = arith.constant dense<0.000000e+00> : vector<8x8xf32>
    %40 = tpu.matmul %36, %39, %cst_18 {dimension_numbers = #tpu.dot_dimension_numbers<[1], [0], [0], [1], [0, 0, 1, 1], [], []>} : vector<8x32xf32>, vector<32x8xf32>, vector<8x8xf32> -> vector<8x8xf32>
    %cst_19 = arith.constant 0.176776692 : f32
    %41 = vector.broadcast %cst_19 : f32 to vector<8x8xf32>
    %42 = arith.mulf %40, %41 : vector<8x8xf32>
    %43 = vector.broadcast %3 : vector<1x8xf32> to vector<8x8xf32>
    %44 = arith.addf %42, %43 : vector<8x8xf32>
    %cst_20 = arith.constant dense<0xFF800000> : vector<8xf32>
    %45 = vector.multi_reduction <maximumf>, %44, %cst_20 [1] : vector<8x8xf32> to vector<8xf32>
    %46 = vector.shape_cast %45 : vector<8xf32> to vector<8x1xf32>
    %47 = vector.broadcast %46 : vector<8x1xf32> to vector<8x8xf32>
    %48 = arith.subf %44, %47 : vector<8x8xf32>
    %49 = math.exp %48 : vector<8x8xf32>
    %cst_21 = arith.constant dense<0.000000e+00> : vector<8xf32>
    %50 = vector.multi_reduction <add>, %49, %cst_21 [1] : vector<8x8xf32> to vector<8xf32>
    %51 = vector.shape_cast %50 : vector<8xf32> to vector<8x1xf32>
    %52 = tpu.reciprocal %51 {approx = true} : vector<8x1xf32> -> vector<8x1xf32>
    %53 = vector.broadcast %52 : vector<8x1xf32> to vector<8x8xf32>
    %54 = arith.mulf %49, %53 : vector<8x8xf32>
    %cst_22 = arith.constant dense<0.000000e+00> : vector<8x32xf32>
    %55 = tpu.matmul %54, %38, %cst_22 {dimension_numbers = #tpu.dot_dimension_numbers<[1], [0], [0], [1], [0, 0, 1, 1], [], []>} : vector<8x8xf32>, vector<8x32xf32>, vector<8x32xf32> -> vector<8x32xf32>
    %56 = arith.truncf %55 : vector<8x32xf32> to vector<8x32xbf16>
    %57 = vector.extract_strided_slice %10 {offsets = [32, 0], sizes = [32, 128], strides = [1, 1]} : vector<128x128xbf16> to vector<32x128xbf16>
    %cst_23 = arith.constant dense<0.000000e+00> : vector<8x128xf32>
    %58 = tpu.matmul %56, %57, %cst_23 {dimension_numbers = #tpu.dot_dimension_numbers<[1], [0], [0], [1], [0, 0, 1, 1], [], []>} : vector<8x32xbf16>, vector<32x128xbf16>, vector<8x128xf32> -> vector<8x128xf32>
    %59 = arith.addf %35, %58 : vector<8x128xf32>
    %60 = vector.extract_strided_slice %9 {offsets = [0, 64], sizes = [8, 32], strides = [1, 1]} : vector<8x384xf32> to vector<8x32xf32>
    %61 = vector.extract_strided_slice %9 {offsets = [0, 192], sizes = [8, 32], strides = [1, 1]} : vector<8x384xf32> to vector<8x32xf32>
    %62 = vector.extract_strided_slice %9 {offsets = [0, 320], sizes = [8, 32], strides = [1, 1]} : vector<8x384xf32> to vector<8x32xf32>
    %63 = tpu.transpose %61, [1, 0] : vector<8x32xf32> -> vector<32x8xf32>
    %cst_24 = arith.constant dense<0.000000e+00> : vector<8x8xf32>
    %64 = tpu.matmul %60, %63, %cst_24 {dimension_numbers = #tpu.dot_dimension_numbers<[1], [0], [0], [1], [0, 0, 1, 1], [], []>} : vector<8x32xf32>, vector<32x8xf32>, vector<8x8xf32> -> vector<8x8xf32>
    %cst_25 = arith.constant 0.176776692 : f32
    %65 = vector.broadcast %cst_25 : f32 to vector<8x8xf32>
    %66 = arith.mulf %64, %65 : vector<8x8xf32>
    %67 = vector.broadcast %3 : vector<1x8xf32> to vector<8x8xf32>
    %68 = arith.addf %66, %67 : vector<8x8xf32>
    %cst_26 = arith.constant dense<0xFF800000> : vector<8xf32>
    %69 = vector.multi_reduction <maximumf>, %68, %cst_26 [1] : vector<8x8xf32> to vector<8xf32>
    %70 = vector.shape_cast %69 : vector<8xf32> to vector<8x1xf32>
    %71 = vector.broadcast %70 : vector<8x1xf32> to vector<8x8xf32>
    %72 = arith.subf %68, %71 : vector<8x8xf32>
    %73 = math.exp %72 : vector<8x8xf32>
    %cst_27 = arith.constant dense<0.000000e+00> : vector<8xf32>
    %74 = vector.multi_reduction <add>, %73, %cst_27 [1] : vector<8x8xf32> to vector<8xf32>
    %75 = vector.shape_cast %74 : vector<8xf32> to vector<8x1xf32>
    %76 = tpu.reciprocal %75 {approx = true} : vector<8x1xf32> -> vector<8x1xf32>
    %77 = vector.broadcast %76 : vector<8x1xf32> to vector<8x8xf32>
    %78 = arith.mulf %73, %77 : vector<8x8xf32>
    %cst_28 = arith.constant dense<0.000000e+00> : vector<8x32xf32>
    %79 = tpu.matmul %78, %62, %cst_28 {dimension_numbers = #tpu.dot_dimension_numbers<[1], [0], [0], [1], [0, 0, 1, 1], [], []>} : vector<8x8xf32>, vector<8x32xf32>, vector<8x32xf32> -> vector<8x32xf32>
    %80 = arith.truncf %79 : vector<8x32xf32> to vector<8x32xbf16>
    %81 = vector.extract_strided_slice %10 {offsets = [64, 0], sizes = [32, 128], strides = [1, 1]} : vector<128x128xbf16> to vector<32x128xbf16>
    %cst_29 = arith.constant dense<0.000000e+00> : vector<8x128xf32>
    %82 = tpu.matmul %80, %81, %cst_29 {dimension_numbers = #tpu.dot_dimension_numbers<[1], [0], [0], [1], [0, 0, 1, 1], [], []>} : vector<8x32xbf16>, vector<32x128xbf16>, vector<8x128xf32> -> vector<8x128xf32>
    %83 = arith.addf %59, %82 : vector<8x128xf32>
    %84 = vector.extract_strided_slice %9 {offsets = [0, 96], sizes = [8, 32], strides = [1, 1]} : vector<8x384xf32> to vector<8x32xf32>
    %85 = vector.extract_strided_slice %9 {offsets = [0, 224], sizes = [8, 32], strides = [1, 1]} : vector<8x384xf32> to vector<8x32xf32>
    %86 = vector.extract_strided_slice %9 {offsets = [0, 352], sizes = [8, 32], strides = [1, 1]} : vector<8x384xf32> to vector<8x32xf32>
    %87 = tpu.transpose %85, [1, 0] : vector<8x32xf32> -> vector<32x8xf32>
    %cst_30 = arith.constant dense<0.000000e+00> : vector<8x8xf32>
    %88 = tpu.matmul %84, %87, %cst_30 {dimension_numbers = #tpu.dot_dimension_numbers<[1], [0], [0], [1], [0, 0, 1, 1], [], []>} : vector<8x32xf32>, vector<32x8xf32>, vector<8x8xf32> -> vector<8x8xf32>
    %cst_31 = arith.constant 0.176776692 : f32
    %89 = vector.broadcast %cst_31 : f32 to vector<8x8xf32>
    %90 = arith.mulf %88, %89 : vector<8x8xf32>
    %91 = vector.broadcast %3 : vector<1x8xf32> to vector<8x8xf32>
    %92 = arith.addf %90, %91 : vector<8x8xf32>
    %cst_32 = arith.constant dense<0xFF800000> : vector<8xf32>
    %93 = vector.multi_reduction <maximumf>, %92, %cst_32 [1] : vector<8x8xf32> to vector<8xf32>
    %94 = vector.shape_cast %93 : vector<8xf32> to vector<8x1xf32>
    %95 = vector.broadcast %94 : vector<8x1xf32> to vector<8x8xf32>
    %96 = arith.subf %92, %95 : vector<8x8xf32>
    %97 = math.exp %96 : vector<8x8xf32>
    %cst_33 = arith.constant dense<0.000000e+00> : vector<8xf32>
    %98 = vector.multi_reduction <add>, %97, %cst_33 [1] : vector<8x8xf32> to vector<8xf32>
    %99 = vector.shape_cast %98 : vector<8xf32> to vector<8x1xf32>
    %100 = tpu.reciprocal %99 {approx = true} : vector<8x1xf32> -> vector<8x1xf32>
    %101 = vector.broadcast %100 : vector<8x1xf32> to vector<8x8xf32>
    %102 = arith.mulf %97, %101 : vector<8x8xf32>
    %cst_34 = arith.constant dense<0.000000e+00> : vector<8x32xf32>
    %103 = tpu.matmul %102, %86, %cst_34 {dimension_numbers = #tpu.dot_dimension_numbers<[1], [0], [0], [1], [0, 0, 1, 1], [], []>} : vector<8x8xf32>, vector<8x32xf32>, vector<8x32xf32> -> vector<8x32xf32>
    %104 = arith.truncf %103 : vector<8x32xf32> to vector<8x32xbf16>
    %105 = vector.extract_strided_slice %10 {offsets = [96, 0], sizes = [32, 128], strides = [1, 1]} : vector<128x128xbf16> to vector<32x128xbf16>
    %cst_35 = arith.constant dense<0.000000e+00> : vector<8x128xf32>
    %106 = tpu.matmul %104, %105, %cst_35 {dimension_numbers = #tpu.dot_dimension_numbers<[1], [0], [0], [1], [0, 0, 1, 1], [], []>} : vector<8x32xbf16>, vector<32x128xbf16>, vector<8x128xf32> -> vector<8x128xf32>
    %107 = arith.addf %83, %106 : vector<8x128xf32>
    %c0_36 = arith.constant 0 : index
    %c0_37 = arith.constant 0 : index
    %108 = vector.load %arg6[%c0_36, %c0_37] : memref<1x128xf32, #tpu.memory_space<vmem>>, vector<1x128xf32>
    %109 = vector.broadcast %108 : vector<1x128xf32> to vector<8x128xf32>
    %110 = arith.addf %107, %109 : vector<8x128xf32>
    %111 = arith.addf %110, %1 : vector<8x128xf32>
    %c0_38 = arith.constant 0 : index
    %c0_39 = arith.constant 0 : index
    %112 = vector.load %arg7[%c0_38, %c0_39] : memref<1x128xf32, #tpu.memory_space<vmem>>, vector<1x128xf32>
    %c0_40 = arith.constant 0 : index
    %c0_41 = arith.constant 0 : index
    %113 = vector.load %arg8[%c0_40, %c0_41] : memref<1x128xf32, #tpu.memory_space<vmem>>, vector<1x128xf32>
    %cst_42 = arith.constant dense<0.000000e+00> : vector<8xf32>
    %114 = vector.multi_reduction <add>, %111, %cst_42 [1] : vector<8x128xf32> to vector<8xf32>
    %115 = vector.shape_cast %114 : vector<8xf32> to vector<8x1xf32>
    %cst_43 = arith.constant 1.280000e+02 : f32
    %116 = vector.broadcast %cst_43 : f32 to vector<8x1xf32>
    %117 = arith.divf %115, %116 : vector<8x1xf32>
    %118 = vector.broadcast %117 : vector<8x1xf32> to vector<8x128xf32>
    %119 = arith.subf %111, %118 : vector<8x128xf32>
    %120 = arith.mulf %119, %119 : vector<8x128xf32>
    %cst_44 = arith.constant dense<0.000000e+00> : vector<8xf32>
    %121 = vector.multi_reduction <add>, %120, %cst_44 [1] : vector<8x128xf32> to vector<8xf32>
    %122 = vector.shape_cast %121 : vector<8xf32> to vector<8x1xf32>
    %cst_45 = arith.constant 1.280000e+02 : f32
    %123 = vector.broadcast %cst_45 : f32 to vector<8x1xf32>
    %124 = arith.divf %122, %123 : vector<8x1xf32>
    %cst_46 = arith.constant 9.99999996E-13 : f32
    %125 = vector.broadcast %cst_46 : f32 to vector<8x1xf32>
    %126 = arith.addf %124, %125 : vector<8x1xf32>
    %127 = math.rsqrt %126 : vector<8x1xf32>
    %128 = vector.broadcast %127 : vector<8x1xf32> to vector<8x128xf32>
    %129 = arith.mulf %119, %128 : vector<8x128xf32>
    %130 = vector.broadcast %112 : vector<1x128xf32> to vector<8x128xf32>
    %131 = arith.mulf %129, %130 : vector<8x128xf32>
    %132 = vector.broadcast %113 : vector<1x128xf32> to vector<8x128xf32>
    %133 = arith.addf %131, %132 : vector<8x128xf32>
    %134 = arith.truncf %133 : vector<8x128xf32> to vector<8x128xbf16>
    %c0_47 = arith.constant 0 : index
    %c0_48 = arith.constant 0 : index
    %135 = vector.load %arg9[%c0_47, %c0_48] : memref<128x256xbf16, #tpu.memory_space<vmem>>, vector<128x256xbf16>
    %cst_49 = arith.constant dense<0.000000e+00> : vector<8x256xf32>
    %136 = tpu.matmul %134, %135, %cst_49 {dimension_numbers = #tpu.dot_dimension_numbers<[1], [0], [0], [1], [0, 0, 1, 1], [], []>} : vector<8x128xbf16>, vector<128x256xbf16>, vector<8x256xf32> -> vector<8x256xf32>
    %c0_50 = arith.constant 0 : index
    %c0_51 = arith.constant 0 : index
    %137 = vector.load %arg10[%c0_50, %c0_51] : memref<1x256xf32, #tpu.memory_space<vmem>>, vector<1x256xf32>
    %138 = vector.broadcast %137 : vector<1x256xf32> to vector<8x256xf32>
    %139 = arith.addf %136, %138 : vector<8x256xf32>
    %140 = arith.mulf %139, %139 : vector<8x256xf32>
    %141 = arith.mulf %139, %140 : vector<8x256xf32>
    %cst_52 = arith.constant 4.471500e-02 : f32
    %142 = vector.broadcast %cst_52 : f32 to vector<8x256xf32>
    %143 = arith.mulf %142, %141 : vector<8x256xf32>
    %144 = arith.addf %139, %143 : vector<8x256xf32>
    %cst_53 = arith.constant 0.797884583 : f32
    %145 = vector.broadcast %cst_53 : f32 to vector<8x256xf32>
    %146 = arith.mulf %145, %144 : vector<8x256xf32>
    %147 = math.tanh %146 : vector<8x256xf32>
    %cst_54 = arith.constant 1.000000e+00 : f32
    %148 = vector.broadcast %cst_54 : f32 to vector<8x256xf32>
    %149 = arith.addf %148, %147 : vector<8x256xf32>
    %cst_55 = arith.constant 5.000000e-01 : f32
    %150 = vector.broadcast %cst_55 : f32 to vector<8x256xf32>
    %151 = arith.mulf %150, %149 : vector<8x256xf32>
    %152 = arith.mulf %139, %151 : vector<8x256xf32>
    %153 = arith.truncf %152 : vector<8x256xf32> to vector<8x256xbf16>
    %c0_56 = arith.constant 0 : index
    %c0_57 = arith.constant 0 : index
    %154 = vector.load %arg11[%c0_56, %c0_57] : memref<256x128xbf16, #tpu.memory_space<vmem>>, vector<256x128xbf16>
    %cst_58 = arith.constant dense<0.000000e+00> : vector<8x128xf32>
    %155 = tpu.matmul %153, %154, %cst_58 {dimension_numbers = #tpu.dot_dimension_numbers<[1], [0], [0], [1], [0, 0, 1, 1], [], []>} : vector<8x256xbf16>, vector<256x128xbf16>, vector<8x128xf32> -> vector<8x128xf32>
    %c0_59 = arith.constant 0 : index
    %c0_60 = arith.constant 0 : index
    %156 = vector.load %arg12[%c0_59, %c0_60] : memref<1x128xf32, #tpu.memory_space<vmem>>, vector<1x128xf32>
    %157 = vector.broadcast %156 : vector<1x128xf32> to vector<8x128xf32>
    %158 = arith.addf %155, %157 : vector<8x128xf32>
    %159 = arith.addf %158, %133 : vector<8x128xf32>
    %c0_61 = arith.constant 0 : index
    %c0_62 = arith.constant 0 : index
    %160 = vector.load %arg13[%c0_61, %c0_62] : memref<1x128xf32, #tpu.memory_space<vmem>>, vector<1x128xf32>
    %c0_63 = arith.constant 0 : index
    %c0_64 = arith.constant 0 : index
    %161 = vector.load %arg14[%c0_63, %c0_64] : memref<1x128xf32, #tpu.memory_space<vmem>>, vector<1x128xf32>
    %cst_65 = arith.constant dense<0.000000e+00> : vector<8xf32>
    %162 = vector.multi_reduction <add>, %159, %cst_65 [1] : vector<8x128xf32> to vector<8xf32>
    %163 = vector.shape_cast %162 : vector<8xf32> to vector<8x1xf32>
    %cst_66 = arith.constant 1.280000e+02 : f32
    %164 = vector.broadcast %cst_66 : f32 to vector<8x1xf32>
    %165 = arith.divf %163, %164 : vector<8x1xf32>
    %166 = vector.broadcast %165 : vector<8x1xf32> to vector<8x128xf32>
    %167 = arith.subf %159, %166 : vector<8x128xf32>
    %168 = arith.mulf %167, %167 : vector<8x128xf32>
    %cst_67 = arith.constant dense<0.000000e+00> : vector<8xf32>
    %169 = vector.multi_reduction <add>, %168, %cst_67 [1] : vector<8x128xf32> to vector<8xf32>
    %170 = vector.shape_cast %169 : vector<8xf32> to vector<8x1xf32>
    %cst_68 = arith.constant 1.280000e+02 : f32
    %171 = vector.broadcast %cst_68 : f32 to vector<8x1xf32>
    %172 = arith.divf %170, %171 : vector<8x1xf32>
    %cst_69 = arith.constant 9.99999996E-13 : f32
    %173 = vector.broadcast %cst_69 : f32 to vector<8x1xf32>
    %174 = arith.addf %172, %173 : vector<8x1xf32>
    %175 = math.rsqrt %174 : vector<8x1xf32>
    %176 = vector.broadcast %175 : vector<8x1xf32> to vector<8x128xf32>
    %177 = arith.mulf %167, %176 : vector<8x128xf32>
    %178 = vector.broadcast %160 : vector<1x128xf32> to vector<8x128xf32>
    %179 = arith.mulf %177, %178 : vector<8x128xf32>
    %180 = vector.broadcast %161 : vector<1x128xf32> to vector<8x128xf32>
    %181 = arith.addf %179, %180 : vector<8x128xf32>
    %c0_70 = arith.constant 0 : index
    %c0_71 = arith.constant 0 : index
    %c0_72 = arith.constant 0 : index
    %182 = vector.load %arg15[%c0_70, %c0_71, %c0_72] : memref<1x8x128xf32, #tpu.memory_space<vmem>>, vector<1x8x128xf32>
    %183 = vector.shape_cast %182 : vector<1x8x128xf32> to vector<8x128xf32>
    %184 = vector.shape_cast %181 : vector<8x128xf32> to vector<1x8x128xf32>
    tpu.vector_store %arg15[%c0_70, %c0_71, %c0_72], %184 {strides = array<i32>} : memref<1x8x128xf32, #tpu.memory_space<vmem>>, vector<1x8x128xf32>,
    return
  }
  func.func @transform_0(%arg0: i32) -> (i32, i32, i32) {
    %c0_i32 = arith.constant 0 : i32
    %c0_i32_0 = arith.constant 0 : i32
    %c0_i32_1 = arith.constant 0 : i32
    return %arg0, %c0_i32, %c0_i32_0 : i32, i32, i32
  }
  func.func @transform_1(%arg0: i32) -> (i32, i32, i32) {
    %c0_i32 = arith.constant 0 : i32
    %c0_i32_0 = arith.constant 0 : i32
    %c0_i32_1 = arith.constant 0 : i32
    return %arg0, %c0_i32, %c0_i32_0 : i32, i32, i32
  }
  func.func @transform_2(%arg0: i32) -> (i32, i32) {
    %c0_i32 = arith.constant 0 : i32
    %c0_i32_0 = arith.constant 0 : i32
    %c0_i32_1 = arith.constant 0 : i32
    return %c0_i32, %c0_i32_0 : i32, i32
  }
  func.func @transform_3(%arg0: i32) -> (i32, i32) {
    %c0_i32 = arith.constant 0 : i32
    %c0_i32_0 = arith.constant 0 : i32
    %c0_i32_1 = arith.constant 0 : i32
    return %c0_i32, %c0_i32_0 : i32, i32
  }
  func.func @transform_4(%arg0: i32) -> (i32, i32) {
    %c0_i32 = arith.constant 0 : i32
    %c0_i32_0 = arith.constant 0 : i32
    %c0_i32_1 = arith.constant 0 : i32
    return %c0_i32, %c0_i32_0 : i32, i32
  }
  func.func @transform_5(%arg0: i32) -> (i32, i32) {
    %c0_i32 = arith.constant 0 : i32
    %c0_i32_0 = arith.constant 0 : i32
    %c0_i32_1 = arith.constant 0 : i32
    return %c0_i32, %c0_i32_0 : i32, i32
  }
  func.func @transform_6(%arg0: i32) -> (i32, i32) {
    %c0_i32 = arith.constant 0 : i32
    %c0_i32_0 = arith.constant 0 : i32
    %c0_i32_1 = arith.constant 0 : i32
    return %c0_i32, %c0_i32_0 : i32, i32
  }
  func.func @transform_7(%arg0: i32) -> (i32, i32) {
    %c0_i32 = arith.constant 0 : i32
    %c0_i32_0 = arith.constant 0 : i32
    %c0_i32_1 = arith.constant 0 : i32
    return %c0_i32, %c0_i32_0 : i32, i32
  }
  func.func @transform_8(%arg0: i32) -> (i32, i32) {
    %c0_i32 = arith.constant 0 : i32
    %c0_i32_0 = arith.constant 0 : i32
    %c0_i32_1 = arith.constant 0 : i32
    return %c0_i32, %c0_i32_0 : i32, i32
  }
  func.func @transform_9(%arg0: i32) -> (i32, i32) {
    %c0_i32 = arith.constant 0 : i32
    %c0_i32_0 = arith.constant 0 : i32
    %c0_i32_1 = arith.constant 0 : i32
    return %c0_i32, %c0_i32_0 : i32, i32
  }
  func.func @transform_10(%arg0: i32) -> (i32, i32) {
    %c0_i32 = arith.constant 0 : i32
    %c0_i32_0 = arith.constant 0 : i32
    %c0_i32_1 = arith.constant 0 : i32
    return %c0_i32, %c0_i32_0 : i32, i32
  }
  func.func @transform_11(%arg0: i32) -> (i32, i32) {
    %c0_i32 = arith.constant 0 : i32
    %c0_i32_0 = arith.constant 0 : i32
    %c0_i32_1 = arith.constant 0 : i32
    return %c0_i32, %c0_i32_0 : i32, i32
  }
  func.func @transform_12(%arg0: i32) -> (i32, i32) {
    %c0_i32 = arith.constant 0 : i32
    %c0_i32_0 = arith.constant 0 : i32
    %c0_i32_1 = arith.constant 0 : i32
    return %c0_i32, %c0_i32_0 : i32, i32
  }
  func.func @transform_13(%arg0: i32) -> (i32, i32) {
    %c0_i32 = arith.constant 0 : i32
    %c0_i32_0 = arith.constant 0 : i32
    %c0_i32_1 = arith.constant 0 : i32
    return %c0_i32, %c0_i32_0 : i32, i32
  }
  func.func @transform_14(%arg0: i32) -> (i32, i32, i32) {
    %c0_i32 = arith.constant 0 : i32
    %c0_i32_0 = arith.constant 0 : i32
    %c0_i32_1 = arith.constant 0 : i32
    return %arg0, %c0_i32, %c0_i32_0 : i32, i32, i32
  }
}

</mosaic_0001>

<llo_original>
// kernel: bert_classifier_forward.4
$region0: #{bert_classifier_forward.4}
  #allocation0 [shape = 'u32[]', space=smem, size = 0x4, offset = 0x4, fixed_abs, tag = 'smem constant byte address 0x4 - core index']
  #allocation1 [shape = 'u32[144,128]{1,0:T(1,128)}', space=vmem, size = 0x12000, scoped, tag = 'internal scratch']
  %s0 = inlined_call_operand.vmem [shape: f32[16,128], index: 0, kind: input, shape index: {}]
  %s1 = inlined_call_operand.hbm [shape: f32[1,128], index: 1, kind: input, shape index: {}]
  %s2 = inlined_call_operand.hbm [shape: f32[1,128], index: 2, kind: input, shape index: {}]
  %s3 = inlined_call_operand.vmem [shape: f32[16,128], index: 3, kind: output, shape index: {}]
  %s4 = sld [smem:[#allocation0]]
  $region30: #{bert_classifier_forward.4} parent=0
    _
  %s6 = ssub.s32 1, %s4
  %s7 = scalar_select 0, %s6, %s4
  $region1: #{bert_classifier_forward.4} parent=0
    #allocation2 [shape = 'u8[512]{0}', space=vmem, size = 0x400, scoped, tag = 'input window, operand 1, single buffered']
    #allocation3 [shape = 's32[1]{0}', space=sflag, size = 0x4, scoped, tag = 'scoped memory for bert_classifier_forward.4']
    #allocation4 [shape = 'u8[512]{0}', space=vmem, size = 0x400, scoped, tag = 'input window, operand 2, single buffered']
    #allocation5 [shape = 's32[1]{0}', space=sflag, size = 0x4, scoped, tag = 'scoped memory for bert_classifier_forward.4']
    %8 = vsyncpa [#allocation3], 0
    %9 = vsyncpa [#allocation5], 0
    // Predicated region
    $region2: #{bert_classifier_forward.4} parent=1 // pred_check
      _
    $region3: #{bert_classifier_forward.4} parent=1 // pred_check_branch
      %11 = sbr.rel (0) target = $region5
    $region4: #{bert_classifier_forward.4} parent=1 // pred_region
      _
    $region5: #{bert_classifier_forward.4} parent=1 // pred_fallthru
      _
    // Predicated region
    $region6: #{bert_classifier_forward.4} parent=1 // pred_check
      _
    $region7: #{bert_classifier_forward.4} parent=1 // pred_check_branch
      %13 = sbr.rel (0) target = $region9
    $region8: #{bert_classifier_forward.4} parent=1 // pred_region
      %s15 = ssub.s32 16, 16
      %16 = vsyncadd [#allocation3], %s15
      %s18 = sshll.u32 [#allocation2], 4
      %s19 = int_to_ptr.vmem [resolvable:$true] %s18
      %21 = dma.hbm_to_vmem [thread:$0]  %s1, 16, %s19, [#allocation3]
    $region9: #{bert_classifier_forward.4} parent=1 // pred_fallthru
      _
    // Predicated region
    $region10: #{bert_classifier_forward.4} parent=1 // pred_check
      _
    $region11: #{bert_classifier_forward.4} parent=1 // pred_check_branch
      %23 = sbr.rel (0) target = $region13
    $region12: #{bert_classifier_forward.4} parent=1 // pred_region
      %s25 = ssub.s32 16, 16
      %26 = vsyncadd [#allocation5], %s25
      %s28 = sshll.u32 [#allocation4], 4
      %s29 = int_to_ptr.vmem [resolvable:$true] %s28
      %31 = dma.hbm_to_vmem [thread:$0]  %s2, 16, %s29, [#allocation5]
    $region13: #{bert_classifier_forward.4} parent=1 // pred_fallthru
      _
    // Predicated region
    $region14: #{bert_classifier_forward.4} parent=1 // pred_check
      _
    $region15: #{bert_classifier_forward.4} parent=1 // pred_check_branch
      %33 = sbr.rel (0) target = $region17
    $region16: #{bert_classifier_forward.4} parent=1 // pred_region
      %34 = dma.done [#allocation3], 16
    $region17: #{bert_classifier_forward.4} parent=1 // pred_fallthru
      _
    // Predicated region
    $region18: #{bert_classifier_forward.4} parent=1 // pred_check
      _
    $region19: #{bert_classifier_forward.4} parent=1 // pred_check_branch
      %36 = sbr.rel (0) target = $region21
    $region20: #{bert_classifier_forward.4} parent=1 // pred_region
      %37 = dma.done [#allocation5], 16
    $region21: #{bert_classifier_forward.4} parent=1 // pred_fallthru
      _
    %v38 = vld [vmem:[%s0] sm:$0xff]
    %v39 = vld [vmem:[%s0 + $0x8] sm:$0xff]
    %v40 = vld [vmem:[#allocation2] sm:$0x1]
    %v41 = vld [vmem:[#allocation4] sm:$0x1]
    %42 = vadd.xlane.f32.xlu0 %v38
    %v43 = vpop.xlane.xlu0 %42
    %44 = vadd.xlane.f32.xlu0 %v39
    %v45 = vpop.xlane.xlu0 %44
    %v46 = vrcp.pop 128.0
    %v47 = vmul.f32 %v43, %v46
    %v48 = vmul.f32 %v45, %v46
    %v49 = vsub.f32 %v38, %v47
    %v50 = vsub.f32 %v39, %v48
    %v51 = vmul.f32 %v49, %v49
    %v52 = vmul.f32 %v50, %v50
    %53 = vadd.xlane.f32.xlu0 %v51
    %v54 = vpop.xlane.xlu0 %53
    %55 = vadd.xlane.f32.xlu0 %v52
    %v56 = vpop.xlane.xlu0 %55
    %v57 = vmul.f32 %v54, %v46
    %v58 = vmul.f32 %v56, %v46
    %v59 = vadd.f32 %v57, 1e-12
    %v60 = vadd.f32 %v58, 1e-12
    %v61 = vrsqrt.pop %v59
    %v62 = vrsqrt.pop %v60
    %v63 = vmul.f32 %v49, %v61
    %v64 = vmul.f32 %v50, %v62
    %v66 = vlaneseq
    %v67 = vshrl.u32 %v66, 7
    %v68 = vsub.s32 0, %v67
    %v69 = vrot.slane %v40, %v68
    %v71 = vmul.f32 %v63, %v69
    %v72 = vmul.f32 %v64, %v69
    %v74 = vlaneseq
    %v75 = vshrl.u32 %v74, 7
    %v76 = vsub.s32 0, %v75
    %v77 = vrot.slane %v41, %v76
    %v79 = vadd.f32 %v71, %v77
    %v80 = vadd.f32 %v72, %v77
    %81 = vst [vmem:[%s3] sm:$0xff] %v79
    %82 = vst [vmem:[%s3 + $0x8] sm:$0xff] %v80
    // Predicated region
    $region22: #{bert_classifier_forward.4} parent=1 // pred_check
      _
    $region23: #{bert_classifier_forward.4} parent=1 // pred_check_branch
      %84 = sbr.rel (0) target = $region25
    $region24: #{bert_classifier_forward.4} parent=1 // pred_region
      _
    $region25: #{bert_classifier_forward.4} parent=1 // pred_fallthru
      _
    // Predicated region
    $region26: #{bert_classifier_forward.4} parent=1 // pred_check
      _
    $region27: #{bert_classifier_forward.4} parent=1 // pred_check_branch
      %86 = sbr.rel (0) target = $region29
    $region28: #{bert_classifier_forward.4} parent=1 // pred_region
      _
    $region29: #{bert_classifier_forward.4} parent=1 // pred_fallthru
      _
    %87 = vsyncpa [#allocation3], 1
    %88 = vsyncpa [#allocation5], 1

// kernel: bert_classifier_forward.7
$region0: #{bert_classifier_forward.7}
  #allocation0 [shape = 'u32[]', space=smem, size = 0x4, offset = 0x4, fixed_abs, tag = 'smem constant byte address 0x4 - core index']
  #allocation1 [shape = 'u32[144,128]{1,0:T(1,128)}', space=vmem, size = 0x12000, scoped, tag = 'internal scratch']
  %s0 = inlined_call_operand.vmem [shape: f32[2,128], index: 0, kind: input, shape index: {}]
  %s1 = inlined_call_operand.vmem [shape: bf16[128,128], index: 1, kind: input, shape index: {}]
  %s2 = inlined_call_operand.vmem [shape: f32[1,128], index: 2, kind: input, shape index: {}]
  %s3 = inlined_call_operand.vmem [shape: bf16[128,128], index: 3, kind: input, shape index: {}]
  %s4 = inlined_call_operand.vmem [shape: f32[1,128], index: 4, kind: input, shape index: {}]
  %s5 = inlined_call_operand.hbm [shape: f32[2,128], index: 5, kind: output, shape index: {}]
  %s6 = sld [smem:[#allocation0]]
  $region30: #{bert_classifier_forward.7} parent=0
    _
  %s8 = ssub.s32 1, %s6
  %s9 = scalar_select 0, %s8, %s6
  $region1: #{bert_classifier_forward.7} parent=0
    #allocation2 [shape = 'u8[1024]{0}', space=vmem, size = 0x400, scoped, tag = 'output window, operand 0, single buffered']
    #allocation3 [shape = 's32[1]{0}', space=sflag, size = 0x4, scoped, tag = 'scoped memory for bert_classifier_forward.7']
    %10 = vsyncpa [#allocation3], 0
    // Predicated region
    $region2: #{bert_classifier_forward.7} parent=1 // pred_check
      _
    $region3: #{bert_classifier_forward.7} parent=1 // pred_check_branch
      %12 = sbr.rel (0) target = $region5
    $region4: #{bert_classifier_forward.7} parent=1 // pred_region
      _
    $region5: #{bert_classifier_forward.7} parent=1 // pred_fallthru
      _
    // Predicated region
    $region6: #{bert_classifier_forward.7} parent=1 // pred_check
      _
    $region7: #{bert_classifier_forward.7} parent=1 // pred_check_branch
      %14 = sbr.rel (0) target = $region9
    $region8: #{bert_classifier_forward.7} parent=1 // pred_region
      _
    $region9: #{bert_classifier_forward.7} parent=1 // pred_fallthru
      _
    // Predicated region
    $region10: #{bert_classifier_forward.7} parent=1 // pred_check
      _
    $region11: #{bert_classifier_forward.7} parent=1 // pred_check_branch
      %16 = sbr.rel (0) target = $region13
    $region12: #{bert_classifier_forward.7} parent=1 // pred_region
      _
    $region13: #{bert_classifier_forward.7} parent=1 // pred_fallthru
      _
    // Predicated region
    $region14: #{bert_classifier_forward.7} parent=1 // pred_check
      _
    $region15: #{bert_classifier_forward.7} parent=1 // pred_check_branch
      %18 = sbr.rel (0) target = $region17
    $region16: #{bert_classifier_forward.7} parent=1 // pred_region
      _
    $region17: #{bert_classifier_forward.7} parent=1 // pred_fallthru
      _
    // Predicated region
    $region18: #{bert_classifier_forward.7} parent=1 // pred_check
      _
    $region19: #{bert_classifier_forward.7} parent=1 // pred_check_branch
      %20 = sbr.rel (0) target = $region21
    $region20: #{bert_classifier_forward.7} parent=1 // pred_region
      _
    $region21: #{bert_classifier_forward.7} parent=1 // pred_fallthru
      _
    %v22 = vld [vmem:[%s0] sm:$0x3]
    %v23 = vpack.c.bf16 %v22, %v22
    %v24 = vld [vmem:[%s1] sm:$0xf]
    %v25 = vld [vmem:[%s1 + $0x4] sm:$0xf]
    %v26 = vld [vmem:[%s1 + $0x8] sm:$0xf]
    %v27 = vld [vmem:[%s1 + $0xc] sm:$0xf]
    %v28 = vld [vmem:[%s1 + $0x10] sm:$0xf]
    %v29 = vld [vmem:[%s1 + $0x14] sm:$0xf]
    %v30 = vld [vmem:[%s1 + $0x18] sm:$0xf]
    %v31 = vld [vmem:[%s1 + $0x1c] sm:$0xf]
    %v32 = vld [vmem:[%s1 + $0x20] sm:$0xf]
    %v33 = vld [vmem:[%s1 + $0x24] sm:$0xf]
    %v34 = vld [vmem:[%s1 + $0x28] sm:$0xf]
    %v35 = vld [vmem:[%s1 + $0x2c] sm:$0xf]
    %v36 = vld [vmem:[%s1 + $0x30] sm:$0xf]
    %v37 = vld [vmem:[%s1 + $0x34] sm:$0xf]
    %v38 = vld [vmem:[%s1 + $0x38] sm:$0xf]
    %v39 = vld [vmem:[%s1 + $0x3c] sm:$0xf]
    %v40 = vld [vmem:[%s2] sm:$0x1]
    %v42 = vlaneseq
    %v43 = vshrl.u32 %v42, 7
    %v44 = vsub.s32 0, %v43
    %v45 = vrot.slane %v40, %v44
    %v63 = vunpack.c.l.b16 %v24
    %v64 = vunpack.c.l.b16 %v25
    %v65 = vunpack.c.l.b16 %v26
    %v66 = vunpack.c.l.b16 %v27
    %v67 = vunpack.c.l.b16 %v28
    %v68 = vunpack.c.l.b16 %v29
    %v69 = vunpack.c.l.b16 %v30
    %v70 = vunpack.c.l.b16 %v31
    %v71 = vunpack.c.l.b16 %v32
    %v72 = vunpack.c.l.b16 %v33
    %v73 = vunpack.c.l.b16 %v34
    %v74 = vunpack.c.l.b16 %v35
    %v75 = vunpack.c.l.b16 %v36
    %v76 = vunpack.c.l.b16 %v37
    %v77 = vunpack.c.l.b16 %v38
    %v78 = vunpack.c.l.b16 %v39
    %v79 = vpack.c.b16 %v64, %v63
    %v80 = vpack.c.b16 %v66, %v65
    %v81 = vpack.c.b16 %v68, %v67
    %v82 = vpack.c.b16 %v70, %v69
    %v83 = vpack.c.b16 %v72, %v71
    %v84 = vpack.c.b16 %v74, %v73
    %v85 = vpack.c.b16 %v76, %v75
    %v86 = vpack.c.b16 %v78, %v77
    %95 = vmatprep.subr.bf16.mxu0 0
    %96 = vmatpush1.bf16.msra.mxu0 %v79
    %97 = vmatprep.subr.bf16.mxu0 0
    %98 = vmatpush1.bf16.msra.mxu0 %v80
    %99 = vmatprep.subr.bf16.mxu0 0
    %100 = vmatpush1.bf16.msra.mxu0 %v81
    %101 = vmatprep.subr.bf16.mxu0 0
    %102 = vmatpush1.bf16.msra.mxu0 %v82
    %103 = vmatprep.subr.bf16.mxu0 0
    %104 = vmatpush1.bf16.msra.mxu0 %v83
    %105 = vmatprep.subr.bf16.mxu0 0
    %106 = vmatpush1.bf16.msra.mxu0 %v84
    %107 = vmatprep.subr.bf16.mxu0 0
    %108 = vmatpush1.bf16.msra.mxu0 %v85
    %109 = vmatprep.subr.bf16.mxu0 0
    %110 = vmatpush1.bf16.msra.mxu0 %v86
    %111 = vmatprep.subr.bf16.mxu0 0
    %112 = vmatpush1.bf16.msra.mxu0 0
    %113 = vmatprep.subr.bf16.mxu0 0
    %114 = vmatpush1.bf16.msra.mxu0 0
    %115 = vmatprep.subr.bf16.mxu0 0
    %116 = vmatpush1.bf16.msra.mxu0 0
    %117 = vmatprep.subr.bf16.mxu0 0
    %118 = vmatpush1.bf16.msra.mxu0 0
    %119 = vmatprep.subr.bf16.mxu0 0
    %120 = vmatpush1.bf16.msra.mxu0 0
    %121 = vmatprep.subr.bf16.mxu0 0
    %122 = vmatpush1.bf16.msra.mxu0 0
    %123 = vmatprep.subr.bf16.mxu0 0
    %124 = vmatpush1.bf16.msra.mxu0 0
    %125 = vmatprep.subr.bf16.mxu0 0
    %126 = vmatpush1.bf16.msra.mxu0 0
    %127 = vmatprep.mubr.bf16.mxu0 0
    %128 = vmatmul.mubr.bf16.gmra.mrb[0].mxu0 %v23
    %v129 = vpop.f32.mrb[0].mxu0
    %v130 = vadd.f32 %v45, %v129
    %v131 = vpop.f32.mrb[0].mxu0
    %v132 = vpop.f32.mrb[0].mxu0
    %v133 = vpop.f32.mrb[0].mxu0
    %134 = vdwg.mxu0
    %v135 = vtanh.pop %v130
    %v136 = vpack.c.bf16 %v135, %v135
    %v137 = vld [vmem:[%s3] sm:$0xf]
    %v138 = vld [vmem:[%s3 + $0x4] sm:$0xf]
    %v139 = vld [vmem:[%s3 + $0x8] sm:$0xf]
    %v140 = vld [vmem:[%s3 + $0xc] sm:$0xf]
    %v141 = vld [vmem:[%s3 + $0x10] sm:$0xf]
    %v142 = vld [vmem:[%s3 + $0x14] sm:$0xf]
    %v143 = vld [vmem:[%s3 + $0x18] sm:$0xf]
    %v144 = vld [vmem:[%s3 + $0x1c] sm:$0xf]
    %v145 = vld [vmem:[%s3 + $0x20] sm:$0xf]
    %v146 = vld [vmem:[%s3 + $0x24] sm:$0xf]
    %v147 = vld [vmem:[%s3 + $0x28] sm:$0xf]
    %v148 = vld [vmem:[%s3 + $0x2c] sm:$0xf]
    %v149 = vld [vmem:[%s3 + $0x30] sm:$0xf]
    %v150 = vld [vmem:[%s3 + $0x34] sm:$0xf]
    %v151 = vld [vmem:[%s3 + $0x38] sm:$0xf]
    %v152 = vld [vmem:[%s3 + $0x3c] sm:$0xf]
    %v153 = vld [vmem:[%s4] sm:$0x1]
    %v155 = vlaneseq
    %v156 = vshrl.u32 %v155, 7
    %v157 = vsub.s32 0, %v156
    %v158 = vrot.slane %v153, %v157
    %v176 = vunpack.c.l.b16 %v137
    %v177 = vunpack.c.l.b16 %v138
    %v178 = vunpack.c.l.b16 %v139
    %v179 = vunpack.c.l.b16 %v140
    %v180 = vunpack.c.l.b16 %v141
    %v181 = vunpack.c.l.b16 %v142
    %v182 = vunpack.c.l.b16 %v143
    %v183 = vunpack.c.l.b16 %v144
    %v184 = vunpack.c.l.b16 %v145
    %v185 = vunpack.c.l.b16 %v146
    %v186 = vunpack.c.l.b16 %v147
    %v187 = vunpack.c.l.b16 %v148
    %v188 = vunpack.c.l.b16 %v149
    %v189 = vunpack.c.l.b16 %v150
    %v190 = vunpack.c.l.b16 %v151
    %v191 = vunpack.c.l.b16 %v152
    %v192 = vpack.c.b16 %v177, %v176
    %v193 = vpack.c.b16 %v179, %v178
    %v194 = vpack.c.b16 %v181, %v180
    %v195 = vpack.c.b16 %v183, %v182
    %v196 = vpack.c.b16 %v185, %v184
    %v197 = vpack.c.b16 %v187, %v186
    %v198 = vpack.c.b16 %v189, %v188
    %v199 = vpack.c.b16 %v191, %v190
    %208 = vmatprep.subr.bf16.mxu0 0
    %209 = vmatpush1.bf16.msra.mxu0 %v192
    %210 = vmatprep.subr.bf16.mxu0 0
    %211 = vmatpush1.bf16.msra.mxu0 %v193
    %212 = vmatprep.subr.bf16.mxu0 0
    %213 = vmatpush1.bf16.msra.mxu0 %v194
    %214 = vmatprep.subr.bf16.mxu0 0
    %215 = vmatpush1.bf16.msra.mxu0 %v195
    %216 = vmatprep.subr.bf16.mxu0 0
    %217 = vmatpush1.bf16.msra.mxu0 %v196
    %218 = vmatprep.subr.bf16.mxu0 0
    %219 = vmatpush1.bf16.msra.mxu0 %v197
    %220 = vmatprep.subr.bf16.mxu0 0
    %221 = vmatpush1.bf16.msra.mxu0 %v198
    %222 = vmatprep.subr.bf16.mxu0 0
    %223 = vmatpush1.bf16.msra.mxu0 %v199
    %224 = vmatprep.subr.bf16.mxu0 0
    %225 = vmatpush1.bf16.msra.mxu0 0
    %226 = vmatprep.subr.bf16.mxu0 0
    %227 = vmatpush1.bf16.msra.mxu0 0
    %228 = vmatprep.subr.bf16.mxu0 0
    %229 = vmatpush1.bf16.msra.mxu0 0
    %230 = vmatprep.subr.bf16.mxu0 0
    %231 = vmatpush1.bf16.msra.mxu0 0
    %232 = vmatprep.subr.bf16.mxu0 0
    %233 = vmatpush1.bf16.msra.mxu0 0
    %234 = vmatprep.subr.bf16.mxu0 0
    %235 = vmatpush1.bf16.msra.mxu0 0
    %236 = vmatprep.subr.bf16.mxu0 0
    %237 = vmatpush1.bf16.msra.mxu0 0
    %238 = vmatprep.subr.bf16.mxu0 0
    %239 = vmatpush1.bf16.msra.mxu0 0
    %240 = vmatprep.mubr.bf16.mxu0 0
    %241 = vmatmul.mubr.bf16.gmra.mrb[0].mxu0 %v136
    %v242 = vpop.f32.mrb[0].mxu0
    %v243 = vadd.f32 %v158, %v242
    %v244 = vpop.f32.mrb[0].mxu0
    %v245 = vpop.f32.mrb[0].mxu0
    %v246 = vpop.f32.mrb[0].mxu0
    %247 = vdwg.mxu0
    %248 = vst [vmem:[#allocation2] sm:$0x3] %v243
    // Predicated region
    $region22: #{bert_classifier_forward.7} parent=1 // pred_check
      _
    $region23: #{bert_classifier_forward.7} parent=1 // pred_check_branch
      %250 = sbr.rel (0) target = $region25
    $region24: #{bert_classifier_forward.7} parent=1 // pred_region
      %s252 = ssub.s32 32, 32
      %253 = vsyncadd [#allocation3], %s252
      %s255 = sshll.u32 [#allocation2], 4
      %s256 = int_to_ptr.vmem [resolvable:$true] %s255
      %258 = dma.vmem_to_hbm [thread:$0]  %s256, 32, %s5, [#allocation3]
    $region25: #{bert_classifier_forward.7} parent=1 // pred_fallthru
      _
    // Predicated region
    $region26: #{bert_classifier_forward.7} parent=1 // pred_check
      _
    $region27: #{bert_classifier_forward.7} parent=1 // pred_check_branch
      %260 = sbr.rel (0) target = $region29
    $region28: #{bert_classifier_forward.7} parent=1 // pred_region
      %261 = dma.done [#allocation3], 32
    $region29: #{bert_classifier_forward.7} parent=1 // pred_fallthru
      _
    %262 = vsyncpa [#allocation3], 1

// kernel: bert_classifier_forward.5
$region0: #{bert_classifier_forward.5}
  #allocation0 [shape = 'u32[]', space=smem, size = 0x4, offset = 0x4, fixed_abs, tag = 'smem constant byte address 0x4 - core index']
  #allocation1 [shape = 'u32[144,128]{1,0:T(1,128)}', space=vmem, size = 0x12000, scoped, tag = 'internal scratch']
  %s0 = inlined_call_operand.vmem [shape: f32[2,8,128], index: 0, kind: input, shape index: {}]
  %s1 = inlined_call_operand.vmem [shape: f32[2,1,8], index: 1, kind: input, shape index: {}]
  %s2 = inlined_call_operand.vmem [shape: bf16[128,384], index: 2, kind: input, shape index: {}]
  %s3 = inlined_call_operand.vmem [shape: f32[1,384], index: 3, kind: input, shape index: {}]
  %s4 = inlined_call_operand.hbm [shape: bf16[128,128], index: 4, kind: input, shape index: {}]
  %s5 = inlined_call_operand.vmem [shape: f32[1,128], index: 5, kind: input, shape index: {}]
  %s6 = inlined_call_operand.hbm [shape: f32[1,128], index: 6, kind: input, shape index: {}]
  %s7 = inlined_call_operand.hbm [shape: f32[1,128], index: 7, kind: input, shape index: {}]
  %s8 = inlined_call_operand.vmem [shape: bf16[128,256], index: 8, kind: input, shape index: {}]
  %s9 = inlined_call_operand.vmem [shape: f32[1,256], index: 9, kind: input, shape index: {}]
  %s10 = inlined_call_operand.hbm [shape: bf16[256,128], index: 10, kind: input, shape index: {}]
  %s11 = inlined_call_operand.hbm [shape: f32[1,128], index: 11, kind: input, shape index: {}]
  %s12 = inlined_call_operand.hbm [shape: f32[1,128], index: 12, kind: input, shape index: {}]
  %s13 = inlined_call_operand.hbm [shape: f32[1,128], index: 13, kind: input, shape index: {}]
  %s14 = inlined_call_operand.vmem [shape: f32[2,8,128], index: 14, kind: output, shape index: {}]
  %s15 = sld [smem:[#allocation0]]
  $region117: #{bert_classifier_forward.5} parent=0
    _
  %s17 = ssub.s32 1, %s15
  %s18 = scalar_select 0, %s17, %s15
  $region1: #{bert_classifier_forward.5} parent=0
    #allocation2 [shape = 'u8[32768]{0}', space=vmem, size = 0x8000, scoped, tag = 'input window, operand 4, single buffered']
    #allocation3 [shape = 's32[2]{0}', space=sflag, size = 0x8, scoped, tag = 'scoped memory for bert_classifier_forward.5']
    #allocation4 [shape = 'u8[512]{0}', space=vmem, size = 0x400, scoped, tag = 'input window, operand 6, single buffered']
    #allocation5 [shape = 's32[1]{0}', space=sflag, size = 0x4, scoped, tag = 'scoped memory for bert_classifier_forward.5']
    #allocation6 [shape = 'u8[512]{0}', space=vmem, size = 0x400, scoped, tag = 'input window, operand 7, single buffered']
    #allocation7 [shape = 'u8[65536]{0}', space=vmem, size = 0x10000, scoped, tag = 'input window, operand 10, single buffered']
    #allocation8 [shape = 's32[1]{0}', space=sflag, size = 0x4, scoped, tag = 'scoped memory for bert_classifier_forward.5']
    #allocation9 [shape = 'u8[512]{0}', space=vmem, size = 0x400, scoped, tag = 'input window, operand 11, single buffered']
    #allocation10 [shape = 'u8[512]{0}', space=vmem, size = 0x400, scoped, tag = 'input window, operand 12, single buffered']
    #allocation11 [shape = 's32[1]{0}', space=sflag, size = 0x4, scoped, tag = 'scoped memory for bert_classifier_forward.5']
    #allocation12 [shape = 'u8[512]{0}', space=vmem, size = 0x400, scoped, tag = 'input window, operand 13, single buffered']
    %19 = vsyncpa [#allocation3], 0
    %20 = vsyncpa [#allocation5], 0
    %21 = vsyncpa [#allocation8], 0
    %22 = vsyncpa [#allocation11], 0
    loop: start=0, step=1, limit=4
    $region2: #{bert_classifier_forward.5} parent=1 // loop_pre_header
      _
    $region3: #{bert_classifier_forward.5} parent=1 // loop_header
      %s24 = sphi 0, %s28
      %p25 = scmp.ge.s32.totalorder %s24, 4
      %s34 = sphi 0, %s36
      %s37 = sphi 0, %s34
      %s38 = sphi 0, %s37
      %s54 = sphi 0, %s38
      %s60 = sphi 0, %s62
      %s63 = sphi 0, %s60
      %s64 = sphi 0, %s63
      %s80 = sphi 0, %s64
      %s84 = sphi 0, %s84
      %s86 = sphi 0, %s84
      %s87 = sphi 0, %s86
      %s101 = sphi 0, %s87
      %s105 = sphi 0, %s105
      %s107 = sphi 0, %s105
      %s108 = sphi 0, %s107
      %s122 = sphi 0, %s108
      %s126 = sphi 0, %s126
      %s128 = sphi 0, %s126
      %s129 = sphi 0, %s128
      %s143 = sphi 0, %s129
      %s147 = sphi 0, %s147
      %s149 = sphi 0, %s147
      %s150 = sphi 0, %s149
      %s164 = sphi 0, %s150
      %s168 = sphi 0, %s168
      %s170 = sphi 0, %s168
      %s171 = sphi 0, %s170
      %s185 = sphi 0, %s171
      %s189 = sphi 0, %s189
      %s191 = sphi 0, %s189
      %s192 = sphi 0, %s191
      %s206 = sphi 0, %s192
      %s210 = sphi 0, %s210
      %s212 = sphi 0, %s210
      %s213 = sphi 0, %s212
      %s227 = sphi 0, %s213
      %s231 = sphi 0, %s231
      %s233 = sphi 0, %s231
      %s234 = sphi 0, %s233
      %s248 = sphi 0, %s234
      %s252 = sphi 0, %s252
      %s254 = sphi 0, %s252
      %s255 = sphi 0, %s254
      %s269 = sphi 0, %s255
      %s273 = sphi 0, %s273
      %s275 = sphi 0, %s273
      %s276 = sphi 0, %s275
      %s290 = sphi 0, %s276
      %s294 = sphi 0, %s294
      %s296 = sphi 0, %s294
      %s297 = sphi 0, %s296
      %s311 = sphi 0, %s297
      %s315 = sphi 0, %s315
      %s317 = sphi 0, %s315
      %s318 = sphi 0, %s317
      %s332 = sphi 0, %s318
      %s338 = sphi 0, %s340
      %s341 = sphi 0, %s338
      %s342 = sphi 0, %s341
      %s358 = sphi 0, %s342
    $region4: #{bert_classifier_forward.5} parent=1 // loop_header_branch
      %27 = sbr.rel (%p25) target = $region8
    $region5: #{bert_classifier_forward.5} parent=1 // loop_body
      %s29 = ssub.s32 %s24, 1
      %s30 = ssub.s32 %s24, 2
      %s31 = sadd.s32 %s24, 1
      %s32 = ssub.s32 %s24, %s31
      %p33 = scmp.eq.s32.totalorder %s32, 0
      %s35 = sadd.s32 %s34, 1
      %s36 = scalar_select %p33, %s34, %s35
      %p39 = pneg %p33
      %p40 = scmp.eq.s32.totalorder %s24, 1
      %p41 = por %p39, %p40
      %p42 = scmp.ne.s32.totalorder %s34, %s37
      %p43 = scmp.eq.s32.totalorder %s24, 0
      %p44 = por %p42, %p43
      %p45 = scmp.ne.s32.totalorder %s34, %s37
      %p46 = scmp.eq.s32.totalorder %s29, 1
      %p47 = por %p45, %p46
      %p48 = scmp.ne.s32.totalorder %s37, %s38
      %p49 = scmp.eq.s32.totalorder %s29, 0
      %p50 = por %p48, %p49
      %p51 = scmp.ne.s32.totalorder %s37, %s38
      %p52 = scmp.eq.s32.totalorder %s30, 1
      %p53 = por %p51, %p52
      %p55 = scmp.ne.s32.totalorder %s38, %s54
      %p56 = scmp.eq.s32.totalorder %s30, 0
      %p57 = por %p55, %p56
      %s58 = ssub.s32 %s24, %s31
      %p59 = scmp.eq.s32.totalorder %s58, 0
      %s61 = sadd.s32 %s60, 1
      %s62 = scalar_select %p59, %s60, %s61
      %p65 = pneg %p59
      %p66 = scmp.eq.s32.totalorder %s24, 1
      %p67 = por %p65, %p66
      %p68 = scmp.ne.s32.totalorder %s60, %s63
      %p69 = scmp.eq.s32.totalorder %s24, 0
      %p70 = por %p68, %p69
      %p71 = scmp.ne.s32.totalorder %s60, %s63
      %p72 = scmp.eq.s32.totalorder %s29, 1
      %p73 = por %p71, %p72
      %p74 = scmp.ne.s32.totalorder %s63, %s64
      %p75 = scmp.eq.s32.totalorder %s29, 0
      %p76 = por %p74, %p75
      %p77 = scmp.ne.s32.totalorder %s63, %s64
      %p78 = scmp.eq.s32.totalorder %s30, 1
      %p79 = por %p77, %p78
      %p81 = scmp.ne.s32.totalorder %s64, %s80
      %p82 = scmp.eq.s32.totalorder %s30, 0
      %p83 = por %p81, %p82
      %s85 = sadd.s32 %s84, 1
      %p88 = scmp.eq.s32.totalorder %s24, 1
      %p89 = scmp.ne.s32.totalorder %s84, %s86
      %p90 = scmp.eq.s32.totalorder %s24, 0
      %p91 = por %p89, %p90
      %p92 = scmp.ne.s32.totalorder %s84, %s86
      %p93 = scmp.eq.s32.totalorder %s29, 1
      %p94 = por %p92, %p93
      %p95 = scmp.ne.s32.totalorder %s86, %s87
      %p96 = scmp.eq.s32.totalorder %s29, 0
      %p97 = por %p95, %p96
      %p98 = scmp.ne.s32.totalorder %s86, %s87
      %p99 = scmp.eq.s32.totalorder %s30, 1
      %p100 = por %p98, %p99
      %p102 = scmp.ne.s32.totalorder %s87, %s101
      %p103 = scmp.eq.s32.totalorder %s30, 0
      %p104 = por %p102, %p103
      %s106 = sadd.s32 %s105, 1
      %p109 = scmp.eq.s32.totalorder %s24, 1
      %p110 = scmp.ne.s32.totalorder %s105, %s107
      %p111 = scmp.eq.s32.totalorder %s24, 0
      %p112 = por %p110, %p111
      %p113 = scmp.ne.s32.totalorder %s105, %s107
      %p114 = scmp.eq.s32.totalorder %s29, 1
      %p115 = por %p113, %p114
      %p116 = scmp.ne.s32.totalorder %s107, %s108
      %p117 = scmp.eq.s32.totalorder %s29, 0
      %p118 = por %p116, %p117
      %p119 = scmp.ne.s32.totalorder %s107, %s108
      %p120 = scmp.eq.s32.totalorder %s30, 1
      %p121 = por %p119, %p120
      %p123 = scmp.ne.s32.totalorder %s108, %s122
      %p124 = scmp.eq.s32.totalorder %s30, 0
      %p125 = por %p123, %p124
      %s127 = sadd.s32 %s126, 1
      %p130 = scmp.eq.s32.totalorder %s24, 1
      %p131 = scmp.ne.s32.totalorder %s126, %s128
      %p132 = scmp.eq.s32.totalorder %s24, 0
      %p133 = por %p131, %p132
      %p134 = scmp.ne.s32.totalorder %s126, %s128
      %p135 = scmp.eq.s32.totalorder %s29, 1
      %p136 = por %p134, %p135
      %p137 = scmp.ne.s32.totalorder %s128, %s129
      %p138 = scmp.eq.s32.totalorder %s29, 0
      %p139 = por %p137, %p138
      %p140 = scmp.ne.s32.totalorder %s128, %s129
      %p141 = scmp.eq.s32.totalorder %s30, 1
      %p142 = por %p140, %p141
      %p144 = scmp.ne.s32.totalorder %s129, %s143
      %p145 = scmp.eq.s32.totalorder %s30, 0
      %p146 = por %p144, %p145
      %s148 = sadd.s32 %s147, 1
      %p151 = scmp.eq.s32.totalorder %s24, 1
      %p152 = scmp.ne.s32.totalorder %s147, %s149
      %p153 = scmp.eq.s32.totalorder %s24, 0
      %p154 = por %p152, %p153
      %p155 = scmp.ne.s32.totalorder %s147, %s149
      %p156 = scmp.eq.s32.totalorder %s29, 1
      %p157 = por %p155, %p156
      %p158 = scmp.ne.s32.totalorder %s149, %s150
      %p159 = scmp.eq.s32.totalorder %s29, 0
      %p160 = por %p158, %p159
      %p161 = scmp.ne.s32.totalorder %s149, %s150
      %p162 = scmp.eq.s32.totalorder %s30, 1
      %p163 = por %p161, %p162
      %p165 = scmp.ne.s32.totalorder %s150, %s164
      %p166 = scmp.eq.s32.totalorder %s30, 0
      %p167 = por %p165, %p166
      %s169 = sadd.s32 %s168, 1
      %p172 = scmp.eq.s32.totalorder %s24, 1
      %p173 = scmp.ne.s32.totalorder %s168, %s170
      %p174 = scmp.eq.s32.totalorder %s24, 0
      %p175 = por %p173, %p174
      %p176 = scmp.ne.s32.totalorder %s168, %s170
      %p177 = scmp.eq.s32.totalorder %s29, 1
      %p178 = por %p176, %p177
      %p179 = scmp.ne.s32.totalorder %s170, %s171
      %p180 = scmp.eq.s32.totalorder %s29, 0
      %p181 = por %p179, %p180
      %p182 = scmp.ne.s32.totalorder %s170, %s171
      %p183 = scmp.eq.s32.totalorder %s30, 1
      %p184 = por %p182, %p183
      %p186 = scmp.ne.s32.totalorder %s171, %s185
      %p187 = scmp.eq.s32.totalorder %s30, 0
      %p188 = por %p186, %p187
      %s190 = sadd.s32 %s189, 1
      %p193 = scmp.eq.s32.totalorder %s24, 1
      %p194 = scmp.ne.s32.totalorder %s189, %s191
      %p195 = scmp.eq.s32.totalorder %s24, 0
      %p196 = por %p194, %p195
      %p197 = scmp.ne.s32.totalorder %s189, %s191
      %p198 = scmp.eq.s32.totalorder %s29, 1
      %p199 = por %p197, %p198
      %p200 = scmp.ne.s32.totalorder %s191, %s192
      %p201 = scmp.eq.s32.totalorder %s29, 0
      %p202 = por %p200, %p201
      %p203 = scmp.ne.s32.totalorder %s191, %s192
      %p204 = scmp.eq.s32.totalorder %s30, 1
      %p205 = por %p203, %p204
      %p207 = scmp.ne.s32.totalorder %s192, %s206
      %p208 = scmp.eq.s32.totalorder %s30, 0
      %p209 = por %p207, %p208
      %s211 = sadd.s32 %s210, 1
      %p214 = scmp.eq.s32.totalorder %s24, 1
      %p215 = scmp.ne.s32.totalorder %s210, %s212
      %p216 = scmp.eq.s32.totalorder %s24, 0
      %p217 = por %p215, %p216
      %p218 = scmp.ne.s32.totalorder %s210, %s212
      %p219 = scmp.eq.s32.totalorder %s29, 1
      %p220 = por %p218, %p219
      %p221 = scmp.ne.s32.totalorder %s212, %s213
      %p222 = scmp.eq.s32.totalorder %s29, 0
      %p223 = por %p221, %p222
      %p224 = scmp.ne.s32.totalorder %s212, %s213
      %p225 = scmp.eq.s32.totalorder %s30, 1
      %p226 = por %p224, %p225
      %p228 = scmp.ne.s32.totalorder %s213, %s227
      %p229 = scmp.eq.s32.totalorder %s30, 0
      %p230 = por %p228, %p229
      %s232 = sadd.s32 %s231, 1
      %p235 = scmp.eq.s32.totalorder %s24, 1
      %p236 = scmp.ne.s32.totalorder %s231, %s233
      %p237 = scmp.eq.s32.totalorder %s24, 0
      %p238 = por %p236, %p237
      %p239 = scmp.ne.s32.totalorder %s231, %s233
      %p240 = scmp.eq.s32.totalorder %s29, 1
      %p241 = por %p239, %p240
      %p242 = scmp.ne.s32.totalorder %s233, %s234
      %p243 = scmp.eq.s32.totalorder %s29, 0
      %p244 = por %p242, %p243
      %p245 = scmp.ne.s32.totalorder %s233, %s234
      %p246 = scmp.eq.s32.totalorder %s30, 1
      %p247 = por %p245, %p246
      %p249 = scmp.ne.s32.totalorder %s234, %s248
      %p250 = scmp.eq.s32.totalorder %s30, 0
      %p251 = por %p249, %p250
      %s253 = sadd.s32 %s252, 1
      %p256 = scmp.eq.s32.totalorder %s24, 1
      %p257 = scmp.ne.s32.totalorder %s252, %s254
      %p258 = scmp.eq.s32.totalorder %s24, 0
      %p259 = por %p257, %p258
      %p260 = scmp.ne.s32.totalorder %s252, %s254
      %p261 = scmp.eq.s32.totalorder %s29, 1
      %p262 = por %p260, %p261
      %p263 = scmp.ne.s32.totalorder %s254, %s255
      %p264 = scmp.eq.s32.totalorder %s29, 0
      %p265 = por %p263, %p264
      %p266 = scmp.ne.s32.totalorder %s254, %s255
      %p267 = scmp.eq.s32.totalorder %s30, 1
      %p268 = por %p266, %p267
      %p270 = scmp.ne.s32.totalorder %s255, %s269
      %p271 = scmp.eq.s32.totalorder %s30, 0
      %p272 = por %p270, %p271
      %s274 = sadd.s32 %s273, 1
      %p277 = scmp.eq.s32.totalorder %s24, 1
      %p278 = scmp.ne.s32.totalorder %s273, %s275
      %p279 = scmp.eq.s32.totalorder %s24, 0
      %p280 = por %p278, %p279
      %p281 = scmp.ne.s32.totalorder %s273, %s275
      %p282 = scmp.eq.s32.totalorder %s29, 1
      %p283 = por %p281, %p282
      %p284 = scmp.ne.s32.totalorder %s275, %s276
      %p285 = scmp.eq.s32.totalorder %s29, 0
      %p286 = por %p284, %p285
      %p287 = scmp.ne.s32.totalorder %s275, %s276
      %p288 = scmp.eq.s32.totalorder %s30, 1
      %p289 = por %p287, %p288
      %p291 = scmp.ne.s32.totalorder %s276, %s290
      %p292 = scmp.eq.s32.totalorder %s30, 0
      %p293 = por %p291, %p292
      %s295 = sadd.s32 %s294, 1
      %p298 = scmp.eq.s32.totalorder %s24, 1
      %p299 = scmp.ne.s32.totalorder %s294, %s296
      %p300 = scmp.eq.s32.totalorder %s24, 0
      %p301 = por %p299, %p300
      %p302 = scmp.ne.s32.totalorder %s294, %s296
      %p303 = scmp.eq.s32.totalorder %s29, 1
      %p304 = por %p302, %p303
      %p305 = scmp.ne.s32.totalorder %s296, %s297
      %p306 = scmp.eq.s32.totalorder %s29, 0
      %p307 = por %p305, %p306
      %p308 = scmp.ne.s32.totalorder %s296, %s297
      %p309 = scmp.eq.s32.totalorder %s30, 1
      %p310 = por %p308, %p309
      %p312 = scmp.ne.s32.totalorder %s297, %s311
      %p313 = scmp.eq.s32.totalorder %s30, 0
      %p314 = por %p312, %p313
      %s316 = sadd.s32 %s315, 1
      %p319 = scmp.eq.s32.totalorder %s24, 1
      %p320 = scmp.ne.s32.totalorder %s315, %s317
      %p321 = scmp.eq.s32.totalorder %s24, 0
      %p322 = por %p320, %p321
      %p323 = scmp.ne.s32.totalorder %s315, %s317
      %p324 = scmp.eq.s32.totalorder %s29, 1
      %p325 = por %p323, %p324
      %p326 = scmp.ne.s32.totalorder %s317, %s318
      %p327 = scmp.eq.s32.totalorder %s29, 0
      %p328 = por %p326, %p327
      %p329 = scmp.ne.s32.totalorder %s317, %s318
      %p330 = scmp.eq.s32.totalorder %s30, 1
      %p331 = por %p329, %p330
      %p333 = scmp.ne.s32.totalorder %s318, %s332
      %p334 = scmp.eq.s32.totalorder %s30, 0
      %p335 = por %p333, %p334
      %s336 = ssub.s32 %s24, %s31
      %p337 = scmp.eq.s32.totalorder %s336, 0
      %s339 = sadd.s32 %s338, 1
      %s340 = scalar_select %p337, %s338, %s339
      %p343 = pneg %p337
      %p344 = scmp.eq.s32.totalorder %s24, 1
      %p345 = por %p343, %p344
      %p346 = scmp.ne.s32.totalorder %s338, %s341
      %p347 = scmp.eq.s32.totalorder %s24, 0
      %p348 = por %p346, %p347
      %p349 = scmp.ne.s32.totalorder %s338, %s341
      %p350 = scmp.eq.s32.totalorder %s29, 1
      %p351 = por %p349, %p350
      %p352 = scmp.ne.s32.totalorder %s341, %s342
      %p353 = scmp.eq.s32.totalorder %s29, 0
      %p354 = por %p352, %p353
      %p355 = scmp.ne.s32.totalorder %s341, %s342
      %p356 = scmp.eq.s32.totalorder %s30, 1
      %p357 = por %p355, %p356
      %p359 = scmp.ne.s32.totalorder %s342, %s358
      %p360 = scmp.eq.s32.totalorder %s30, 0
      %p361 = por %p359, %p360
      %p362 = scmp.le.s32.totalorder 1, %s24
      %p363 = scmp.lt.s32.totalorder %s24, 3
      %p364 = pnand %p362, %p363
      %p365 = pneg %p364
      // Predicated region
      $region9: #{bert_classifier_forward.5} parent=5 // pred_check
        _
      $region10: #{bert_classifier_forward.5} parent=5 // pred_check_branch
        %367 = sbr.rel (%p364) target = $region12
      $region11: #{bert_classifier_forward.5} parent=5 // pred_region
        %s368 = ssub.s32 %s24, 1
        // Predicated region
        $region13: #{bert_classifier_forward.5} parent=11 // pred_check
          %p369 = pneg %p97
        $region14: #{bert_classifier_forward.5} parent=11 // pred_check_branch
          %371 = sbr.rel (%p369) target = $region16
        $region15: #{bert_classifier_forward.5} parent=11 // pred_region
          _
        $region16: #{bert_classifier_forward.5} parent=11 // pred_fallthru
          _
        // Predicated region
        $region17: #{bert_classifier_forward.5} parent=11 // pred_check
          %p372 = pneg %p118
        $region18: #{bert_classifier_forward.5} parent=11 // pred_check_branch
          %374 = sbr.rel (%p372) target = $region20
        $region19: #{bert_classifier_forward.5} parent=11 // pred_region
          _
        $region20: #{bert_classifier_forward.5} parent=11 // pred_fallthru
          _
        // Predicated region
        $region21: #{bert_classifier_forward.5} parent=11 // pred_check
          %p375 = pneg %p139
        $region22: #{bert_classifier_forward.5} parent=11 // pred_check_branch
          %377 = sbr.rel (%p375) target = $region24
        $region23: #{bert_classifier_forward.5} parent=11 // pred_region
          %s379 = ssub.s32 1024, 1024
          %380 = vsyncadd [#allocation3], %s379
          %s381 = sshll.u32 [#allocation2], 4
          %s382 = int_to_ptr.vmem [resolvable:$true] %s381
          %387 = dma.hbm_to_vmem [thread:$0]  %s4, 1024, %s382, [#allocation3], 64, 64, 4
        $region24: #{bert_classifier_forward.5} parent=11 // pred_fallthru
          _
        // Predicated region
        $region25: #{bert_classifier_forward.5} parent=11 // pred_check
          %p388 = pneg %p160
        $region26: #{bert_classifier_forward.5} parent=11 // pred_check_branch
          %390 = sbr.rel (%p388) target = $region28
        $region27: #{bert_classifier_forward.5} parent=11 // pred_region
          _
        $region28: #{bert_classifier_forward.5} parent=11 // pred_fallthru
          _
        // Predicated region
        $region29: #{bert_classifier_forward.5} parent=11 // pred_check
          %p391 = pneg %p181
        $region30: #{bert_classifier_forward.5} parent=11 // pred_check_branch
          %393 = sbr.rel (%p391) target = $region32
        $region31: #{bert_classifier_forward.5} parent=11 // pred_region
          %s395 = ssub.s32 16, 16
          %396 = vsyncadd [#allocation5], %s395
          %s398 = sshll.u32 [#allocation4], 4
          %s399 = int_to_ptr.vmem [resolvable:$true] %s398
          %401 = dma.hbm_to_vmem [thread:$0]  %s6, 16, %s399, [#allocation5]
        $region32: #{bert_classifier_forward.5} parent=11 // pred_fallthru
          _
        // Predicated region
        $region33: #{bert_classifier_forward.5} parent=11 // pred_check
          %p402 = pneg %p202
        $region34: #{bert_classifier_forward.5} parent=11 // pred_check_branch
          %404 = sbr.rel (%p402) target = $region36
        $region35: #{bert_classifier_forward.5} parent=11 // pred_region
          %s406 = ssub.s32 16, 16
          %407 = vsyncadd [#allocation5], %s406
          %s409 = sshll.u32 [#allocation6], 4
          %s410 = int_to_ptr.vmem [resolvable:$true] %s409
          %412 = dma.hbm_to_vmem [thread:$0]  %s7, 16, %s410, [#allocation5]
        $region36: #{bert_classifier_forward.5} parent=11 // pred_fallthru
          _
        // Predicated region
        $region37: #{bert_classifier_forward.5} parent=11 // pred_check
          %p413 = pneg %p223
        $region38: #{bert_classifier_forward.5} parent=11 // pred_check_branch
          %415 = sbr.rel (%p413) target = $region40
        $region39: #{bert_classifier_forward.5} parent=11 // pred_region
          _
        $region40: #{bert_classifier_forward.5} parent=11 // pred_fallthru
          _
        // Predicated region
        $region41: #{bert_classifier_forward.5} parent=11 // pred_check
          %p416 = pneg %p244
        $region42: #{bert_classifier_forward.5} parent=11 // pred_check_branch
          %418 = sbr.rel (%p416) target = $region44
        $region43: #{bert_classifier_forward.5} parent=11 // pred_region
          _
        $region44: #{bert_classifier_forward.5} parent=11 // pred_fallthru
          _
        // Predicated region
        $region45: #{bert_classifier_forward.5} parent=11 // pred_check
          %p419 = pneg %p265
        $region46: #{bert_classifier_forward.5} parent=11 // pred_check_branch
          %421 = sbr.rel (%p419) target = $region48
        $region47: #{bert_classifier_forward.5} parent=11 // pred_region
          %s423 = ssub.s32 2048, 2048
          %424 = vsyncadd [#allocation8], %s423
          %s425 = sshll.u32 [#allocation7], 4
          %s426 = int_to_ptr.vmem [resolvable:$true] %s425
          %431 = dma.hbm_to_vmem [thread:$0]  %s10, 2048, %s426, [#allocation8], 64, 64, 4
        $region48: #{bert_classifier_forward.5} parent=11 // pred_fallthru
          _
        // Predicated region
        $region49: #{bert_classifier_forward.5} parent=11 // pred_check
          %p432 = pneg %p286
        $region50: #{bert_classifier_forward.5} parent=11 // pred_check_branch
          %434 = sbr.rel (%p432) target = $region52
        $region51: #{bert_classifier_forward.5} parent=11 // pred_region
          %s436 = ssub.s32 16, 16
          %437 = vsyncadd [#allocation8], %s436
          %s439 = sshll.u32 [#allocation9], 4
          %s440 = int_to_ptr.vmem [resolvable:$true] %s439
          %442 = dma.hbm_to_vmem [thread:$0]  %s11, 16, %s440, [#allocation8]
        $region52: #{bert_classifier_forward.5} parent=11 // pred_fallthru
          _
        // Predicated region
        $region53: #{bert_classifier_forward.5} parent=11 // pred_check
          %p443 = pneg %p307
        $region54: #{bert_classifier_forward.5} parent=11 // pred_check_branch
          %445 = sbr.rel (%p443) target = $region56
        $region55: #{bert_classifier_forward.5} parent=11 // pred_region
          %s447 = ssub.s32 16, 16
          %448 = vsyncadd [#allocation11], %s447
          %s450 = sshll.u32 [#allocation10], 4
          %s451 = int_to_ptr.vmem [resolvable:$true] %s450
          %453 = dma.hbm_to_vmem [thread:$0]  %s12, 16, %s451, [#allocation11]
        $region56: #{bert_classifier_forward.5} parent=11 // pred_fallthru
          _
        // Predicated region
        $region57: #{bert_classifier_forward.5} parent=11 // pred_check
          %p454 = pneg %p328
        $region58: #{bert_classifier_forward.5} parent=11 // pred_check_branch
          %456 = sbr.rel (%p454) target = $region60
        $region59: #{bert_classifier_forward.5} parent=11 // pred_region
          %s458 = ssub.s32 16, 16
          %459 = vsyncadd [#allocation11], %s458
          %s461 = sshll.u32 [#allocation12], 4
          %s462 = int_to_ptr.vmem [resolvable:$true] %s461
          %464 = dma.hbm_to_vmem [thread:$0]  %s13, 16, %s462, [#allocation11]
        $region60: #{bert_classifier_forward.5} parent=11 // pred_fallthru
          _
      $region12: #{bert_classifier_forward.5} parent=5 // pred_fallthru
        _
      %p465 = scmp.lt.s32.totalorder %s24, 2
      // Predicated region
      $region61: #{bert_classifier_forward.5} parent=5 // pred_check
        %p466 = pneg %p465
      $region62: #{bert_classifier_forward.5} parent=5 // pred_check_branch
        %468 = sbr.rel (%p466) target = $region64
      $region63: #{bert_classifier_forward.5} parent=5 // pred_region
        // Predicated region
        $region65: #{bert_classifier_forward.5} parent=63 // pred_check
          %p469 = pneg %p44
        $region66: #{bert_classifier_forward.5} parent=63 // pred_check_branch
          %471 = sbr.rel (%p469) target = $region68
        $region67: #{bert_classifier_forward.5} parent=63 // pred_region
          %p472 = scmp.lt.s32.totalorder %s24, 1
          %s473 = scalar_select %p472, %s24, 1
          %s474 = smul.addr %s473, 8
          %s475 = scalar_lea.vmem %s0, %s474
        $region68: #{bert_classifier_forward.5} parent=63 // pred_fallthru
          _
        // Predicated region
        $region69: #{bert_classifier_forward.5} parent=63 // pred_check
          %p476 = pneg %p70
        $region70: #{bert_classifier_forward.5} parent=63 // pred_check_branch
          %478 = sbr.rel (%p476) target = $region72
        $region71: #{bert_classifier_forward.5} parent=63 // pred_region
          %p479 = scmp.lt.s32.totalorder %s24, 1
          %s480 = scalar_select %p479, %s24, 1
          %s481 = scalar_lea.vmem %s1, %s480
        $region72: #{bert_classifier_forward.5} parent=63 // pred_fallthru
          _
      $region64: #{bert_classifier_forward.5} parent=5 // pred_fallthru
        _
      %p482 = scmp.le.s32.totalorder 1, %s24
      %p483 = scmp.lt.s32.totalorder %s24, 3
      %p484 = pnand %p482, %p483
      %p485 = pneg %p484
      // Predicated region
      $region73: #{bert_classifier_forward.5} parent=5 // pred_check
        _
      $region74: #{bert_classifier_forward.5} parent=5 // pred_check_branch
        %487 = sbr.rel (%p484) target = $region76
      $region75: #{bert_classifier_forward.5} parent=5 // pred_region
        %s488 = ssub.s32 %s24, 1
        // Predicated region
        $region77: #{bert_classifier_forward.5} parent=75 // pred_check
          %p489 = pneg %p139
        $region78: #{bert_classifier_forward.5} parent=75 // pred_check_branch
          %491 = sbr.rel (%p489) target = $region80
        $region79: #{bert_classifier_forward.5} parent=75 // pred_region
          %492 = dma.done [#allocation3], 1024
        $region80: #{bert_classifier_forward.5} parent=75 // pred_fallthru
          _
        // Predicated region
        $region81: #{bert_classifier_forward.5} parent=75 // pred_check
          %p493 = pneg %p181
        $region82: #{bert_classifier_forward.5} parent=75 // pred_check_branch
          %495 = sbr.rel (%p493) target = $region84
        $region83: #{bert_classifier_forward.5} parent=75 // pred_region
          %496 = dma.done [#allocation5], 16
        $region84: #{bert_classifier_forward.5} parent=75 // pred_fallthru
          _
        // Predicated region
        $region85: #{bert_classifier_forward.5} parent=75 // pred_check
          %p497 = pneg %p202
        $region86: #{bert_classifier_forward.5} parent=75 // pred_check_branch
          %499 = sbr.rel (%p497) target = $region88
        $region87: #{bert_classifier_forward.5} parent=75 // pred_region
          %500 = dma.done [#allocation5], 16
        $region88: #{bert_classifier_forward.5} parent=75 // pred_fallthru
          _
        // Predicated region
        $region89: #{bert_classifier_forward.5} parent=75 // pred_check
          %p501 = pneg %p265
        $region90: #{bert_classifier_forward.5} parent=75 // pred_check_branch
          %503 = sbr.rel (%p501) target = $region92
        $region91: #{bert_classifier_forward.5} parent=75 // pred_region
          %504 = dma.done [#allocation8], 2048
        $region92: #{bert_classifier_forward.5} parent=75 // pred_fallthru
          _
        // Predicated region
        $region93: #{bert_classifier_forward.5} parent=75 // pred_check
          %p505 = pneg %p286
        $region94: #{bert_classifier_forward.5} parent=75 // pred_check_branch
          %507 = sbr.rel (%p505) target = $region96
        $region95: #{bert_classifier_forward.5} parent=75 // pred_region
          %508 = dma.done [#allocation8], 16
        $region96: #{bert_classifier_forward.5} parent=75 // pred_fallthru
          _
        // Predicated region
        $region97: #{bert_classifier_forward.5} parent=75 // pred_check
          %p509 = pneg %p307
        $region98: #{bert_classifier_forward.5} parent=75 // pred_check_branch
          %511 = sbr.rel (%p509) target = $region100
        $region99: #{bert_classifier_forward.5} parent=75 // pred_region
          %512 = dma.done [#allocation11], 16
        $region100: #{bert_classifier_forward.5} parent=75 // pred_fallthru
          _
        // Predicated region
        $region101: #{bert_classifier_forward.5} parent=75 // pred_check
          %p513 = pneg %p328
        $region102: #{bert_classifier_forward.5} parent=75 // pred_check_branch
          %515 = sbr.rel (%p513) target = $region104
        $region103: #{bert_classifier_forward.5} parent=75 // pred_region
          %516 = dma.done [#allocation11], 16
        $region104: #{bert_classifier_forward.5} parent=75 // pred_fallthru
          _
        %p517 = scmp.lt.s32.totalorder %s29, 1
        %s518 = scalar_select %p517, %s29, 1
        %s519 = smul.addr %s518, 8
        %s520 = scalar_lea.vmem %s0, %s519
        %p521 = pneg %p50
        %p522 = pneg %p47
        %p523 = scmp.lt.s32.totalorder %s29, 1
        %s524 = scalar_select %p523, %s29, 1
        %s525 = scalar_lea.vmem %s1, %s524
        %p526 = pneg %p76
        %p527 = pneg %p73
        %p528 = pneg %p97
        %p529 = pneg %p94
        %p530 = pneg %p118
        %p531 = pneg %p115
        %p532 = pneg %p139
        %p533 = pneg %p136
        %p534 = pneg %p160
        %p535 = pneg %p157
        %p536 = pneg %p181
        %p537 = pneg %p178
        %p538 = pneg %p202
        %p539 = pneg %p199
        %p540 = pneg %p223
        %p541 = pneg %p220
        %p542 = pneg %p244
        %p543 = pneg %p241
        %p544 = pneg %p265
        %p545 = pneg %p262
        %p546 = pneg %p286
        %p547 = pneg %p283
        %p548 = pneg %p307
        %p549 = pneg %p304
        %p550 = pneg %p328
        %p551 = pneg %p325
        %p552 = pneg %p354
        %p553 = pneg %p351
        %p554 = scmp.lt.s32.totalorder %s29, 1
        %s555 = scalar_select %p554, %s29, 1
        %s556 = smul.addr %s555, 8
        %s557 = scalar_lea.vmem %s14, %s556
        %p558 = scmp.lt.s32.totalorder %s29, 1
        %s559 = scalar_select %p558, %s29, 1
        %s560 = smul.addr %s559, 8
        %s561 = scalar_lea.vmem %s0, %s560
        %p562 = scmp.lt.s32.totalorder %s29, 1
        %s563 = scalar_select %p562, %s29, 1
        %s564 = scalar_lea.vmem %s1, %s563
        %p565 = scmp.lt.s32.totalorder %s29, 1
        %s566 = scalar_select %p565, %s29, 1
        %s567 = smul.addr %s566, 8
        %s568 = scalar_lea.vmem %s14, %s567
        %v570 = vld [vmem:[%s561] sm:$0xff]
        %v571 = vld [vmem:[%s564] sm:$0x1]
        %v572 = vpack.c.bf16 %v570, %v570
        %v573 = vld [vmem:[%s2] sm:$0xff]
        %v574 = vld [vmem:[%s2 + $0x8] sm:$0xf]
        %v575 = vld [vmem:[%s2 + $0xc] sm:$0xff]
        %v576 = vld [vmem:[%s2 + $0x14] sm:$0xf]
        %v577 = vld [vmem:[%s2 + $0x18] sm:$0xff]
        %v578 = vld [vmem:[%s2 + $0x20] sm:$0xf]
        %v579 = vld [vmem:[%s2 + $0x24] sm:$0xff]
        %v580 = vld [vmem:[%s2 + $0x2c] sm:$0xf]
        %v581 = vld [vmem:[%s2 + $0x30] sm:$0xff]
        %v582 = vld [vmem:[%s2 + $0x38] sm:$0xf]
        %v583 = vld [vmem:[%s2 + $0x3c] sm:$0xff]
        %v584 = vld [vmem:[%s2 + $0x44] sm:$0xf]
        %v585 = vld [vmem:[%s2 + $0x48] sm:$0xff]
        %v586 = vld [vmem:[%s2 + $0x50] sm:$0xf]
        %v587 = vld [vmem:[%s2 + $0x54] sm:$0xff]
        %v588 = vld [vmem:[%s2 + $0x5c] sm:$0xf]
        %v589 = vld [vmem:[%s2 + $0x60] sm:$0xff]
        %v590 = vld [vmem:[%s2 + $0x68] sm:$0xf]
        %v591 = vld [vmem:[%s2 + $0x6c] sm:$0xff]
        %v592 = vld [vmem:[%s2 + $0x74] sm:$0xf]
        %v593 = vld [vmem:[%s2 + $0x78] sm:$0xff]
        %v594 = vld [vmem:[%s2 + $0x80] sm:$0xf]
        %v595 = vld [vmem:[%s2 + $0x84] sm:$0xff]
        %v596 = vld [vmem:[%s2 + $0x8c] sm:$0xf]
        %v597 = vld [vmem:[%s2 + $0x90] sm:$0xff]
        %v598 = vld [vmem:[%s2 + $0x98] sm:$0xf]
        %v599 = vld [vmem:[%s2 + $0x9c] sm:$0xff]
        %v600 = vld [vmem:[%s2 + $0xa4] sm:$0xf]
        %v601 = vld [vmem:[%s2 + $0xa8] sm:$0xff]
        %v602 = vld [vmem:[%s2 + $0xb0] sm:$0xf]
        %v603 = vld [vmem:[%s2 + $0xb4] sm:$0xff]
        %v604 = vld [vmem:[%s2 + $0xbc] sm:$0xf]
        %v605 = vld [vmem:[%s3] sm:$0x7]
        %v607 = vlaneseq
        %v608 = vshrl.u32 %v607, 7
        %v609 = vsub.s32 0, %v608
        %v610 = vrot.slane %v605, %v609
        %v611 = vlaneseq
        %v612 = vshrl.u32 %v611, 7
        %v613 = vsub.s32 1, %v612
        %v614 = vrot.slane %v605, %v613
        %v615 = vlaneseq
        %v616 = vshrl.u32 %v615, 7
        %v617 = vsub.s32 2, %v616
        %v618 = vrot.slane %v605, %v617
        %v654 = vunpack.c.l.b16 %v573
        %v655 = vunpack.c.h.b16 %v573
        %v656 = vunpack.c.l.b16 %v574
        %v657 = vunpack.c.l.b16 %v575
        %v658 = vunpack.c.h.b16 %v575
        %v659 = vunpack.c.l.b16 %v576
        %v660 = vunpack.c.l.b16 %v577
        %v661 = vunpack.c.h.b16 %v577
        %v662 = vunpack.c.l.b16 %v578
        %v663 = vunpack.c.l.b16 %v579
        %v664 = vunpack.c.h.b16 %v579
        %v665 = vunpack.c.l.b16 %v580
        %v666 = vunpack.c.l.b16 %v581
        %v667 = vunpack.c.h.b16 %v581
        %v668 = vunpack.c.l.b16 %v582
        %v669 = vunpack.c.l.b16 %v583
        %v670 = vunpack.c.h.b16 %v583
        %v671 = vunpack.c.l.b16 %v584
        %v672 = vunpack.c.l.b16 %v585
        %v673 = vunpack.c.h.b16 %v585
        %v674 = vunpack.c.l.b16 %v586
        %v675 = vunpack.c.l.b16 %v587
        %v676 = vunpack.c.h.b16 %v587
        %v677 = vunpack.c.l.b16 %v588
        %v678 = vunpack.c.l.b16 %v589
        %v679 = vunpack.c.h.b16 %v589
        %v680 = vunpack.c.l.b16 %v590
        %v681 = vunpack.c.l.b16 %v591
        %v682 = vunpack.c.h.b16 %v591
        %v683 = vunpack.c.l.b16 %v592
        %v684 = vunpack.c.l.b16 %v593
        %v685 = vunpack.c.h.b16 %v593
        %v686 = vunpack.c.l.b16 %v594
        %v687 = vunpack.c.l.b16 %v595
        %v688 = vunpack.c.h.b16 %v595
        %v689 = vunpack.c.l.b16 %v596
        %v690 = vunpack.c.l.b16 %v597
        %v691 = vunpack.c.h.b16 %v597
        %v692 = vunpack.c.l.b16 %v598
        %v693 = vunpack.c.l.b16 %v599
        %v694 = vunpack.c.h.b16 %v599
        %v695 = vunpack.c.l.b16 %v600
        %v696 = vunpack.c.l.b16 %v601
        %v697 = vunpack.c.h.b16 %v601
        %v698 = vunpack.c.l.b16 %v602
        %v699 = vunpack.c.l.b16 %v603
        %v700 = vunpack.c.h.b16 %v603
        %v701 = vunpack.c.l.b16 %v604
        %v702 = vpack.c.b16 %v657, %v654
        %v703 = vpack.c.b16 %v658, %v655
        %v704 = vpack.c.b16 %v659, %v656
        %v705 = vpack.c.b16 %v663, %v660
        %v706 = vpack.c.b16 %v664, %v661
        %v707 = vpack.c.b16 %v665, %v662
        %v708 = vpack.c.b16 %v669, %v666
        %v709 = vpack.c.b16 %v670, %v667
        %v710 = vpack.c.b16 %v671, %v668
        %v711 = vpack.c.b16 %v675, %v672
        %v712 = vpack.c.b16 %v676, %v673
        %v713 = vpack.c.b16 %v677, %v674
        %v714 = vpack.c.b16 %v681, %v678
        %v715 = vpack.c.b16 %v682, %v679
        %v716 = vpack.c.b16 %v683, %v680
        %v717 = vpack.c.b16 %v687, %v684
        %v718 = vpack.c.b16 %v688, %v685
        %v719 = vpack.c.b16 %v689, %v686
        %v720 = vpack.c.b16 %v693, %v690
        %v721 = vpack.c.b16 %v694, %v691
        %v722 = vpack.c.b16 %v695, %v692
        %v723 = vpack.c.b16 %v699, %v696
        %v724 = vpack.c.b16 %v700, %v697
        %v725 = vpack.c.b16 %v701, %v698
        %750 = vmatprep.subr.bf16.mxu0 %v703
        %751 = vmatpush1.bf16.msra.mxu0 %v702
        %752 = vmatprep.subr.bf16.mxu0 %v706
        %753 = vmatpush1.bf16.msra.mxu0 %v705
        %754 = vmatprep.subr.bf16.mxu0 %v709
        %755 = vmatpush1.bf16.msra.mxu0 %v708
        %756 = vmatprep.subr.bf16.mxu0 %v712
        %757 = vmatpush1.bf16.msra.mxu0 %v711
        %758 = vmatprep.subr.bf16.mxu0 %v715
        %759 = vmatpush1.bf16.msra.mxu0 %v714
        %760 = vmatprep.subr.bf16.mxu0 %v718
        %761 = vmatpush1.bf16.msra.mxu0 %v717
        %762 = vmatprep.subr.bf16.mxu0 %v721
        %763 = vmatpush1.bf16.msra.mxu0 %v720
        %764 = vmatprep.subr.bf16.mxu0 %v724
        %765 = vmatpush1.bf16.msra.mxu0 %v723
        %766 = vmatprep.subr.bf16.mxu0 0
        %767 = vmatpush1.bf16.msra.mxu0 0
        %768 = vmatprep.subr.bf16.mxu0 0
        %769 = vmatpush1.bf16.msra.mxu0 0
        %770 = vmatprep.subr.bf16.mxu0 0
        %771 = vmatpush1.bf16.msra.mxu0 0
        %772 = vmatprep.subr.bf16.mxu0 0
        %773 = vmatpush1.bf16.msra.mxu0 0
        %774 = vmatprep.subr.bf16.mxu0 0
        %775 = vmatpush1.bf16.msra.mxu0 0
        %776 = vmatprep.subr.bf16.mxu0 0
        %777 = vmatpush1.bf16.msra.mxu0 0
        %778 = vmatprep.subr.bf16.mxu0 0
        %779 = vmatpush1.bf16.msra.mxu0 0
        %780 = vmatprep.subr.bf16.mxu0 0
        %781 = vmatpush1.bf16.msra.mxu0 0
        %782 = vmatprep.mubr.bf16.mxu0 0
        %783 = vmatmul.mubr.bf16.gmra.mrb[0].mxu0 %v572
        %v784 = vpop.f32.mrb[0].mxu0
        %v785 = vadd.f32 %v610, %v784
        %v786 = vpop.f32.mrb[0].mxu0
        %v787 = vadd.f32 %v614, %v786
        %v788 = vpop.f32.mrb[0].mxu0
        %v789 = vpop.f32.mrb[0].mxu0
        %790 = vdwg.mxu0
        %791 = vmatprep.subr.bf16.mxu0 0
        %792 = vmatpush1.bf16.msra.mxu0 %v704
        %793 = vmatprep.subr.bf16.mxu0 0
        %794 = vmatpush1.bf16.msra.mxu0 %v707
        %795 = vmatprep.subr.bf16.mxu0 0
        %796 = vmatpush1.bf16.msra.mxu0 %v710
        %797 = vmatprep.subr.bf16.mxu0 0
        %798 = vmatpush1.bf16.msra.mxu0 %v713
        %799 = vmatprep.subr.bf16.mxu0 0
        %800 = vmatpush1.bf16.msra.mxu0 %v716
        %801 = vmatprep.subr.bf16.mxu0 0
        %802 = vmatpush1.bf16.msra.mxu0 %v719
        %803 = vmatprep.subr.bf16.mxu0 0
        %804 = vmatpush1.bf16.msra.mxu0 %v722
        %805 = vmatprep.subr.bf16.mxu0 0
        %806 = vmatpush1.bf16.msra.mxu0 %v725
        %807 = vmatprep.subr.bf16.mxu0 0
        %808 = vmatpush1.bf16.msra.mxu0 0
        %809 = vmatprep.subr.bf16.mxu0 0
        %810 = vmatpush1.bf16.msra.mxu0 0
        %811 = vmatprep.subr.bf16.mxu0 0
        %812 = vmatpush1.bf16.msra.mxu0 0
        %813 = vmatprep.subr.bf16.mxu0 0
        %814 = vmatpush1.bf16.msra.mxu0 0
        %815 = vmatprep.subr.bf16.mxu0 0
        %816 = vmatpush1.bf16.msra.mxu0 0
        %817 = vmatprep.subr.bf16.mxu0 0
        %818 = vmatpush1.bf16.msra.mxu0 0
        %819 = vmatprep.subr.bf16.mxu0 0
        %820 = vmatpush1.bf16.msra.mxu0 0
        %821 = vmatprep.subr.bf16.mxu0 0
        %822 = vmatpush1.bf16.msra.mxu0 0
        %823 = vmatprep.mubr.bf16.mxu0 0
        %824 = vmatmul.mubr.bf16.gmra.mrb[0].mxu0 %v572
        %v825 = vpop.f32.mrb[0].mxu0
        %v826 = vadd.f32 %v618, %v825
        %v827 = vpop.f32.mrb[0].mxu0
        %v828 = vpop.f32.mrb[0].mxu0
        %v829 = vpop.f32.mrb[0].mxu0
        %830 = vdwg.mxu0
        %v831 = vld [vmem:[#allocation2] sm:$0xf]
        %v832 = vld [vmem:[#allocation2 + $0x4] sm:$0xf]
        %v833 = vld [vmem:[#allocation2 + $0x8] sm:$0xf]
        %v834 = vld [vmem:[#allocation2 + $0xc] sm:$0xf]
        %v835 = vld [vmem:[#allocation2 + $0x10] sm:$0xf]
        %v836 = vld [vmem:[#allocation2 + $0x14] sm:$0xf]
        %v837 = vld [vmem:[#allocation2 + $0x18] sm:$0xf]
        %v838 = vld [vmem:[#allocation2 + $0x1c] sm:$0xf]
        %v839 = vld [vmem:[#allocation2 + $0x20] sm:$0xf]
        %v840 = vld [vmem:[#allocation2 + $0x24] sm:$0xf]
        %v841 = vld [vmem:[#allocation2 + $0x28] sm:$0xf]
        %v842 = vld [vmem:[#allocation2 + $0x2c] sm:$0xf]
        %v843 = vld [vmem:[#allocation2 + $0x30] sm:$0xf]
        %v844 = vld [vmem:[#allocation2 + $0x34] sm:$0xf]
        %v845 = vld [vmem:[#allocation2 + $0x38] sm:$0xf]
        %v846 = vld [vmem:[#allocation2 + $0x3c] sm:$0xf]
        %vm847 = vcmask 261120
        %v849 = vsel %vm847, %v785, 0
        %v852 = vsel %vm847, %v787, 0
        %854 = vmatprep.subr.mxu0 0.0
        %855 = vmatpush1.xpose.msra.mxu0 %v852
        %856 = vmatprep.subr.mxu0 0.0
        %857 = vmatpush1.xpose.msra.mxu0 0.0
        %858 = vmatprep.subr.mxu0 0.0
        %859 = vmatpush1.xpose.msra.mxu0 0.0
        %860 = vmatprep.subr.mxu0 0.0
        %861 = vmatpush1.xpose.msra.mxu0 0.0
        %862 = vmatprep.subr.mxu0 0.0
        %863 = vmatpush1.xpose.msra.mxu0 0.0
        %864 = vmatprep.subr.mxu0 0.0
        %865 = vmatpush1.xpose.msra.mxu0 0.0
        %866 = vmatprep.subr.mxu0 0.0
        %867 = vmatpush1.xpose.msra.mxu0 0.0
        %868 = vmatprep.subr.mxu0 0.0
        %869 = vmatpush1.xpose.msra.mxu0 0.0
        %870 = vmatprep.subr.mxu0 0.0
        %871 = vmatpush1.xpose.msra.mxu0 0.0
        %872 = vmatprep.subr.mxu0 0.0
        %873 = vmatpush1.xpose.msra.mxu0 0.0
        %874 = vmatprep.subr.mxu0 0.0
        %875 = vmatpush1.xpose.msra.mxu0 0.0
        %876 = vmatprep.subr.mxu0 0.0
        %877 = vmatpush1.xpose.msra.mxu0 0.0
        %878 = vmatprep.subr.mxu0 0.0
        %879 = vmatpush1.xpose.msra.mxu0 0.0
        %880 = vmatprep.subr.mxu0 0.0
        %881 = vmatpush1.xpose.msra.mxu0 0.0
        %882 = vmatprep.subr.mxu0 0.0
        %883 = vmatpush1.xpose.msra.mxu0 0.0
        %884 = vmatprep.subr.mxu0 0.0
        %885 = vmatpush1.xpose.msra.mxu0 0.0
        %886 = vmatprep.subr.mxu0 0.0
        %887 = vmatpush1.xpose.msra.mxu0 0.0
        %888 = vmatprep.subr.mxu0 0.0
        %889 = vmatpush1.xpose.msra.mxu0 0.0
        %890 = vmatprep.subr.mxu0 0.0
        %891 = vmatpush1.xpose.msra.mxu0 0.0
        %892 = vmatprep.subr.mxu0 0.0
        %893 = vmatpush1.xpose.msra.mxu0 0.0
        %894 = vmatprep.subr.mxu0 0.0
        %895 = vmatpush1.xpose.msra.mxu0 0.0
        %896 = vmatprep.subr.mxu0 0.0
        %897 = vmatpush1.xpose.msra.mxu0 0.0
        %898 = vmatprep.subr.mxu0 0.0
        %899 = vmatpush1.xpose.msra.mxu0 0.0
        %900 = vmatprep.subr.mxu0 0.0
        %901 = vmatpush1.xpose.msra.mxu0 0.0
        %902 = vmatprep.subr.mxu0 0.0
        %903 = vmatpush1.xpose.msra.mxu0 0.0
        %904 = vmatprep.subr.mxu0 0.0
        %905 = vmatpush1.xpose.msra.mxu0 0.0
        %906 = vmatprep.subr.mxu0 0.0
        %907 = vmatpush1.xpose.msra.mxu0 0.0
        %908 = vmatprep.subr.mxu0 0.0
        %909 = vmatpush1.xpose.msra.mxu0 0.0
        %910 = vmatprep.subr.mxu0 0.0
        %911 = vmatpush1.xpose.msra.mxu0 0.0
        %912 = vmatprep.subr.mxu0 0.0
        %913 = vmatpush1.xpose.msra.mxu0 0.0
        %914 = vmatprep.subr.mxu0 0.0
        %915 = vmatpush1.xpose.msra.mxu0 0.0
        %916 = vmatprep.subr.mxu0 0.0
        %917 = vmatpush1.xpose.msra.mxu0 0.0
        %918 = vmatprep.mubr.f32.mxu0 0.0
        %919 = vmatmul.mubr.f32.gmra.mrb[0].mxu0 %v849
        %v920 = vpop.f32.mrb[0].mxu0
        %v921 = vadd.f32 0.0, %v920
        %v922 = vpop.f32.mrb[0].mxu0
        %923 = vdwg.mxu0
        %v924 = vmul.f32 %v921, 0.17677669
        %v926 = vlaneseq
        %v927 = vshrl.u32 %v926, 7
        %v928 = vsub.s32 0, %v927
        %v929 = vrot.slane %v571, %v928
        %v931 = vadd.f32 %v924, %v929
        %vm932 = vcmask 64512
        %v933 = vsel %vm932, %v931, -inf
        %934 = vmax.xlane.f32.xlu0 %v933
        %v935 = vpop.xlane.xlu0 %934
        %v936 = vsub.f32 %v931, %v935
        %v937 = vmul.f32 %v936, 1.442695
        %v938 = vpow.pop %v937
        %v939 = vsel %vm932, %v938, 0.0
        %940 = vadd.xlane.f32.xlu0 %v939
        %v941 = vpop.xlane.xlu0 %940
        %v942 = vrcp.pop %v941
        %v943 = vmul.f32 %v938, %v942
        %v945 = vsel %vm932, %v943, 0
        %947 = vmatprep.subr.mxu0 0.0
        %948 = vmatpush1.msra.mxu0 %v826
        %949 = vmatprep.subr.mxu0 0.0
        %950 = vmatpush1.msra.mxu0 0.0
        %951 = vmatprep.subr.mxu0 0.0
        %952 = vmatpush1.msra.mxu0 0.0
        %953 = vmatprep.subr.mxu0 0.0
        %954 = vmatpush1.msra.mxu0 0.0
        %955 = vmatprep.subr.mxu0 0.0
        %956 = vmatpush1.msra.mxu0 0.0
        %957 = vmatprep.subr.mxu0 0.0
        %958 = vmatpush1.msra.mxu0 0.0
        %959 = vmatprep.subr.mxu0 0.0
        %960 = vmatpush1.msra.mxu0 0.0
        %961 = vmatprep.subr.mxu0 0.0
        %962 = vmatpush1.msra.mxu0 0.0
        %963 = vmatprep.subr.mxu0 0.0
        %964 = vmatpush1.msra.mxu0 0.0
        %965 = vmatprep.subr.mxu0 0.0
        %966 = vmatpush1.msra.mxu0 0.0
        %967 = vmatprep.subr.mxu0 0.0
        %968 = vmatpush1.msra.mxu0 0.0
        %969 = vmatprep.subr.mxu0 0.0
        %970 = vmatpush1.msra.mxu0 0.0
        %971 = vmatprep.subr.mxu0 0.0
        %972 = vmatpush1.msra.mxu0 0.0
        %973 = vmatprep.subr.mxu0 0.0
        %974 = vmatpush1.msra.mxu0 0.0
        %975 = vmatprep.subr.mxu0 0.0
        %976 = vmatpush1.msra.mxu0 0.0
        %977 = vmatprep.subr.mxu0 0.0
        %978 = vmatpush1.msra.mxu0 0.0
        %979 = vmatprep.subr.mxu0 0.0
        %980 = vmatpush1.msra.mxu0 0.0
        %981 = vmatprep.subr.mxu0 0.0
        %982 = vmatpush1.msra.mxu0 0.0
        %983 = vmatprep.subr.mxu0 0.0
        %984 = vmatpush1.msra.mxu0 0.0
        %985 = vmatprep.subr.mxu0 0.0
        %986 = vmatpush1.msra.mxu0 0.0
        %987 = vmatprep.subr.mxu0 0.0
        %988 = vmatpush1.msra.mxu0 0.0
        %989 = vmatprep.subr.mxu0 0.0
        %990 = vmatpush1.msra.mxu0 0.0
        %991 = vmatprep.subr.mxu0 0.0
        %992 = vmatpush1.msra.mxu0 0.0
        %993 = vmatprep.subr.mxu0 0.0
        %994 = vmatpush1.msra.mxu0 0.0
        %995 = vmatprep.subr.mxu0 0.0
        %996 = vmatpush1.msra.mxu0 0.0
        %997 = vmatprep.subr.mxu0 0.0
        %998 = vmatpush1.msra.mxu0 0.0
        %999 = vmatprep.subr.mxu0 0.0
        %1000 = vmatpush1.msra.mxu0 0.0
        %1001 = vmatprep.subr.mxu0 0.0
        %1002 = vmatpush1.msra.mxu0 0.0
        %1003 = vmatprep.subr.mxu0 0.0
        %1004 = vmatpush1.msra.mxu0 0.0
        %1005 = vmatprep.subr.mxu0 0.0
        %1006 = vmatpush1.msra.mxu0 0.0
        %1007 = vmatprep.subr.mxu0 0.0
        %1008 = vmatpush1.msra.mxu0 0.0
        %1009 = vmatprep.subr.mxu0 0.0
        %1010 = vmatpush1.msra.mxu0 0.0
        %1011 = vmatprep.mubr.f32.mxu0 0.0
        %1012 = vmatmul.mubr.f32.gmra.mrb[0].mxu0 %v945
        %v1013 = vpop.f32.mrb[0].mxu0
        %v1014 = vadd.f32 0.0, %v1013
        %v1015 = vpop.f32.mrb[0].mxu0
        %1016 = vdwg.mxu0
        %v1017 = vpack.c.bf16 %v1014, %v1014
        %1018 = vrot.lane.b32.xlu0 %v785, 96
        %v1019 = vpop.permute.xlu0 %1018
        %1020 = vrot.lane.b32.xlu0 %v787, 96
        %v1021 = vpop.permute.xlu0 %1020
        %v1022 = vsel %vm847, %v1019, 0
        %v1024 = vsel %vm847, %v1021, 0
        %1026 = vmatprep.subr.mxu0 0.0
        %1027 = vmatpush1.xpose.msra.mxu0 %v1024
        %1028 = vmatprep.subr.mxu0 0.0
        %1029 = vmatpush1.xpose.msra.mxu0 0.0
        %1030 = vmatprep.subr.mxu0 0.0
        %1031 = vmatpush1.xpose.msra.mxu0 0.0
        %1032 = vmatprep.subr.mxu0 0.0
        %1033 = vmatpush1.xpose.msra.mxu0 0.0
        %1034 = vmatprep.subr.mxu0 0.0
        %1035 = vmatpush1.xpose.msra.mxu0 0.0
        %1036 = vmatprep.subr.mxu0 0.0
        %1037 = vmatpush1.xpose.msra.mxu0 0.0
        %1038 = vmatprep.subr.mxu0 0.0
        %1039 = vmatpush1.xpose.msra.mxu0 0.0
        %1040 = vmatprep.subr.mxu0 0.0
        %1041 = vmatpush1.xpose.msra.mxu0 0.0
        %1042 = vmatprep.subr.mxu0 0.0
        %1043 = vmatpush1.xpose.msra.mxu0 0.0
        %1044 = vmatprep.subr.mxu0 0.0
        %1045 = vmatpush1.xpose.msra.mxu0 0.0
        %1046 = vmatprep.subr.mxu0 0.0
        %1047 = vmatpush1.xpose.msra.mxu0 0.0
        %1048 = vmatprep.subr.mxu0 0.0
        %1049 = vmatpush1.xpose.msra.mxu0 0.0
        %1050 = vmatprep.subr.mxu0 0.0
        %1051 = vmatpush1.xpose.msra.mxu0 0.0
        %1052 = vmatprep.subr.mxu0 0.0
        %1053 = vmatpush1.xpose.msra.mxu0 0.0
        %1054 = vmatprep.subr.mxu0 0.0
        %1055 = vmatpush1.xpose.msra.mxu0 0.0
        %1056 = vmatprep.subr.mxu0 0.0
        %1057 = vmatpush1.xpose.msra.mxu0 0.0
        %1058 = vmatprep.subr.mxu0 0.0
        %1059 = vmatpush1.xpose.msra.mxu0 0.0
        %1060 = vmatprep.subr.mxu0 0.0
        %1061 = vmatpush1.xpose.msra.mxu0 0.0
        %1062 = vmatprep.subr.mxu0 0.0
        %1063 = vmatpush1.xpose.msra.mxu0 0.0
        %1064 = vmatprep.subr.mxu0 0.0
        %1065 = vmatpush1.xpose.msra.mxu0 0.0
        %1066 = vmatprep.subr.mxu0 0.0
        %1067 = vmatpush1.xpose.msra.mxu0 0.0
        %1068 = vmatprep.subr.mxu0 0.0
        %1069 = vmatpush1.xpose.msra.mxu0 0.0
        %1070 = vmatprep.subr.mxu0 0.0
        %1071 = vmatpush1.xpose.msra.mxu0 0.0
        %1072 = vmatprep.subr.mxu0 0.0
        %1073 = vmatpush1.xpose.msra.mxu0 0.0
        %1074 = vmatprep.subr.mxu0 0.0
        %1075 = vmatpush1.xpose.msra.mxu0 0.0
        %1076 = vmatprep.subr.mxu0 0.0
        %1077 = vmatpush1.xpose.msra.mxu0 0.0
        %1078 = vmatprep.subr.mxu0 0.0
        %1079 = vmatpush1.xpose.msra.mxu0 0.0
        %1080 = vmatprep.subr.mxu0 0.0
        %1081 = vmatpush1.xpose.msra.mxu0 0.0
        %1082 = vmatprep.subr.mxu0 0.0
        %1083 = vmatpush1.xpose.msra.mxu0 0.0
        %1084 = vmatprep.subr.mxu0 0.0
        %1085 = vmatpush1.xpose.msra.mxu0 0.0
        %1086 = vmatprep.subr.mxu0 0.0
        %1087 = vmatpush1.xpose.msra.mxu0 0.0
        %1088 = vmatprep.subr.mxu0 0.0
        %1089 = vmatpush1.xpose.msra.mxu0 0.0
        %1090 = vmatprep.mubr.f32.mxu0 0.0
        %1091 = vmatmul.mubr.f32.gmra.mrb[0].mxu0 %v1022
        %v1092 = vpop.f32.mrb[0].mxu0
        %v1093 = vadd.f32 0.0, %v1092
        %v1094 = vpop.f32.mrb[0].mxu0
        %1095 = vdwg.mxu0
        %v1096 = vmul.f32 %v1093, 0.17677669
        %v1097 = vadd.f32 %v1096, %v929
        %v1098 = vsel %vm932, %v1097, -inf
        %1099 = vmax.xlane.f32.xlu0 %v1098
        %v1100 = vpop.xlane.xlu0 %1099
        %v1101 = vsub.f32 %v1097, %v1100
        %v1102 = vmul.f32 %v1101, 1.442695
        %v1103 = vpow.pop %v1102
        %v1104 = vsel %vm932, %v1103, 0.0
        %1105 = vadd.xlane.f32.xlu0 %v1104
        %v1106 = vpop.xlane.xlu0 %1105
        %v1107 = vrcp.pop %v1106
        %v1108 = vmul.f32 %v1103, %v1107
        %1110 = vrot.lane.b32.xlu0 %v826, 96
        %v1111 = vpop.permute.xlu0 %1110
        %v1114 = vsel %vm932, %v1108, 0
        %1116 = vmatprep.subr.mxu0 0.0
        %1117 = vmatpush1.msra.mxu0 %v1111
        %1118 = vmatprep.subr.mxu0 0.0
        %1119 = vmatpush1.msra.mxu0 0.0
        %1120 = vmatprep.subr.mxu0 0.0
        %1121 = vmatpush1.msra.mxu0 0.0
        %1122 = vmatprep.subr.mxu0 0.0
        %1123 = vmatpush1.msra.mxu0 0.0
        %1124 = vmatprep.subr.mxu0 0.0
        %1125 = vmatpush1.msra.mxu0 0.0
        %1126 = vmatprep.subr.mxu0 0.0
        %1127 = vmatpush1.msra.mxu0 0.0
        %1128 = vmatprep.subr.mxu0 0.0
        %1129 = vmatpush1.msra.mxu0 0.0
        %1130 = vmatprep.subr.mxu0 0.0
        %1131 = vmatpush1.msra.mxu0 0.0
        %1132 = vmatprep.subr.mxu0 0.0
        %1133 = vmatpush1.msra.mxu0 0.0
        %1134 = vmatprep.subr.mxu0 0.0
        %1135 = vmatpush1.msra.mxu0 0.0
        %1136 = vmatprep.subr.mxu0 0.0
        %1137 = vmatpush1.msra.mxu0 0.0
        %1138 = vmatprep.subr.mxu0 0.0
        %1139 = vmatpush1.msra.mxu0 0.0
        %1140 = vmatprep.subr.mxu0 0.0
        %1141 = vmatpush1.msra.mxu0 0.0
        %1142 = vmatprep.subr.mxu0 0.0
        %1143 = vmatpush1.msra.mxu0 0.0
        %1144 = vmatprep.subr.mxu0 0.0
        %1145 = vmatpush1.msra.mxu0 0.0
        %1146 = vmatprep.subr.mxu0 0.0
        %1147 = vmatpush1.msra.mxu0 0.0
        %1148 = vmatprep.subr.mxu0 0.0
        %1149 = vmatpush1.msra.mxu0 0.0
        %1150 = vmatprep.subr.mxu0 0.0
        %1151 = vmatpush1.msra.mxu0 0.0
        %1152 = vmatprep.subr.mxu0 0.0
        %1153 = vmatpush1.msra.mxu0 0.0
        %1154 = vmatprep.subr.mxu0 0.0
        %1155 = vmatpush1.msra.mxu0 0.0
        %1156 = vmatprep.subr.mxu0 0.0
        %1157 = vmatpush1.msra.mxu0 0.0
        %1158 = vmatprep.subr.mxu0 0.0
        %1159 = vmatpush1.msra.mxu0 0.0
        %1160 = vmatprep.subr.mxu0 0.0
        %1161 = vmatpush1.msra.mxu0 0.0
        %1162 = vmatprep.subr.mxu0 0.0
        %1163 = vmatpush1.msra.mxu0 0.0
        %1164 = vmatprep.subr.mxu0 0.0
        %1165 = vmatpush1.msra.mxu0 0.0
        %1166 = vmatprep.subr.mxu0 0.0
        %1167 = vmatpush1.msra.mxu0 0.0
        %1168 = vmatprep.subr.mxu0 0.0
        %1169 = vmatpush1.msra.mxu0 0.0
        %1170 = vmatprep.subr.mxu0 0.0
        %1171 = vmatpush1.msra.mxu0 0.0
        %1172 = vmatprep.subr.mxu0 0.0
        %1173 = vmatpush1.msra.mxu0 0.0
        %1174 = vmatprep.subr.mxu0 0.0
        %1175 = vmatpush1.msra.mxu0 0.0
        %1176 = vmatprep.subr.mxu0 0.0
        %1177 = vmatpush1.msra.mxu0 0.0
        %1178 = vmatprep.subr.mxu0 0.0
        %1179 = vmatpush1.msra.mxu0 0.0
        %1180 = vmatprep.mubr.f32.mxu0 0.0
        %1181 = vmatmul.mubr.f32.gmra.mrb[0].mxu0 %v1114
        %v1182 = vpop.f32.mrb[0].mxu0
        %v1183 = vadd.f32 0.0, %v1182
        %v1184 = vpop.f32.mrb[0].mxu0
        %1185 = vdwg.mxu0
        %v1186 = vpack.c.bf16 %v1183, %v1183
        %v1191 = vunpack.c.l.b16 %v835
        %v1192 = vunpack.c.l.b16 %v836
        %v1193 = vunpack.c.l.b16 %v837
        %v1194 = vunpack.c.l.b16 %v838
        %v1195 = vpack.c.b16 %v1192, %v1191
        %v1196 = vpack.c.b16 %v1194, %v1193
        %v1200 = vsel %vm847, %v1186, 0
        %1202 = vmatprep.subr.bf16.mxu0 0
        %1203 = vmatpush1.bf16.msra.mxu0 %v1195
        %1204 = vmatprep.subr.bf16.mxu0 0
        %1205 = vmatpush1.bf16.msra.mxu0 %v1196
        %1206 = vmatprep.subr.bf16.mxu0 0
        %1207 = vmatpush1.bf16.msra.mxu0 0
        %1208 = vmatprep.subr.bf16.mxu0 0
        %1209 = vmatpush1.bf16.msra.mxu0 0
        %1210 = vmatprep.subr.bf16.mxu0 0
        %1211 = vmatpush1.bf16.msra.mxu0 0
        %1212 = vmatprep.subr.bf16.mxu0 0
        %1213 = vmatpush1.bf16.msra.mxu0 0
        %1214 = vmatprep.subr.bf16.mxu0 0
        %1215 = vmatpush1.bf16.msra.mxu0 0
        %1216 = vmatprep.subr.bf16.mxu0 0
        %1217 = vmatpush1.bf16.msra.mxu0 0
        %1218 = vmatprep.subr.bf16.mxu0 0
        %1219 = vmatpush1.bf16.msra.mxu0 0
        %1220 = vmatprep.subr.bf16.mxu0 0
        %1221 = vmatpush1.bf16.msra.mxu0 0
        %1222 = vmatprep.subr.bf16.mxu0 0
        %1223 = vmatpush1.bf16.msra.mxu0 0
        %1224 = vmatprep.subr.bf16.mxu0 0
        %1225 = vmatpush1.bf16.msra.mxu0 0
        %1226 = vmatprep.subr.bf16.mxu0 0
        %1227 = vmatpush1.bf16.msra.mxu0 0
        %1228 = vmatprep.subr.bf16.mxu0 0
        %1229 = vmatpush1.bf16.msra.mxu0 0
        %1230 = vmatprep.subr.bf16.mxu0 0
        %1231 = vmatpush1.bf16.msra.mxu0 0
        %1232 = vmatprep.subr.bf16.mxu0 0
        %1233 = vmatpush1.bf16.msra.mxu0 0
        %1234 = vmatprep.mubr.bf16.mxu0 0
        %1235 = vmatmul.mubr.bf16.gmra.mrb[0].mxu0 %v1200
        %v1236 = vpop.f32.mrb[0].mxu0
        %v1237 = vadd.f32 0.0, %v1236
        %v1238 = vpop.f32.mrb[0].mxu0
        %v1239 = vpop.f32.mrb[0].mxu0
        %v1240 = vpop.f32.mrb[0].mxu0
        %1241 = vdwg.mxu0
        %v1246 = vunpack.c.l.b16 %v831
        %v1247 = vunpack.c.l.b16 %v832
        %v1248 = vunpack.c.l.b16 %v833
        %v1249 = vunpack.c.l.b16 %v834
        %v1250 = vpack.c.b16 %v1247, %v1246
        %v1251 = vpack.c.b16 %v1249, %v1248
        %v1255 = vsel %vm847, %v1017, 0
        %1257 = vmatprep.subr.bf16.mxu0 0
        %1258 = vmatpush1.bf16.msra.mxu0 %v1250
        %1259 = vmatprep.subr.bf16.mxu0 0
        %1260 = vmatpush1.bf16.msra.mxu0 %v1251
        %1261 = vmatprep.subr.bf16.mxu0 0
        %1262 = vmatpush1.bf16.msra.mxu0 0
        %1263 = vmatprep.subr.bf16.mxu0 0
        %1264 = vmatpush1.bf16.msra.mxu0 0
        %1265 = vmatprep.subr.bf16.mxu0 0
        %1266 = vmatpush1.bf16.msra.mxu0 0
        %1267 = vmatprep.subr.bf16.mxu0 0
        %1268 = vmatpush1.bf16.msra.mxu0 0
        %1269 = vmatprep.subr.bf16.mxu0 0
        %1270 = vmatpush1.bf16.msra.mxu0 0
        %1271 = vmatprep.subr.bf16.mxu0 0
        %1272 = vmatpush1.bf16.msra.mxu0 0
        %1273 = vmatprep.subr.bf16.mxu0 0
        %1274 = vmatpush1.bf16.msra.mxu0 0
        %1275 = vmatprep.subr.bf16.mxu0 0
        %1276 = vmatpush1.bf16.msra.mxu0 0
        %1277 = vmatprep.subr.bf16.mxu0 0
        %1278 = vmatpush1.bf16.msra.mxu0 0
        %1279 = vmatprep.subr.bf16.mxu0 0
        %1280 = vmatpush1.bf16.msra.mxu0 0
        %1281 = vmatprep.subr.bf16.mxu0 0
        %1282 = vmatpush1.bf16.msra.mxu0 0
        %1283 = vmatprep.subr.bf16.mxu0 0
        %1284 = vmatpush1.bf16.msra.mxu0 0
        %1285 = vmatprep.subr.bf16.mxu0 0
        %1286 = vmatpush1.bf16.msra.mxu0 0
        %1287 = vmatprep.subr.bf16.mxu0 0
        %1288 = vmatpush1.bf16.msra.mxu0 0
        %1289 = vmatprep.mubr.bf16.mxu0 0
        %1290 = vmatmul.mubr.bf16.gmra.mrb[0].mxu0 %v1255
        %v1291 = vpop.f32.mrb[0].mxu0
        %v1292 = vadd.f32 %v1237, %v1291
        %v1293 = vpop.f32.mrb[0].mxu0
        %v1294 = vpop.f32.mrb[0].mxu0
        %v1295 = vpop.f32.mrb[0].mxu0
        %1296 = vdwg.mxu0
        %1297 = vrot.lane.b32.xlu0 %v785, 64
        %v1298 = vpop.permute.xlu0 %1297
        %1299 = vrot.lane.b32.xlu0 %v787, 64
        %v1300 = vpop.permute.xlu0 %1299
        %v1301 = vsel %vm847, %v1298, 0
        %v1303 = vsel %vm847, %v1300, 0
        %1305 = vmatprep.subr.mxu0 0.0
        %1306 = vmatpush1.xpose.msra.mxu0 %v1303
        %1307 = vmatprep.subr.mxu0 0.0
        %1308 = vmatpush1.xpose.msra.mxu0 0.0
        %1309 = vmatprep.subr.mxu0 0.0
        %1310 = vmatpush1.xpose.msra.mxu0 0.0
        %1311 = vmatprep.subr.mxu0 0.0
        %1312 = vmatpush1.xpose.msra.mxu0 0.0
        %1313 = vmatprep.subr.mxu0 0.0
        %1314 = vmatpush1.xpose.msra.mxu0 0.0
        %1315 = vmatprep.subr.mxu0 0.0
        %1316 = vmatpush1.xpose.msra.mxu0 0.0
        %1317 = vmatprep.subr.mxu0 0.0
        %1318 = vmatpush1.xpose.msra.mxu0 0.0
        %1319 = vmatprep.subr.mxu0 0.0
        %1320 = vmatpush1.xpose.msra.mxu0 0.0
        %1321 = vmatprep.subr.mxu0 0.0
        %1322 = vmatpush1.xpose.msra.mxu0 0.0
        %1323 = vmatprep.subr.mxu0 0.0
        %1324 = vmatpush1.xpose.msra.mxu0 0.0
        %1325 = vmatprep.subr.mxu0 0.0
        %1326 = vmatpush1.xpose.msra.mxu0 0.0
        %1327 = vmatprep.subr.mxu0 0.0
        %1328 = vmatpush1.xpose.msra.mxu0 0.0
        %1329 = vmatprep.subr.mxu0 0.0
        %1330 = vmatpush1.xpose.msra.mxu0 0.0
        %1331 = vmatprep.subr.mxu0 0.0
        %1332 = vmatpush1.xpose.msra.mxu0 0.0
        %1333 = vmatprep.subr.mxu0 0.0
        %1334 = vmatpush1.xpose.msra.mxu0 0.0
        %1335 = vmatprep.subr.mxu0 0.0
        %1336 = vmatpush1.xpose.msra.mxu0 0.0
        %1337 = vmatprep.subr.mxu0 0.0
        %1338 = vmatpush1.xpose.msra.mxu0 0.0
        %1339 = vmatprep.subr.mxu0 0.0
        %1340 = vmatpush1.xpose.msra.mxu0 0.0
        %1341 = vmatprep.subr.mxu0 0.0
        %1342 = vmatpush1.xpose.msra.mxu0 0.0
        %1343 = vmatprep.subr.mxu0 0.0
        %1344 = vmatpush1.xpose.msra.mxu0 0.0
        %1345 = vmatprep.subr.mxu0 0.0
        %1346 = vmatpush1.xpose.msra.mxu0 0.0
        %1347 = vmatprep.subr.mxu0 0.0
        %1348 = vmatpush1.xpose.msra.mxu0 0.0
        %1349 = vmatprep.subr.mxu0 0.0
        %1350 = vmatpush1.xpose.msra.mxu0 0.0
        %1351 = vmatprep.subr.mxu0 0.0
        %1352 = vmatpush1.xpose.msra.mxu0 0.0
        %1353 = vmatprep.subr.mxu0 0.0
        %1354 = vmatpush1.xpose.msra.mxu0 0.0
        %1355 = vmatprep.subr.mxu0 0.0
        %1356 = vmatpush1.xpose.msra.mxu0 0.0
        %1357 = vmatprep.subr.mxu0 0.0
        %1358 = vmatpush1.xpose.msra.mxu0 0.0
        %1359 = vmatprep.subr.mxu0 0.0
        %1360 = vmatpush1.xpose.msra.mxu0 0.0
        %1361 = vmatprep.subr.mxu0 0.0
        %1362 = vmatpush1.xpose.msra.mxu0 0.0
        %1363 = vmatprep.subr.mxu0 0.0
        %1364 = vmatpush1.xpose.msra.mxu0 0.0
        %1365 = vmatprep.subr.mxu0 0.0
        %1366 = vmatpush1.xpose.msra.mxu0 0.0
        %1367 = vmatprep.subr.mxu0 0.0
        %1368 = vmatpush1.xpose.msra.mxu0 0.0
        %1369 = vmatprep.mubr.f32.mxu0 0.0
        %1370 = vmatmul.mubr.f32.gmra.mrb[0].mxu0 %v1301
        %v1371 = vpop.f32.mrb[0].mxu0
        %v1372 = vadd.f32 0.0, %v1371
        %v1373 = vpop.f32.mrb[0].mxu0
        %1374 = vdwg.mxu0
        %v1375 = vmul.f32 %v1372, 0.17677669
        %v1376 = vadd.f32 %v1375, %v929
        %v1377 = vsel %vm932, %v1376, -inf
        %1378 = vmax.xlane.f32.xlu0 %v1377
        %v1379 = vpop.xlane.xlu0 %1378
        %v1380 = vsub.f32 %v1376, %v1379
        %v1381 = vmul.f32 %v1380, 1.442695
        %v1382 = vpow.pop %v1381
        %v1383 = vsel %vm932, %v1382, 0.0
        %1384 = vadd.xlane.f32.xlu0 %v1383
        %v1385 = vpop.xlane.xlu0 %1384
        %v1386 = vrcp.pop %v1385
        %v1387 = vmul.f32 %v1382, %v1386
        %1388 = vrot.lane.b32.xlu0 %v826, 64
        %v1389 = vpop.permute.xlu0 %1388
        %v1392 = vsel %vm932, %v1387, 0
        %1394 = vmatprep.subr.mxu0 0.0
        %1395 = vmatpush1.msra.mxu0 %v1389
        %1396 = vmatprep.subr.mxu0 0.0
        %1397 = vmatpush1.msra.mxu0 0.0
        %1398 = vmatprep.subr.mxu0 0.0
        %1399 = vmatpush1.msra.mxu0 0.0
        %1400 = vmatprep.subr.mxu0 0.0
        %1401 = vmatpush1.msra.mxu0 0.0
        %1402 = vmatprep.subr.mxu0 0.0
        %1403 = vmatpush1.msra.mxu0 0.0
        %1404 = vmatprep.subr.mxu0 0.0
        %1405 = vmatpush1.msra.mxu0 0.0
        %1406 = vmatprep.subr.mxu0 0.0
        %1407 = vmatpush1.msra.mxu0 0.0
        %1408 = vmatprep.subr.mxu0 0.0
        %1409 = vmatpush1.msra.mxu0 0.0
        %1410 = vmatprep.subr.mxu0 0.0
        %1411 = vmatpush1.msra.mxu0 0.0
        %1412 = vmatprep.subr.mxu0 0.0
        %1413 = vmatpush1.msra.mxu0 0.0
        %1414 = vmatprep.subr.mxu0 0.0
        %1415 = vmatpush1.msra.mxu0 0.0
        %1416 = vmatprep.subr.mxu0 0.0
        %1417 = vmatpush1.msra.mxu0 0.0
        %1418 = vmatprep.subr.mxu0 0.0
        %1419 = vmatpush1.msra.mxu0 0.0
        %1420 = vmatprep.subr.mxu0 0.0
        %1421 = vmatpush1.msra.mxu0 0.0
        %1422 = vmatprep.subr.mxu0 0.0
        %1423 = vmatpush1.msra.mxu0 0.0
        %1424 = vmatprep.subr.mxu0 0.0
        %1425 = vmatpush1.msra.mxu0 0.0
        %1426 = vmatprep.subr.mxu0 0.0
        %1427 = vmatpush1.msra.mxu0 0.0
        %1428 = vmatprep.subr.mxu0 0.0
        %1429 = vmatpush1.msra.mxu0 0.0
        %1430 = vmatprep.subr.mxu0 0.0
        %1431 = vmatpush1.msra.mxu0 0.0
        %1432 = vmatprep.subr.mxu0 0.0
        %1433 = vmatpush1.msra.mxu0 0.0
        %1434 = vmatprep.subr.mxu0 0.0
        %1435 = vmatpush1.msra.mxu0 0.0
        %1436 = vmatprep.subr.mxu0 0.0
        %1437 = vmatpush1.msra.mxu0 0.0
        %1438 = vmatprep.subr.mxu0 0.0
        %1439 = vmatpush1.msra.mxu0 0.0
        %1440 = vmatprep.subr.mxu0 0.0
        %1441 = vmatpush1.msra.mxu0 0.0
        %1442 = vmatprep.subr.mxu0 0.0
        %1443 = vmatpush1.msra.mxu0 0.0
        %1444 = vmatprep.subr.mxu0 0.0
        %1445 = vmatpush1.msra.mxu0 0.0
        %1446 = vmatprep.subr.mxu0 0.0
        %1447 = vmatpush1.msra.mxu0 0.0
        %1448 = vmatprep.subr.mxu0 0.0
        %1449 = vmatpush1.msra.mxu0 0.0
        %1450 = vmatprep.subr.mxu0 0.0
        %1451 = vmatpush1.msra.mxu0 0.0
        %1452 = vmatprep.subr.mxu0 0.0
        %1453 = vmatpush1.msra.mxu0 0.0
        %1454 = vmatprep.subr.mxu0 0.0
        %1455 = vmatpush1.msra.mxu0 0.0
        %1456 = vmatprep.subr.mxu0 0.0
        %1457 = vmatpush1.msra.mxu0 0.0
        %1458 = vmatprep.mubr.f32.mxu0 0.0
        %1459 = vmatmul.mubr.f32.gmra.mrb[0].mxu0 %v1392
        %v1460 = vpop.f32.mrb[0].mxu0
        %v1461 = vadd.f32 0.0, %v1460
        %v1462 = vpop.f32.mrb[0].mxu0
        %1463 = vdwg.mxu0
        %v1464 = vpack.c.bf16 %v1461, %v1461
        %v1469 = vunpack.c.l.b16 %v839
        %v1470 = vunpack.c.l.b16 %v840
        %v1471 = vunpack.c.l.b16 %v841
        %v1472 = vunpack.c.l.b16 %v842
        %v1473 = vpack.c.b16 %v1470, %v1469
        %v1474 = vpack.c.b16 %v1472, %v1471
        %v1478 = vsel %vm847, %v1464, 0
        %1480 = vmatprep.subr.bf16.mxu0 0
        %1481 = vmatpush1.bf16.msra.mxu0 %v1473
        %1482 = vmatprep.subr.bf16.mxu0 0
        %1483 = vmatpush1.bf16.msra.mxu0 %v1474
        %1484 = vmatprep.subr.bf16.mxu0 0
        %1485 = vmatpush1.bf16.msra.mxu0 0
        %1486 = vmatprep.subr.bf16.mxu0 0
        %1487 = vmatpush1.bf16.msra.mxu0 0
        %1488 = vmatprep.subr.bf16.mxu0 0
        %1489 = vmatpush1.bf16.msra.mxu0 0
        %1490 = vmatprep.subr.bf16.mxu0 0
        %1491 = vmatpush1.bf16.msra.mxu0 0
        %1492 = vmatprep.subr.bf16.mxu0 0
        %1493 = vmatpush1.bf16.msra.mxu0 0
        %1494 = vmatprep.subr.bf16.mxu0 0
        %1495 = vmatpush1.bf16.msra.mxu0 0
        %1496 = vmatprep.subr.bf16.mxu0 0
        %1497 = vmatpush1.bf16.msra.mxu0 0
        %1498 = vmatprep.subr.bf16.mxu0 0
        %1499 = vmatpush1.bf16.msra.mxu0 0
        %1500 = vmatprep.subr.bf16.mxu0 0
        %1501 = vmatpush1.bf16.msra.mxu0 0
        %1502 = vmatprep.subr.bf16.mxu0 0
        %1503 = vmatpush1.bf16.msra.mxu0 0
        %1504 = vmatprep.subr.bf16.mxu0 0
        %1505 = vmatpush1.bf16.msra.mxu0 0
        %1506 = vmatprep.subr.bf16.mxu0 0
        %1507 = vmatpush1.bf16.msra.mxu0 0
        %1508 = vmatprep.subr.bf16.mxu0 0
        %1509 = vmatpush1.bf16.msra.mxu0 0
        %1510 = vmatprep.subr.bf16.mxu0 0
        %1511 = vmatpush1.bf16.msra.mxu0 0
        %1512 = vmatprep.mubr.bf16.mxu0 0
        %1513 = vmatmul.mubr.bf16.gmra.mrb[0].mxu0 %v1478
        %v1514 = vpop.f32.mrb[0].mxu0
        %v1515 = vadd.f32 0.0, %v1514
        %v1516 = vpop.f32.mrb[0].mxu0
        %v1517 = vpop.f32.mrb[0].mxu0
        %v1518 = vpop.f32.mrb[0].mxu0
        %1519 = vdwg.mxu0
        %v1520 = vadd.f32 %v1292, %v1515
        %1521 = vrot.lane.b32.xlu0 %v785, 32
        %v1522 = vpop.permute.xlu0 %1521
        %1523 = vrot.lane.b32.xlu0 %v787, 32
        %v1524 = vpop.permute.xlu0 %1523
        %v1525 = vsel %vm847, %v1522, 0
        %v1527 = vsel %vm847, %v1524, 0
        %1529 = vmatprep.subr.mxu0 0.0
        %1530 = vmatpush1.xpose.msra.mxu0 %v1527
        %1531 = vmatprep.subr.mxu0 0.0
        %1532 = vmatpush1.xpose.msra.mxu0 0.0
        %1533 = vmatprep.subr.mxu0 0.0
        %1534 = vmatpush1.xpose.msra.mxu0 0.0
        %1535 = vmatprep.subr.mxu0 0.0
        %1536 = vmatpush1.xpose.msra.mxu0 0.0
        %1537 = vmatprep.subr.mxu0 0.0
        %1538 = vmatpush1.xpose.msra.mxu0 0.0
        %1539 = vmatprep.subr.mxu0 0.0
        %1540 = vmatpush1.xpose.msra.mxu0 0.0
        %1541 = vmatprep.subr.mxu0 0.0
        %1542 = vmatpush1.xpose.msra.mxu0 0.0
        %1543 = vmatprep.subr.mxu0 0.0
        %1544 = vmatpush1.xpose.msra.mxu0 0.0
        %1545 = vmatprep.subr.mxu0 0.0
        %1546 = vmatpush1.xpose.msra.mxu0 0.0
        %1547 = vmatprep.subr.mxu0 0.0
        %1548 = vmatpush1.xpose.msra.mxu0 0.0
        %1549 = vmatprep.subr.mxu0 0.0
        %1550 = vmatpush1.xpose.msra.mxu0 0.0
        %1551 = vmatprep.subr.mxu0 0.0
        %1552 = vmatpush1.xpose.msra.mxu0 0.0
        %1553 = vmatprep.subr.mxu0 0.0
        %1554 = vmatpush1.xpose.msra.mxu0 0.0
        %1555 = vmatprep.subr.mxu0 0.0
        %1556 = vmatpush1.xpose.msra.mxu0 0.0
        %1557 = vmatprep.subr.mxu0 0.0
        %1558 = vmatpush1.xpose.msra.mxu0 0.0
        %1559 = vmatprep.subr.mxu0 0.0
        %1560 = vmatpush1.xpose.msra.mxu0 0.0
        %1561 = vmatprep.subr.mxu0 0.0
        %1562 = vmatpush1.xpose.msra.mxu0 0.0
        %1563 = vmatprep.subr.mxu0 0.0
        %1564 = vmatpush1.xpose.msra.mxu0 0.0
        %1565 = vmatprep.subr.mxu0 0.0
        %1566 = vmatpush1.xpose.msra.mxu0 0.0
        %1567 = vmatprep.subr.mxu0 0.0
        %1568 = vmatpush1.xpose.msra.mxu0 0.0
        %1569 = vmatprep.subr.mxu0 0.0
        %1570 = vmatpush1.xpose.msra.mxu0 0.0
        %1571 = vmatprep.subr.mxu0 0.0
        %1572 = vmatpush1.xpose.msra.mxu0 0.0
        %1573 = vmatprep.subr.mxu0 0.0
        %1574 = vmatpush1.xpose.msra.mxu0 0.0
        %1575 = vmatprep.subr.mxu0 0.0
        %1576 = vmatpush1.xpose.msra.mxu0 0.0
        %1577 = vmatprep.subr.mxu0 0.0
        %1578 = vmatpush1.xpose.msra.mxu0 0.0
        %1579 = vmatprep.subr.mxu0 0.0
        %1580 = vmatpush1.xpose.msra.mxu0 0.0
        %1581 = vmatprep.subr.mxu0 0.0
        %1582 = vmatpush1.xpose.msra.mxu0 0.0
        %1583 = vmatprep.subr.mxu0 0.0
        %1584 = vmatpush1.xpose.msra.mxu0 0.0
        %1585 = vmatprep.subr.mxu0 0.0
        %1586 = vmatpush1.xpose.msra.mxu0 0.0
        %1587 = vmatprep.subr.mxu0 0.0
        %1588 = vmatpush1.xpose.msra.mxu0 0.0
        %1589 = vmatprep.subr.mxu0 0.0
        %1590 = vmatpush1.xpose.msra.mxu0 0.0
        %1591 = vmatprep.subr.mxu0 0.0
        %1592 = vmatpush1.xpose.msra.mxu0 0.0
        %1593 = vmatprep.mubr.f32.mxu0 0.0
        %1594 = vmatmul.mubr.f32.gmra.mrb[0].mxu0 %v1525
        %v1595 = vpop.f32.mrb[0].mxu0
        %v1596 = vadd.f32 0.0, %v1595
        %v1597 = vpop.f32.mrb[0].mxu0
        %1598 = vdwg.mxu0
        %v1599 = vmul.f32 %v1596, 0.17677669
        %v1600 = vadd.f32 %v1599, %v929
        %v1601 = vsel %vm932, %v1600, -inf
        %1602 = vmax.xlane.f32.xlu0 %v1601
        %v1603 = vpop.xlane.xlu0 %1602
        %v1604 = vsub.f32 %v1600, %v1603
        %v1605 = vmul.f32 %v1604, 1.442695
        %v1606 = vpow.pop %v1605
        %v1607 = vsel %vm932, %v1606, 0.0
        %1608 = vadd.xlane.f32.xlu0 %v1607
        %v1609 = vpop.xlane.xlu0 %1608
        %v1610 = vrcp.pop %v1609
        %v1611 = vmul.f32 %v1606, %v1610
        %1612 = vrot.lane.b32.xlu0 %v826, 32
        %v1613 = vpop.permute.xlu0 %1612
        %v1616 = vsel %vm932, %v1611, 0
        %1618 = vmatprep.subr.mxu0 0.0
        %1619 = vmatpush1.msra.mxu0 %v1613
        %1620 = vmatprep.subr.mxu0 0.0
        %1621 = vmatpush1.msra.mxu0 0.0
        %1622 = vmatprep.subr.mxu0 0.0
        %1623 = vmatpush1.msra.mxu0 0.0
        %1624 = vmatprep.subr.mxu0 0.0
        %1625 = vmatpush1.msra.mxu0 0.0
        %1626 = vmatprep.subr.mxu0 0.0
        %1627 = vmatpush1.msra.mxu0 0.0
        %1628 = vmatprep.subr.mxu0 0.0
        %1629 = vmatpush1.msra.mxu0 0.0
        %1630 = vmatprep.subr.mxu0 0.0
        %1631 = vmatpush1.msra.mxu0 0.0
        %1632 = vmatprep.subr.mxu0 0.0
        %1633 = vmatpush1.msra.mxu0 0.0
        %1634 = vmatprep.subr.mxu0 0.0
        %1635 = vmatpush1.msra.mxu0 0.0
        %1636 = vmatprep.subr.mxu0 0.0
        %1637 = vmatpush1.msra.mxu0 0.0
        %1638 = vmatprep.subr.mxu0 0.0
        %1639 = vmatpush1.msra.mxu0 0.0
        %1640 = vmatprep.subr.mxu0 0.0
        %1641 = vmatpush1.msra.mxu0 0.0
        %1642 = vmatprep.subr.mxu0 0.0
        %1643 = vmatpush1.msra.mxu0 0.0
        %1644 = vmatprep.subr.mxu0 0.0
        %1645 = vmatpush1.msra.mxu0 0.0
        %1646 = vmatprep.subr.mxu0 0.0
        %1647 = vmatpush1.msra.mxu0 0.0
        %1648 = vmatprep.subr.mxu0 0.0
        %1649 = vmatpush1.msra.mxu0 0.0
        %1650 = vmatprep.subr.mxu0 0.0
        %1651 = vmatpush1.msra.mxu0 0.0
        %1652 = vmatprep.subr.mxu0 0.0
        %1653 = vmatpush1.msra.mxu0 0.0
        %1654 = vmatprep.subr.mxu0 0.0
        %1655 = vmatpush1.msra.mxu0 0.0
        %1656 = vmatprep.subr.mxu0 0.0
        %1657 = vmatpush1.msra.mxu0 0.0
        %1658 = vmatprep.subr.mxu0 0.0
        %1659 = vmatpush1.msra.mxu0 0.0
        %1660 = vmatprep.subr.mxu0 0.0
        %1661 = vmatpush1.msra.mxu0 0.0
        %1662 = vmatprep.subr.mxu0 0.0
        %1663 = vmatpush1.msra.mxu0 0.0
        %1664 = vmatprep.subr.mxu0 0.0
        %1665 = vmatpush1.msra.mxu0 0.0
        %1666 = vmatprep.subr.mxu0 0.0
        %1667 = vmatpush1.msra.mxu0 0.0
        %1668 = vmatprep.subr.mxu0 0.0
        %1669 = vmatpush1.msra.mxu0 0.0
        %1670 = vmatprep.subr.mxu0 0.0
        %1671 = vmatpush1.msra.mxu0 0.0
        %1672 = vmatprep.subr.mxu0 0.0
        %1673 = vmatpush1.msra.mxu0 0.0
        %1674 = vmatprep.subr.mxu0 0.0
        %1675 = vmatpush1.msra.mxu0 0.0
        %1676 = vmatprep.subr.mxu0 0.0
        %1677 = vmatpush1.msra.mxu0 0.0
        %1678 = vmatprep.subr.mxu0 0.0
        %1679 = vmatpush1.msra.mxu0 0.0
        %1680 = vmatprep.subr.mxu0 0.0
        %1681 = vmatpush1.msra.mxu0 0.0
        %1682 = vmatprep.mubr.f32.mxu0 0.0
        %1683 = vmatmul.mubr.f32.gmra.mrb[0].mxu0 %v1616
        %v1684 = vpop.f32.mrb[0].mxu0
        %v1685 = vadd.f32 0.0, %v1684
        %v1686 = vpop.f32.mrb[0].mxu0
        %1687 = vdwg.mxu0
        %v1688 = vpack.c.bf16 %v1685, %v1685
        %v1693 = vunpack.c.l.b16 %v843
        %v1694 = vunpack.c.l.b16 %v844
        %v1695 = vunpack.c.l.b16 %v845
        %v1696 = vunpack.c.l.b16 %v846
        %v1697 = vpack.c.b16 %v1694, %v1693
        %v1698 = vpack.c.b16 %v1696, %v1695
        %v1702 = vsel %vm847, %v1688, 0
        %1704 = vmatprep.subr.bf16.mxu0 0
        %1705 = vmatpush1.bf16.msra.mxu0 %v1697
        %1706 = vmatprep.subr.bf16.mxu0 0
        %1707 = vmatpush1.bf16.msra.mxu0 %v1698
        %1708 = vmatprep.subr.bf16.mxu0 0
        %1709 = vmatpush1.bf16.msra.mxu0 0
        %1710 = vmatprep.subr.bf16.mxu0 0
        %1711 = vmatpush1.bf16.msra.mxu0 0
        %1712 = vmatprep.subr.bf16.mxu0 0
        %1713 = vmatpush1.bf16.msra.mxu0 0
        %1714 = vmatprep.subr.bf16.mxu0 0
        %1715 = vmatpush1.bf16.msra.mxu0 0
        %1716 = vmatprep.subr.bf16.mxu0 0
        %1717 = vmatpush1.bf16.msra.mxu0 0
        %1718 = vmatprep.subr.bf16.mxu0 0
        %1719 = vmatpush1.bf16.msra.mxu0 0
        %1720 = vmatprep.subr.bf16.mxu0 0
        %1721 = vmatpush1.bf16.msra.mxu0 0
        %1722 = vmatprep.subr.bf16.mxu0 0
        %1723 = vmatpush1.bf16.msra.mxu0 0
        %1724 = vmatprep.subr.bf16.mxu0 0
        %1725 = vmatpush1.bf16.msra.mxu0 0
        %1726 = vmatprep.subr.bf16.mxu0 0
        %1727 = vmatpush1.bf16.msra.mxu0 0
        %1728 = vmatprep.subr.bf16.mxu0 0
        %1729 = vmatpush1.bf16.msra.mxu0 0
        %1730 = vmatprep.subr.bf16.mxu0 0
        %1731 = vmatpush1.bf16.msra.mxu0 0
        %1732 = vmatprep.subr.bf16.mxu0 0
        %1733 = vmatpush1.bf16.msra.mxu0 0
        %1734 = vmatprep.subr.bf16.mxu0 0
        %1735 = vmatpush1.bf16.msra.mxu0 0
        %1736 = vmatprep.mubr.bf16.mxu0 0
        %1737 = vmatmul.mubr.bf16.gmra.mrb[0].mxu0 %v1702
        %v1738 = vpop.f32.mrb[0].mxu0
        %v1739 = vadd.f32 0.0, %v1738
        %v1740 = vpop.f32.mrb[0].mxu0
        %v1741 = vpop.f32.mrb[0].mxu0
        %v1742 = vpop.f32.mrb[0].mxu0
        %1743 = vdwg.mxu0
        %v1744 = vadd.f32 %v1520, %v1739
        %v1745 = vld [vmem:[%s5] sm:$0x1]
        %v1747 = vlaneseq
        %v1748 = vshrl.u32 %v1747, 7
        %v1749 = vsub.s32 0, %v1748
        %v1750 = vrot.slane %v1745, %v1749
        %v1752 = vadd.f32 %v1744, %v1750
        %v1753 = vadd.f32 %v1752, %v570
        %v1754 = vld [vmem:[#allocation4] sm:$0x1]
        %v1755 = vld [vmem:[#allocation6] sm:$0x1]
        %1756 = vadd.xlane.f32.xlu0 %v1753
        %v1757 = vpop.xlane.xlu0 %1756
        %v1758 = vrcp.pop 128.0
        %v1759 = vmul.f32 %v1757, %v1758
        %v1760 = vsub.f32 %v1753, %v1759
        %v1761 = vmul.f32 %v1760, %v1760
        %1762 = vadd.xlane.f32.xlu0 %v1761
        %v1763 = vpop.xlane.xlu0 %1762
        %v1764 = vmul.f32 %v1763, %v1758
        %v1765 = vadd.f32 %v1764, 1e-12
        %v1766 = vrsqrt.pop %v1765
        %v1767 = vmul.f32 %v1760, %v1766
        %v1769 = vlaneseq
        %v1770 = vshrl.u32 %v1769, 7
        %v1771 = vsub.s32 0, %v1770
        %v1772 = vrot.slane %v1754, %v1771
        %v1774 = vmul.f32 %v1767, %v1772
        %v1776 = vlaneseq
        %v1777 = vshrl.u32 %v1776, 7
        %v1778 = vsub.s32 0, %v1777
        %v1779 = vrot.slane %v1755, %v1778
        %v1781 = vadd.f32 %v1774, %v1779
        %v1782 = vpack.c.bf16 %v1781, %v1781
        %v1783 = vld [vmem:[%s8] sm:$0xff]
        %v1784 = vld [vmem:[%s8 + $0x8] sm:$0xff]
        %v1785 = vld [vmem:[%s8 + $0x10] sm:$0xff]
        %v1786 = vld [vmem:[%s8 + $0x18] sm:$0xff]
        %v1787 = vld [vmem:[%s8 + $0x20] sm:$0xff]
        %v1788 = vld [vmem:[%s8 + $0x28] sm:$0xff]
        %v1789 = vld [vmem:[%s8 + $0x30] sm:$0xff]
        %v1790 = vld [vmem:[%s8 + $0x38] sm:$0xff]
        %v1791 = vld [vmem:[%s8 + $0x40] sm:$0xff]
        %v1792 = vld [vmem:[%s8 + $0x48] sm:$0xff]
        %v1793 = vld [vmem:[%s8 + $0x50] sm:$0xff]
        %v1794 = vld [vmem:[%s8 + $0x58] sm:$0xff]
        %v1795 = vld [vmem:[%s8 + $0x60] sm:$0xff]
        %v1796 = vld [vmem:[%s8 + $0x68] sm:$0xff]
        %v1797 = vld [vmem:[%s8 + $0x70] sm:$0xff]
        %v1798 = vld [vmem:[%s8 + $0x78] sm:$0xff]
        %v1799 = vld [vmem:[%s9] sm:$0x3]
        %v1801 = vlaneseq
        %v1802 = vshrl.u32 %v1801, 7
        %v1803 = vsub.s32 0, %v1802
        %v1804 = vrot.slane %v1799, %v1803
        %v1805 = vlaneseq
        %v1806 = vshrl.u32 %v1805, 7
        %v1807 = vsub.s32 1, %v1806
        %v1808 = vrot.slane %v1799, %v1807
        %v1827 = vunpack.c.l.b16 %v1783
        %v1828 = vunpack.c.h.b16 %v1783
        %v1829 = vunpack.c.l.b16 %v1784
        %v1830 = vunpack.c.h.b16 %v1784
        %v1831 = vunpack.c.l.b16 %v1785
        %v1832 = vunpack.c.h.b16 %v1785
        %v1833 = vunpack.c.l.b16 %v1786
        %v1834 = vunpack.c.h.b16 %v1786
        %v1835 = vunpack.c.l.b16 %v1787
        %v1836 = vunpack.c.h.b16 %v1787
        %v1837 = vunpack.c.l.b16 %v1788
        %v1838 = vunpack.c.h.b16 %v1788
        %v1839 = vunpack.c.l.b16 %v1789
        %v1840 = vunpack.c.h.b16 %v1789
        %v1841 = vunpack.c.l.b16 %v1790
        %v1842 = vunpack.c.h.b16 %v1790
        %v1843 = vunpack.c.l.b16 %v1791
        %v1844 = vunpack.c.h.b16 %v1791
        %v1845 = vunpack.c.l.b16 %v1792
        %v1846 = vunpack.c.h.b16 %v1792
        %v1847 = vunpack.c.l.b16 %v1793
        %v1848 = vunpack.c.h.b16 %v1793
        %v1849 = vunpack.c.l.b16 %v1794
        %v1850 = vunpack.c.h.b16 %v1794
        %v1851 = vunpack.c.l.b16 %v1795
        %v1852 = vunpack.c.h.b16 %v1795
        %v1853 = vunpack.c.l.b16 %v1796
        %v1854 = vunpack.c.h.b16 %v1796
        %v1855 = vunpack.c.l.b16 %v1797
        %v1856 = vunpack.c.h.b16 %v1797
        %v1857 = vunpack.c.l.b16 %v1798
        %v1858 = vunpack.c.h.b16 %v1798
        %v1859 = vpack.c.b16 %v1829, %v1827
        %v1860 = vpack.c.b16 %v1830, %v1828
        %v1861 = vpack.c.b16 %v1833, %v1831
        %v1862 = vpack.c.b16 %v1834, %v1832
        %v1863 = vpack.c.b16 %v1837, %v1835
        %v1864 = vpack.c.b16 %v1838, %v1836
        %v1865 = vpack.c.b16 %v1841, %v1839
        %v1866 = vpack.c.b16 %v1842, %v1840
        %v1867 = vpack.c.b16 %v1845, %v1843
        %v1868 = vpack.c.b16 %v1846, %v1844
        %v1869 = vpack.c.b16 %v1849, %v1847
        %v1870 = vpack.c.b16 %v1850, %v1848
        %v1871 = vpack.c.b16 %v1853, %v1851
        %v1872 = vpack.c.b16 %v1854, %v1852
        %v1873 = vpack.c.b16 %v1857, %v1855
        %v1874 = vpack.c.b16 %v1858, %v1856
        %1891 = vmatprep.subr.bf16.mxu0 %v1860
        %1892 = vmatpush1.bf16.msra.mxu0 %v1859
        %1893 = vmatprep.subr.bf16.mxu0 %v1862
        %1894 = vmatpush1.bf16.msra.mxu0 %v1861
        %1895 = vmatprep.subr.bf16.mxu0 %v1864
        %1896 = vmatpush1.bf16.msra.mxu0 %v1863
        %1897 = vmatprep.subr.bf16.mxu0 %v1866
        %1898 = vmatpush1.bf16.msra.mxu0 %v1865
        %1899 = vmatprep.subr.bf16.mxu0 %v1868
        %1900 = vmatpush1.bf16.msra.mxu0 %v1867
        %1901 = vmatprep.subr.bf16.mxu0 %v1870
        %1902 = vmatpush1.bf16.msra.mxu0 %v1869
        %1903 = vmatprep.subr.bf16.mxu0 %v1872
        %1904 = vmatpush1.bf16.msra.mxu0 %v1871
        %1905 = vmatprep.subr.bf16.mxu0 %v1874
        %1906 = vmatpush1.bf16.msra.mxu0 %v1873
        %1907 = vmatprep.subr.bf16.mxu0 0
        %1908 = vmatpush1.bf16.msra.mxu0 0
        %1909 = vmatprep.subr.bf16.mxu0 0
        %1910 = vmatpush1.bf16.msra.mxu0 0
        %1911 = vmatprep.subr.bf16.mxu0 0
        %1912 = vmatpush1.bf16.msra.mxu0 0
        %1913 = vmatprep.subr.bf16.mxu0 0
        %1914 = vmatpush1.bf16.msra.mxu0 0
        %1915 = vmatprep.subr.bf16.mxu0 0
        %1916 = vmatpush1.bf16.msra.mxu0 0
        %1917 = vmatprep.subr.bf16.mxu0 0
        %1918 = vmatpush1.bf16.msra.mxu0 0
        %1919 = vmatprep.subr.bf16.mxu0 0
        %1920 = vmatpush1.bf16.msra.mxu0 0
        %1921 = vmatprep.subr.bf16.mxu0 0
        %1922 = vmatpush1.bf16.msra.mxu0 0
        %1923 = vmatprep.mubr.bf16.mxu0 0
        %1924 = vmatmul.mubr.bf16.gmra.mrb[0].mxu0 %v1782
        %v1925 = vpop.f32.mrb[0].mxu0
        %v1926 = vadd.f32 %v1804, %v1925
        %v1927 = vpop.f32.mrb[0].mxu0
        %v1928 = vadd.f32 %v1808, %v1927
        %v1929 = vpop.f32.mrb[0].mxu0
        %v1930 = vpop.f32.mrb[0].mxu0
        %1931 = vdwg.mxu0
        %v1932 = vmul.f32 %v1926, %v1926
        %v1933 = vmul.f32 %v1928, %v1928
        %v1934 = vmul.f32 %v1926, %v1932
        %v1935 = vmul.f32 %v1928, %v1933
        %v1936 = vmul.f32 %v1934, 0.044715
        %v1937 = vmul.f32 %v1935, 0.044715
        %v1938 = vadd.f32 %v1926, %v1936
        %v1939 = vadd.f32 %v1928, %v1937
        %v1940 = vmul.f32 %v1938, 0.7978846
        %v1941 = vmul.f32 %v1939, 0.7978846
        %v1942 = vtanh.pop %v1940
        %v1943 = vtanh.pop %v1941
        %v1944 = vadd.f32 %v1942, 1.0
        %v1945 = vadd.f32 %v1943, 1.0
        %v1946 = vmul.f32 %v1944, 0.5
        %v1947 = vmul.f32 %v1945, 0.5
        %v1948 = vmul.f32 %v1926, %v1946
        %v1949 = vmul.f32 %v1928, %v1947
        %v1950 = vpack.c.bf16 %v1948, %v1948
        %v1951 = vpack.c.bf16 %v1949, %v1949
        %v1952 = vld [vmem:[#allocation7] sm:$0xf]
        %v1953 = vld [vmem:[#allocation7 + $0x4] sm:$0xf]
        %v1954 = vld [vmem:[#allocation7 + $0x8] sm:$0xf]
        %v1955 = vld [vmem:[#allocation7 + $0xc] sm:$0xf]
        %v1956 = vld [vmem:[#allocation7 + $0x10] sm:$0xf]
        %v1957 = vld [vmem:[#allocation7 + $0x14] sm:$0xf]
        %v1958 = vld [vmem:[#allocation7 + $0x18] sm:$0xf]
        %v1959 = vld [vmem:[#allocation7 + $0x1c] sm:$0xf]
        %v1960 = vld [vmem:[#allocation7 + $0x20] sm:$0xf]
        %v1961 = vld [vmem:[#allocation7 + $0x24] sm:$0xf]
        %v1962 = vld [vmem:[#allocation7 + $0x28] sm:$0xf]
        %v1963 = vld [vmem:[#allocation7 + $0x2c] sm:$0xf]
        %v1964 = vld [vmem:[#allocation7 + $0x30] sm:$0xf]
        %v1965 = vld [vmem:[#allocation7 + $0x34] sm:$0xf]
        %v1966 = vld [vmem:[#allocation7 + $0x38] sm:$0xf]
        %v1967 = vld [vmem:[#allocation7 + $0x3c] sm:$0xf]
        %v1968 = vld [vmem:[#allocation7 + $0x40] sm:$0xf]
        %v1969 = vld [vmem:[#allocation7 + $0x44] sm:$0xf]
        %v1970 = vld [vmem:[#allocation7 + $0x48] sm:$0xf]
        %v1971 = vld [vmem:[#allocation7 + $0x4c] sm:$0xf]
        %v1972 = vld [vmem:[#allocation7 + $0x50] sm:$0xf]
        %v1973 = vld [vmem:[#allocation7 + $0x54] sm:$0xf]
        %v1974 = vld [vmem:[#allocation7 + $0x58] sm:$0xf]
        %v1975 = vld [vmem:[#allocation7 + $0x5c] sm:$0xf]
        %v1976 = vld [vmem:[#allocation7 + $0x60] sm:$0xf]
        %v1977 = vld [vmem:[#allocation7 + $0x64] sm:$0xf]
        %v1978 = vld [vmem:[#allocation7 + $0x68] sm:$0xf]
        %v1979 = vld [vmem:[#allocation7 + $0x6c] sm:$0xf]
        %v1980 = vld [vmem:[#allocation7 + $0x70] sm:$0xf]
        %v1981 = vld [vmem:[#allocation7 + $0x74] sm:$0xf]
        %v1982 = vld [vmem:[#allocation7 + $0x78] sm:$0xf]
        %v1983 = vld [vmem:[#allocation7 + $0x7c] sm:$0xf]
        %v1984 = vld [vmem:[#allocation9] sm:$0x1]
        %v1986 = vlaneseq
        %v1987 = vshrl.u32 %v1986, 7
        %v1988 = vsub.s32 0, %v1987
        %v1989 = vrot.slane %v1984, %v1988
        %v2023 = vunpack.c.l.b16 %v1952
        %v2024 = vunpack.c.l.b16 %v1953
        %v2025 = vunpack.c.l.b16 %v1954
        %v2026 = vunpack.c.l.b16 %v1955
        %v2027 = vunpack.c.l.b16 %v1956
        %v2028 = vunpack.c.l.b16 %v1957
        %v2029 = vunpack.c.l.b16 %v1958
        %v2030 = vunpack.c.l.b16 %v1959
        %v2031 = vunpack.c.l.b16 %v1960
        %v2032 = vunpack.c.l.b16 %v1961
        %v2033 = vunpack.c.l.b16 %v1962
        %v2034 = vunpack.c.l.b16 %v1963
        %v2035 = vunpack.c.l.b16 %v1964
        %v2036 = vunpack.c.l.b16 %v1965
        %v2037 = vunpack.c.l.b16 %v1966
        %v2038 = vunpack.c.l.b16 %v1967
        %v2039 = vunpack.c.l.b16 %v1968
        %v2040 = vunpack.c.l.b16 %v1969
        %v2041 = vunpack.c.l.b16 %v1970
        %v2042 = vunpack.c.l.b16 %v1971
        %v2043 = vunpack.c.l.b16 %v1972
        %v2044 = vunpack.c.l.b16 %v1973
        %v2045 = vunpack.c.l.b16 %v1974
        %v2046 = vunpack.c.l.b16 %v1975
        %v2047 = vunpack.c.l.b16 %v1976
        %v2048 = vunpack.c.l.b16 %v1977
        %v2049 = vunpack.c.l.b16 %v1978
        %v2050 = vunpack.c.l.b16 %v1979
        %v2051 = vunpack.c.l.b16 %v1980
        %v2052 = vunpack.c.l.b16 %v1981
        %v2053 = vunpack.c.l.b16 %v1982
        %v2054 = vunpack.c.l.b16 %v1983
        %v2055 = vpack.c.b16 %v2024, %v2023
        %v2056 = vpack.c.b16 %v2026, %v2025
        %v2057 = vpack.c.b16 %v2028, %v2027
        %v2058 = vpack.c.b16 %v2030, %v2029
        %v2059 = vpack.c.b16 %v2032, %v2031
        %v2060 = vpack.c.b16 %v2034, %v2033
        %v2061 = vpack.c.b16 %v2036, %v2035
        %v2062 = vpack.c.b16 %v2038, %v2037
        %v2063 = vpack.c.b16 %v2040, %v2039
        %v2064 = vpack.c.b16 %v2042, %v2041
        %v2065 = vpack.c.b16 %v2044, %v2043
        %v2066 = vpack.c.b16 %v2046, %v2045
        %v2067 = vpack.c.b16 %v2048, %v2047
        %v2068 = vpack.c.b16 %v2050, %v2049
        %v2069 = vpack.c.b16 %v2052, %v2051
        %v2070 = vpack.c.b16 %v2054, %v2053
        %2087 = vmatprep.subr.bf16.mxu0 0
        %2088 = vmatpush1.bf16.msra.mxu0 %v2055
        %2089 = vmatprep.subr.bf16.mxu0 0
        %2090 = vmatpush1.bf16.msra.mxu0 %v2056
        %2091 = vmatprep.subr.bf16.mxu0 0
        %2092 = vmatpush1.bf16.msra.mxu0 %v2057
        %2093 = vmatprep.subr.bf16.mxu0 0
        %2094 = vmatpush1.bf16.msra.mxu0 %v2058
        %2095 = vmatprep.subr.bf16.mxu0 0
        %2096 = vmatpush1.bf16.msra.mxu0 %v2059
        %2097 = vmatprep.subr.bf16.mxu0 0
        %2098 = vmatpush1.bf16.msra.mxu0 %v2060
        %2099 = vmatprep.subr.bf16.mxu0 0
        %2100 = vmatpush1.bf16.msra.mxu0 %v2061
        %2101 = vmatprep.subr.bf16.mxu0 0
        %2102 = vmatpush1.bf16.msra.mxu0 %v2062
        %2103 = vmatprep.subr.bf16.mxu0 0
        %2104 = vmatpush1.bf16.msra.mxu0 %v2063
        %2105 = vmatprep.subr.bf16.mxu0 0
        %2106 = vmatpush1.bf16.msra.mxu0 %v2064
        %2107 = vmatprep.subr.bf16.mxu0 0
        %2108 = vmatpush1.bf16.msra.mxu0 %v2065
        %2109 = vmatprep.subr.bf16.mxu0 0
        %2110 = vmatpush1.bf16.msra.mxu0 %v2066
        %2111 = vmatprep.subr.bf16.mxu0 0
        %2112 = vmatpush1.bf16.msra.mxu0 %v2067
        %2113 = vmatprep.subr.bf16.mxu0 0
        %2114 = vmatpush1.bf16.msra.mxu0 %v2068
        %2115 = vmatprep.subr.bf16.mxu0 0
        %2116 = vmatpush1.bf16.msra.mxu0 %v2069
        %2117 = vmatprep.subr.bf16.mxu0 0
        %2118 = vmatpush1.bf16.msra.mxu0 %v2070
        %2119 = vmatprep.mubr.bf16.mxu0 %v1951
        %2120 = vmatmul.mubr.bf16.gmra.mrb[0].mxu0 %v1950
        %v2121 = vpop.f32.mrb[0].mxu0
        %v2122 = vadd.f32 %v1989, %v2121
        %v2123 = vpop.f32.mrb[0].mxu0
        %v2124 = vpop.f32.mrb[0].mxu0
        %v2125 = vpop.f32.mrb[0].mxu0
        %2126 = vdwg.mxu0
        %v2127 = vadd.f32 %v2122, %v1781
        %v2128 = vld [vmem:[#allocation10] sm:$0x1]
        %v2129 = vld [vmem:[#allocation12] sm:$0x1]
        %2130 = vadd.xlane.f32.xlu0 %v2127
        %v2131 = vpop.xlane.xlu0 %2130
        %v2132 = vmul.f32 %v2131, %v1758
        %v2133 = vsub.f32 %v2127, %v2132
        %v2134 = vmul.f32 %v2133, %v2133
        %2135 = vadd.xlane.f32.xlu0 %v2134
        %v2136 = vpop.xlane.xlu0 %2135
        %v2137 = vmul.f32 %v2136, %v1758
        %v2138 = vadd.f32 %v2137, 1e-12
        %v2139 = vrsqrt.pop %v2138
        %v2140 = vmul.f32 %v2133, %v2139
        %v2142 = vlaneseq
        %v2143 = vshrl.u32 %v2142, 7
        %v2144 = vsub.s32 0, %v2143
        %v2145 = vrot.slane %v2128, %v2144
        %v2147 = vmul.f32 %v2140, %v2145
        %v2149 = vlaneseq
        %v2150 = vshrl.u32 %v2149, 7
        %v2151 = vsub.s32 0, %v2150
        %v2152 = vrot.slane %v2129, %v2151
        %v2154 = vadd.f32 %v2147, %v2152
        %2155 = vst [vmem:[%s568] sm:$0xff] %v2154
        %p2156 = scmp.lt.s32.totalorder %s29, 1
        %s2157 = scalar_select %p2156, %s29, 1
        %s2158 = smul.addr %s2157, 8
        %s2159 = scalar_lea.vmem %s14, %s2158
        // Predicated region
        $region105: #{bert_classifier_forward.5} parent=75 // pred_check
          %p2160 = pneg %p351
        $region106: #{bert_classifier_forward.5} parent=75 // pred_check_branch
          %2162 = sbr.rel (%p2160) target = $region108
        $region107: #{bert_classifier_forward.5} parent=75 // pred_region
          _
        $region108: #{bert_classifier_forward.5} parent=75 // pred_fallthru
          _
      $region76: #{bert_classifier_forward.5} parent=5 // pred_fallthru
        _
      %p2163 = scmp.le.s32.totalorder 2, %s24
      // Predicated region
      $region109: #{bert_classifier_forward.5} parent=5 // pred_check
        %p2164 = pneg %p2163
      $region110: #{bert_classifier_forward.5} parent=5 // pred_check_branch
        %2166 = sbr.rel (%p2164) target = $region112
      $region111: #{bert_classifier_forward.5} parent=5 // pred_region
        %s2167 = ssub.s32 %s24, 2
        // Predicated region
        $region113: #{bert_classifier_forward.5} parent=111 // pred_check
          %p2168 = pneg %p357
        $region114: #{bert_classifier_forward.5} parent=111 // pred_check_branch
          %2170 = sbr.rel (%p2168) target = $region116
        $region115: #{bert_classifier_forward.5} parent=111 // pred_region
          %p2171 = scmp.lt.s32.totalorder %s30, 1
          %s2172 = scalar_select %p2171, %s30, 1
          %s2173 = smul.addr %s2172, 8
          %s2174 = scalar_lea.vmem %s14, %s2173
        $region116: #{bert_classifier_forward.5} parent=111 // pred_fallthru
          _
      $region112: #{bert_classifier_forward.5} parent=5 // pred_fallthru
        _
    $region6: #{bert_classifier_forward.5} parent=1 // loop_footer
      %s28 = sadd.s32 1, %s24
    $region7: #{bert_classifier_forward.5} parent=1 // loop_footer_branch
      %23 = sbr.rel target = $region3
    $region8: #{bert_classifier_forward.5} parent=1 // loop_exit
      _
    %2175 = vsyncpa [#allocation3], 1
    %s2176 = scalar_lea.sflag [#allocation3], 1
    %2177 = vsyncpa %s2176, 1
    %2178 = vsyncpa [#allocation5], 1
    %2179 = vsyncpa [#allocation8], 1
    %2180 = vsyncpa [#allocation11], 1

// kernel: bert_classifier_forward.6
$region0: #{bert_classifier_forward.6}
  #allocation0 [shape = 'u32[]', space=smem, size = 0x4, offset = 0x4, fixed_abs, tag = 'smem constant byte address 0x4 - core index']
  #allocation1 [shape = 'u32[144,128]{1,0:T(1,128)}', space=vmem, size = 0x12000, scoped, tag = 'internal scratch']
  %s0 = inlined_call_operand.vmem [shape: f32[2,8,128], index: 0, kind: input, shape index: {}]
  %s1 = inlined_call_operand.vmem [shape: f32[2,1,8], index: 1, kind: input, shape index: {}]
  %s2 = inlined_call_operand.vmem [shape: bf16[128,384], index: 2, kind: input, shape index: {}]
  %s3 = inlined_call_operand.vmem [shape: f32[1,384], index: 3, kind: input, shape index: {}]
  %s4 = inlined_call_operand.vmem [shape: bf16[128,128], index: 4, kind: input, shape index: {}]
  %s5 = inlined_call_operand.vmem [shape: f32[1,128], index: 5, kind: input, shape index: {}]
  %s6 = inlined_call_operand.vmem [shape: f32[1,128], index: 6, kind: input, shape index: {}]
  %s7 = inlined_call_operand.vmem [shape: f32[1,128], index: 7, kind: input, shape index: {}]
  %s8 = inlined_call_operand.vmem [shape: bf16[128,256], index: 8, kind: input, shape index: {}]
  %s9 = inlined_call_operand.vmem [shape: f32[1,256], index: 9, kind: input, shape index: {}]
  %s10 = inlined_call_operand.vmem [shape: bf16[256,128], index: 10, kind: input, shape index: {}]
  %s11 = inlined_call_operand.vmem [shape: f32[1,128], index: 11, kind: input, shape index: {}]
  %s12 = inlined_call_operand.vmem [shape: f32[1,128], index: 12, kind: input, shape index: {}]
  %s13 = inlined_call_operand.vmem [shape: f32[1,128], index: 13, kind: input, shape index: {}]
  %s14 = inlined_call_operand.vmem [shape: f32[2,8,128], index: 14, kind: output, shape index: {}]
  %s15 = sld [smem:[#allocation0]]
  $region89: #{bert_classifier_forward.6} parent=0
    _
  %s17 = ssub.s32 1, %s15
  %s18 = scalar_select 0, %s17, %s15
  loop: start=0, step=1, limit=4
  $region2: #{bert_classifier_forward.6} parent=0 // loop_pre_header
    _
  $region3: #{bert_classifier_forward.6} parent=0 // loop_header
    %s20 = sphi 0, %s24
    %p21 = scmp.ge.s32.totalorder %s20, 4
    %s30 = sphi 0, %s32
    %s33 = sphi 0, %s30
    %s34 = sphi 0, %s33
    %s50 = sphi 0, %s34
    %s56 = sphi 0, %s58
    %s59 = sphi 0, %s56
    %s60 = sphi 0, %s59
    %s76 = sphi 0, %s60
    %s80 = sphi 0, %s80
    %s82 = sphi 0, %s80
    %s83 = sphi 0, %s82
    %s97 = sphi 0, %s83
    %s101 = sphi 0, %s101
    %s103 = sphi 0, %s101
    %s104 = sphi 0, %s103
    %s118 = sphi 0, %s104
    %s122 = sphi 0, %s122
    %s124 = sphi 0, %s122
    %s125 = sphi 0, %s124
    %s139 = sphi 0, %s125
    %s143 = sphi 0, %s143
    %s145 = sphi 0, %s143
    %s146 = sphi 0, %s145
    %s160 = sphi 0, %s146
    %s164 = sphi 0, %s164
    %s166 = sphi 0, %s164
    %s167 = sphi 0, %s166
    %s181 = sphi 0, %s167
    %s185 = sphi 0, %s185
    %s187 = sphi 0, %s185
    %s188 = sphi 0, %s187
    %s202 = sphi 0, %s188
    %s206 = sphi 0, %s206
    %s208 = sphi 0, %s206
    %s209 = sphi 0, %s208
    %s223 = sphi 0, %s209
    %s227 = sphi 0, %s227
    %s229 = sphi 0, %s227
    %s230 = sphi 0, %s229
    %s244 = sphi 0, %s230
    %s248 = sphi 0, %s248
    %s250 = sphi 0, %s248
    %s251 = sphi 0, %s250
    %s265 = sphi 0, %s251
    %s269 = sphi 0, %s269
    %s271 = sphi 0, %s269
    %s272 = sphi 0, %s271
    %s286 = sphi 0, %s272
    %s290 = sphi 0, %s290
    %s292 = sphi 0, %s290
    %s293 = sphi 0, %s292
    %s307 = sphi 0, %s293
    %s311 = sphi 0, %s311
    %s313 = sphi 0, %s311
    %s314 = sphi 0, %s313
    %s328 = sphi 0, %s314
    %s334 = sphi 0, %s336
    %s337 = sphi 0, %s334
    %s338 = sphi 0, %s337
    %s354 = sphi 0, %s338
  $region4: #{bert_classifier_forward.6} parent=0 // loop_header_branch
    %23 = sbr.rel (%p21) target = $region8
  $region5: #{bert_classifier_forward.6} parent=0 // loop_body
    %s25 = ssub.s32 %s20, 1
    %s26 = ssub.s32 %s20, 2
    %s27 = sadd.s32 %s20, 1
    %s28 = ssub.s32 %s20, %s27
    %p29 = scmp.eq.s32.totalorder %s28, 0
    %s31 = sadd.s32 %s30, 1
    %s32 = scalar_select %p29, %s30, %s31
    %p35 = pneg %p29
    %p36 = scmp.eq.s32.totalorder %s20, 1
    %p37 = por %p35, %p36
    %p38 = scmp.ne.s32.totalorder %s30, %s33
    %p39 = scmp.eq.s32.totalorder %s20, 0
    %p40 = por %p38, %p39
    %p41 = scmp.ne.s32.totalorder %s30, %s33
    %p42 = scmp.eq.s32.totalorder %s25, 1
    %p43 = por %p41, %p42
    %p44 = scmp.ne.s32.totalorder %s33, %s34
    %p45 = scmp.eq.s32.totalorder %s25, 0
    %p46 = por %p44, %p45
    %p47 = scmp.ne.s32.totalorder %s33, %s34
    %p48 = scmp.eq.s32.totalorder %s26, 1
    %p49 = por %p47, %p48
    %p51 = scmp.ne.s32.totalorder %s34, %s50
    %p52 = scmp.eq.s32.totalorder %s26, 0
    %p53 = por %p51, %p52
    %s54 = ssub.s32 %s20, %s27
    %p55 = scmp.eq.s32.totalorder %s54, 0
    %s57 = sadd.s32 %s56, 1
    %s58 = scalar_select %p55, %s56, %s57
    %p61 = pneg %p55
    %p62 = scmp.eq.s32.totalorder %s20, 1
    %p63 = por %p61, %p62
    %p64 = scmp.ne.s32.totalorder %s56, %s59
    %p65 = scmp.eq.s32.totalorder %s20, 0
    %p66 = por %p64, %p65
    %p67 = scmp.ne.s32.totalorder %s56, %s59
    %p68 = scmp.eq.s32.totalorder %s25, 1
    %p69 = por %p67, %p68
    %p70 = scmp.ne.s32.totalorder %s59, %s60
    %p71 = scmp.eq.s32.totalorder %s25, 0
    %p72 = por %p70, %p71
    %p73 = scmp.ne.s32.totalorder %s59, %s60
    %p74 = scmp.eq.s32.totalorder %s26, 1
    %p75 = por %p73, %p74
    %p77 = scmp.ne.s32.totalorder %s60, %s76
    %p78 = scmp.eq.s32.totalorder %s26, 0
    %p79 = por %p77, %p78
    %s81 = sadd.s32 %s80, 1
    %p84 = scmp.eq.s32.totalorder %s20, 1
    %p85 = scmp.ne.s32.totalorder %s80, %s82
    %p86 = scmp.eq.s32.totalorder %s20, 0
    %p87 = por %p85, %p86
    %p88 = scmp.ne.s32.totalorder %s80, %s82
    %p89 = scmp.eq.s32.totalorder %s25, 1
    %p90 = por %p88, %p89
    %p91 = scmp.ne.s32.totalorder %s82, %s83
    %p92 = scmp.eq.s32.totalorder %s25, 0
    %p93 = por %p91, %p92
    %p94 = scmp.ne.s32.totalorder %s82, %s83
    %p95 = scmp.eq.s32.totalorder %s26, 1
    %p96 = por %p94, %p95
    %p98 = scmp.ne.s32.totalorder %s83, %s97
    %p99 = scmp.eq.s32.totalorder %s26, 0
    %p100 = por %p98, %p99
    %s102 = sadd.s32 %s101, 1
    %p105 = scmp.eq.s32.totalorder %s20, 1
    %p106 = scmp.ne.s32.totalorder %s101, %s103
    %p107 = scmp.eq.s32.totalorder %s20, 0
    %p108 = por %p106, %p107
    %p109 = scmp.ne.s32.totalorder %s101, %s103
    %p110 = scmp.eq.s32.totalorder %s25, 1
    %p111 = por %p109, %p110
    %p112 = scmp.ne.s32.totalorder %s103, %s104
    %p113 = scmp.eq.s32.totalorder %s25, 0
    %p114 = por %p112, %p113
    %p115 = scmp.ne.s32.totalorder %s103, %s104
    %p116 = scmp.eq.s32.totalorder %s26, 1
    %p117 = por %p115, %p116
    %p119 = scmp.ne.s32.totalorder %s104, %s118
    %p120 = scmp.eq.s32.totalorder %s26, 0
    %p121 = por %p119, %p120
    %s123 = sadd.s32 %s122, 1
    %p126 = scmp.eq.s32.totalorder %s20, 1
    %p127 = scmp.ne.s32.totalorder %s122, %s124
    %p128 = scmp.eq.s32.totalorder %s20, 0
    %p129 = por %p127, %p128
    %p130 = scmp.ne.s32.totalorder %s122, %s124
    %p131 = scmp.eq.s32.totalorder %s25, 1
    %p132 = por %p130, %p131
    %p133 = scmp.ne.s32.totalorder %s124, %s125
    %p134 = scmp.eq.s32.totalorder %s25, 0
    %p135 = por %p133, %p134
    %p136 = scmp.ne.s32.totalorder %s124, %s125
    %p137 = scmp.eq.s32.totalorder %s26, 1
    %p138 = por %p136, %p137
    %p140 = scmp.ne.s32.totalorder %s125, %s139
    %p141 = scmp.eq.s32.totalorder %s26, 0
    %p142 = por %p140, %p141
    %s144 = sadd.s32 %s143, 1
    %p147 = scmp.eq.s32.totalorder %s20, 1
    %p148 = scmp.ne.s32.totalorder %s143, %s145
    %p149 = scmp.eq.s32.totalorder %s20, 0
    %p150 = por %p148, %p149
    %p151 = scmp.ne.s32.totalorder %s143, %s145
    %p152 = scmp.eq.s32.totalorder %s25, 1
    %p153 = por %p151, %p152
    %p154 = scmp.ne.s32.totalorder %s145, %s146
    %p155 = scmp.eq.s32.totalorder %s25, 0
    %p156 = por %p154, %p155
    %p157 = scmp.ne.s32.totalorder %s145, %s146
    %p158 = scmp.eq.s32.totalorder %s26, 1
    %p159 = por %p157, %p158
    %p161 = scmp.ne.s32.totalorder %s146, %s160
    %p162 = scmp.eq.s32.totalorder %s26, 0
    %p163 = por %p161, %p162
    %s165 = sadd.s32 %s164, 1
    %p168 = scmp.eq.s32.totalorder %s20, 1
    %p169 = scmp.ne.s32.totalorder %s164, %s166
    %p170 = scmp.eq.s32.totalorder %s20, 0
    %p171 = por %p169, %p170
    %p172 = scmp.ne.s32.totalorder %s164, %s166
    %p173 = scmp.eq.s32.totalorder %s25, 1
    %p174 = por %p172, %p173
    %p175 = scmp.ne.s32.totalorder %s166, %s167
    %p176 = scmp.eq.s32.totalorder %s25, 0
    %p177 = por %p175, %p176
    %p178 = scmp.ne.s32.totalorder %s166, %s167
    %p179 = scmp.eq.s32.totalorder %s26, 1
    %p180 = por %p178, %p179
    %p182 = scmp.ne.s32.totalorder %s167, %s181
    %p183 = scmp.eq.s32.totalorder %s26, 0
    %p184 = por %p182, %p183
    %s186 = sadd.s32 %s185, 1
    %p189 = scmp.eq.s32.totalorder %s20, 1
    %p190 = scmp.ne.s32.totalorder %s185, %s187
    %p191 = scmp.eq.s32.totalorder %s20, 0
    %p192 = por %p190, %p191
    %p193 = scmp.ne.s32.totalorder %s185, %s187
    %p194 = scmp.eq.s32.totalorder %s25, 1
    %p195 = por %p193, %p194
    %p196 = scmp.ne.s32.totalorder %s187, %s188
    %p197 = scmp.eq.s32.totalorder %s25, 0
    %p198 = por %p196, %p197
    %p199 = scmp.ne.s32.totalorder %s187, %s188
    %p200 = scmp.eq.s32.totalorder %s26, 1
    %p201 = por %p199, %p200
    %p203 = scmp.ne.s32.totalorder %s188, %s202
    %p204 = scmp.eq.s32.totalorder %s26, 0
    %p205 = por %p203, %p204
    %s207 = sadd.s32 %s206, 1
    %p210 = scmp.eq.s32.totalorder %s20, 1
    %p211 = scmp.ne.s32.totalorder %s206, %s208
    %p212 = scmp.eq.s32.totalorder %s20, 0
    %p213 = por %p211, %p212
    %p214 = scmp.ne.s32.totalorder %s206, %s208
    %p215 = scmp.eq.s32.totalorder %s25, 1
    %p216 = por %p214, %p215
    %p217 = scmp.ne.s32.totalorder %s208, %s209
    %p218 = scmp.eq.s32.totalorder %s25, 0
    %p219 = por %p217, %p218
    %p220 = scmp.ne.s32.totalorder %s208, %s209
    %p221 = scmp.eq.s32.totalorder %s26, 1
    %p222 = por %p220, %p221
    %p224 = scmp.ne.s32.totalorder %s209, %s223
    %p225 = scmp.eq.s32.totalorder %s26, 0
    %p226 = por %p224, %p225
    %s228 = sadd.s32 %s227, 1
    %p231 = scmp.eq.s32.totalorder %s20, 1
    %p232 = scmp.ne.s32.totalorder %s227, %s229
    %p233 = scmp.eq.s32.totalorder %s20, 0
    %p234 = por %p232, %p233
    %p235 = scmp.ne.s32.totalorder %s227, %s229
    %p236 = scmp.eq.s32.totalorder %s25, 1
    %p237 = por %p235, %p236
    %p238 = scmp.ne.s32.totalorder %s229, %s230
    %p239 = scmp.eq.s32.totalorder %s25, 0
    %p240 = por %p238, %p239
    %p241 = scmp.ne.s32.totalorder %s229, %s230
    %p242 = scmp.eq.s32.totalorder %s26, 1
    %p243 = por %p241, %p242
    %p245 = scmp.ne.s32.totalorder %s230, %s244
    %p246 = scmp.eq.s32.totalorder %s26, 0
    %p247 = por %p245, %p246
    %s249 = sadd.s32 %s248, 1
    %p252 = scmp.eq.s32.totalorder %s20, 1
    %p253 = scmp.ne.s32.totalorder %s248, %s250
    %p254 = scmp.eq.s32.totalorder %s20, 0
    %p255 = por %p253, %p254
    %p256 = scmp.ne.s32.totalorder %s248, %s250
    %p257 = scmp.eq.s32.totalorder %s25, 1
    %p258 = por %p256, %p257
    %p259 = scmp.ne.s32.totalorder %s250, %s251
    %p260 = scmp.eq.s32.totalorder %s25, 0
    %p261 = por %p259, %p260
    %p262 = scmp.ne.s32.totalorder %s250, %s251
    %p263 = scmp.eq.s32.totalorder %s26, 1
    %p264 = por %p262, %p263
    %p266 = scmp.ne.s32.totalorder %s251, %s265
    %p267 = scmp.eq.s32.totalorder %s26, 0
    %p268 = por %p266, %p267
    %s270 = sadd.s32 %s269, 1
    %p273 = scmp.eq.s32.totalorder %s20, 1
    %p274 = scmp.ne.s32.totalorder %s269, %s271
    %p275 = scmp.eq.s32.totalorder %s20, 0
    %p276 = por %p274, %p275
    %p277 = scmp.ne.s32.totalorder %s269, %s271
    %p278 = scmp.eq.s32.totalorder %s25, 1
    %p279 = por %p277, %p278
    %p280 = scmp.ne.s32.totalorder %s271, %s272
    %p281 = scmp.eq.s32.totalorder %s25, 0
    %p282 = por %p280, %p281
    %p283 = scmp.ne.s32.totalorder %s271, %s272
    %p284 = scmp.eq.s32.totalorder %s26, 1
    %p285 = por %p283, %p284
    %p287 = scmp.ne.s32.totalorder %s272, %s286
    %p288 = scmp.eq.s32.totalorder %s26, 0
    %p289 = por %p287, %p288
    %s291 = sadd.s32 %s290, 1
    %p294 = scmp.eq.s32.totalorder %s20, 1
    %p295 = scmp.ne.s32.totalorder %s290, %s292
    %p296 = scmp.eq.s32.totalorder %s20, 0
    %p297 = por %p295, %p296
    %p298 = scmp.ne.s32.totalorder %s290, %s292
    %p299 = scmp.eq.s32.totalorder %s25, 1
    %p300 = por %p298, %p299
    %p301 = scmp.ne.s32.totalorder %s292, %s293
    %p302 = scmp.eq.s32.totalorder %s25, 0
    %p303 = por %p301, %p302
    %p304 = scmp.ne.s32.totalorder %s292, %s293
    %p305 = scmp.eq.s32.totalorder %s26, 1
    %p306 = por %p304, %p305
    %p308 = scmp.ne.s32.totalorder %s293, %s307
    %p309 = scmp.eq.s32.totalorder %s26, 0
    %p310 = por %p308, %p309
    %s312 = sadd.s32 %s311, 1
    %p315 = scmp.eq.s32.totalorder %s20, 1
    %p316 = scmp.ne.s32.totalorder %s311, %s313
    %p317 = scmp.eq.s32.totalorder %s20, 0
    %p318 = por %p316, %p317
    %p319 = scmp.ne.s32.totalorder %s311, %s313
    %p320 = scmp.eq.s32.totalorder %s25, 1
    %p321 = por %p319, %p320
    %p322 = scmp.ne.s32.totalorder %s313, %s314
    %p323 = scmp.eq.s32.totalorder %s25, 0
    %p324 = por %p322, %p323
    %p325 = scmp.ne.s32.totalorder %s313, %s314
    %p326 = scmp.eq.s32.totalorder %s26, 1
    %p327 = por %p325, %p326
    %p329 = scmp.ne.s32.totalorder %s314, %s328
    %p330 = scmp.eq.s32.totalorder %s26, 0
    %p331 = por %p329, %p330
    %s332 = ssub.s32 %s20, %s27
    %p333 = scmp.eq.s32.totalorder %s332, 0
    %s335 = sadd.s32 %s334, 1
    %s336 = scalar_select %p333, %s334, %s335
    %p339 = pneg %p333
    %p340 = scmp.eq.s32.totalorder %s20, 1
    %p341 = por %p339, %p340
    %p342 = scmp.ne.s32.totalorder %s334, %s337
    %p343 = scmp.eq.s32.totalorder %s20, 0
    %p344 = por %p342, %p343
    %p345 = scmp.ne.s32.totalorder %s334, %s337
    %p346 = scmp.eq.s32.totalorder %s25, 1
    %p347 = por %p345, %p346
    %p348 = scmp.ne.s32.totalorder %s337, %s338
    %p349 = scmp.eq.s32.totalorder %s25, 0
    %p350 = por %p348, %p349
    %p351 = scmp.ne.s32.totalorder %s337, %s338
    %p352 = scmp.eq.s32.totalorder %s26, 1
    %p353 = por %p351, %p352
    %p355 = scmp.ne.s32.totalorder %s338, %s354
    %p356 = scmp.eq.s32.totalorder %s26, 0
    %p357 = por %p355, %p356
    %p358 = scmp.le.s32.totalorder 1, %s20
    %p359 = scmp.lt.s32.totalorder %s20, 3
    %p360 = pnand %p358, %p359
    %p361 = pneg %p360
    // Predicated region
    $region9: #{bert_classifier_forward.6} parent=5 // pred_check
      _
    $region10: #{bert_classifier_forward.6} parent=5 // pred_check_branch
      %363 = sbr.rel (%p360) target = $region12
    $region11: #{bert_classifier_forward.6} parent=5 // pred_region
      %s364 = ssub.s32 %s20, 1
      // Predicated region
      $region13: #{bert_classifier_forward.6} parent=11 // pred_check
        %p365 = pneg %p93
      $region14: #{bert_classifier_forward.6} parent=11 // pred_check_branch
        %367 = sbr.rel (%p365) target = $region16
      $region15: #{bert_classifier_forward.6} parent=11 // pred_region
        _
      $region16: #{bert_classifier_forward.6} parent=11 // pred_fallthru
        _
      // Predicated region
      $region17: #{bert_classifier_forward.6} parent=11 // pred_check
        %p368 = pneg %p114
      $region18: #{bert_classifier_forward.6} parent=11 // pred_check_branch
        %370 = sbr.rel (%p368) target = $region20
      $region19: #{bert_classifier_forward.6} parent=11 // pred_region
        _
      $region20: #{bert_classifier_forward.6} parent=11 // pred_fallthru
        _
      // Predicated region
      $region21: #{bert_classifier_forward.6} parent=11 // pred_check
        %p371 = pneg %p135
      $region22: #{bert_classifier_forward.6} parent=11 // pred_check_branch
        %373 = sbr.rel (%p371) target = $region24
      $region23: #{bert_classifier_forward.6} parent=11 // pred_region
        _
      $region24: #{bert_classifier_forward.6} parent=11 // pred_fallthru
        _
      // Predicated region
      $region25: #{bert_classifier_forward.6} parent=11 // pred_check
        %p374 = pneg %p156
      $region26: #{bert_classifier_forward.6} parent=11 // pred_check_branch
        %376 = sbr.rel (%p374) target = $region28
      $region27: #{bert_classifier_forward.6} parent=11 // pred_region
        _
      $region28: #{bert_classifier_forward.6} parent=11 // pred_fallthru
        _
      // Predicated region
      $region29: #{bert_classifier_forward.6} parent=11 // pred_check
        %p377 = pneg %p177
      $region30: #{bert_classifier_forward.6} parent=11 // pred_check_branch
        %379 = sbr.rel (%p377) target = $region32
      $region31: #{bert_classifier_forward.6} parent=11 // pred_region
        _
      $region32: #{bert_classifier_forward.6} parent=11 // pred_fallthru
        _
      // Predicated region
      $region33: #{bert_classifier_forward.6} parent=11 // pred_check
        %p380 = pneg %p198
      $region34: #{bert_classifier_forward.6} parent=11 // pred_check_branch
        %382 = sbr.rel (%p380) target = $region36
      $region35: #{bert_classifier_forward.6} parent=11 // pred_region
        _
      $region36: #{bert_classifier_forward.6} parent=11 // pred_fallthru
        _
      // Predicated region
      $region37: #{bert_classifier_forward.6} parent=11 // pred_check
        %p383 = pneg %p219
      $region38: #{bert_classifier_forward.6} parent=11 // pred_check_branch
        %385 = sbr.rel (%p383) target = $region40
      $region39: #{bert_classifier_forward.6} parent=11 // pred_region
        _
      $region40: #{bert_classifier_forward.6} parent=11 // pred_fallthru
        _
      // Predicated region
      $region41: #{bert_classifier_forward.6} parent=11 // pred_check
        %p386 = pneg %p240
      $region42: #{bert_classifier_forward.6} parent=11 // pred_check_branch
        %388 = sbr.rel (%p386) target = $region44
      $region43: #{bert_classifier_forward.6} parent=11 // pred_region
        _
      $region44: #{bert_classifier_forward.6} parent=11 // pred_fallthru
        _
      // Predicated region
      $region45: #{bert_classifier_forward.6} parent=11 // pred_check
        %p389 = pneg %p261
      $region46: #{bert_classifier_forward.6} parent=11 // pred_check_branch
        %391 = sbr.rel (%p389) target = $region48
      $region47: #{bert_classifier_forward.6} parent=11 // pred_region
        _
      $region48: #{bert_classifier_forward.6} parent=11 // pred_fallthru
        _
      // Predicated region
      $region49: #{bert_classifier_forward.6} parent=11 // pred_check
        %p392 = pneg %p282
      $region50: #{bert_classifier_forward.6} parent=11 // pred_check_branch
        %394 = sbr.rel (%p392) target = $region52
      $region51: #{bert_classifier_forward.6} parent=11 // pred_region
        _
      $region52: #{bert_classifier_forward.6} parent=11 // pred_fallthru
        _
      // Predicated region
      $region53: #{bert_classifier_forward.6} parent=11 // pred_check
        %p395 = pneg %p303
      $region54: #{bert_classifier_forward.6} parent=11 // pred_check_branch
        %397 = sbr.rel (%p395) target = $region56
      $region55: #{bert_classifier_forward.6} parent=11 // pred_region
        _
      $region56: #{bert_classifier_forward.6} parent=11 // pred_fallthru
        _
      // Predicated region
      $region57: #{bert_classifier_forward.6} parent=11 // pred_check
        %p398 = pneg %p324
      $region58: #{bert_classifier_forward.6} parent=11 // pred_check_branch
        %400 = sbr.rel (%p398) target = $region60
      $region59: #{bert_classifier_forward.6} parent=11 // pred_region
        _
      $region60: #{bert_classifier_forward.6} parent=11 // pred_fallthru
        _
    $region12: #{bert_classifier_forward.6} parent=5 // pred_fallthru
      _
    %p401 = scmp.lt.s32.totalorder %s20, 2
    // Predicated region
    $region61: #{bert_classifier_forward.6} parent=5 // pred_check
      %p402 = pneg %p401
    $region62: #{bert_classifier_forward.6} parent=5 // pred_check_branch
      %404 = sbr.rel (%p402) target = $region64
    $region63: #{bert_classifier_forward.6} parent=5 // pred_region
      // Predicated region
      $region65: #{bert_classifier_forward.6} parent=63 // pred_check
        %p405 = pneg %p40
      $region66: #{bert_classifier_forward.6} parent=63 // pred_check_branch
        %407 = sbr.rel (%p405) target = $region68
      $region67: #{bert_classifier_forward.6} parent=63 // pred_region
        %p408 = scmp.lt.s32.totalorder %s20, 1
        %s409 = scalar_select %p408, %s20, 1
        %s410 = smul.addr %s409, 8
        %s411 = scalar_lea.vmem %s0, %s410
      $region68: #{bert_classifier_forward.6} parent=63 // pred_fallthru
        _
      // Predicated region
      $region69: #{bert_classifier_forward.6} parent=63 // pred_check
        %p412 = pneg %p66
      $region70: #{bert_classifier_forward.6} parent=63 // pred_check_branch
        %414 = sbr.rel (%p412) target = $region72
      $region71: #{bert_classifier_forward.6} parent=63 // pred_region
        %p415 = scmp.lt.s32.totalorder %s20, 1
        %s416 = scalar_select %p415, %s20, 1
        %s417 = scalar_lea.vmem %s1, %s416
      $region72: #{bert_classifier_forward.6} parent=63 // pred_fallthru
        _
    $region64: #{bert_classifier_forward.6} parent=5 // pred_fallthru
      _
    %p418 = scmp.le.s32.totalorder 1, %s20
    %p419 = scmp.lt.s32.totalorder %s20, 3
    %p420 = pnand %p418, %p419
    %p421 = pneg %p420
    // Predicated region
    $region73: #{bert_classifier_forward.6} parent=5 // pred_check
      _
    $region74: #{bert_classifier_forward.6} parent=5 // pred_check_branch
      %423 = sbr.rel (%p420) target = $region76
    $region75: #{bert_classifier_forward.6} parent=5 // pred_region
      %s424 = ssub.s32 %s20, 1
      %p425 = scmp.lt.s32.totalorder %s25, 1
      %s426 = scalar_select %p425, %s25, 1
      %s427 = smul.addr %s426, 8
      %s428 = scalar_lea.vmem %s0, %s427
      %p429 = pneg %p46
      %p430 = pneg %p43
      %p431 = scmp.lt.s32.totalorder %s25, 1
      %s432 = scalar_select %p431, %s25, 1
      %s433 = scalar_lea.vmem %s1, %s432
      %p434 = pneg %p72
      %p435 = pneg %p69
      %p436 = pneg %p93
      %p437 = pneg %p90
      %p438 = pneg %p114
      %p439 = pneg %p111
      %p440 = pneg %p135
      %p441 = pneg %p132
      %p442 = pneg %p156
      %p443 = pneg %p153
      %p444 = pneg %p177
      %p445 = pneg %p174
      %p446 = pneg %p198
      %p447 = pneg %p195
      %p448 = pneg %p219
      %p449 = pneg %p216
      %p450 = pneg %p240
      %p451 = pneg %p237
      %p452 = pneg %p261
      %p453 = pneg %p258
      %p454 = pneg %p282
      %p455 = pneg %p279
      %p456 = pneg %p303
      %p457 = pneg %p300
      %p458 = pneg %p324
      %p459 = pneg %p321
      %p460 = pneg %p350
      %p461 = pneg %p347
      %p462 = scmp.lt.s32.totalorder %s25, 1
      %s463 = scalar_select %p462, %s25, 1
      %s464 = smul.addr %s463, 8
      %s465 = scalar_lea.vmem %s14, %s464
      %p466 = scmp.lt.s32.totalorder %s25, 1
      %s467 = scalar_select %p466, %s25, 1
      %s468 = smul.addr %s467, 8
      %s469 = scalar_lea.vmem %s0, %s468
      %p470 = scmp.lt.s32.totalorder %s25, 1
      %s471 = scalar_select %p470, %s25, 1
      %s472 = scalar_lea.vmem %s1, %s471
      %p473 = scmp.lt.s32.totalorder %s25, 1
      %s474 = scalar_select %p473, %s25, 1
      %s475 = smul.addr %s474, 8
      %s476 = scalar_lea.vmem %s14, %s475
      %v478 = vld [vmem:[%s469] sm:$0xff]
      %v479 = vld [vmem:[%s472] sm:$0x1]
      %v480 = vpack.c.bf16 %v478, %v478
      %v481 = vld [vmem:[%s2] sm:$0xff]
      %v482 = vld [vmem:[%s2 + $0x8] sm:$0xf]
      %v483 = vld [vmem:[%s2 + $0xc] sm:$0xff]
      %v484 = vld [vmem:[%s2 + $0x14] sm:$0xf]
      %v485 = vld [vmem:[%s2 + $0x18] sm:$0xff]
      %v486 = vld [vmem:[%s2 + $0x20] sm:$0xf]
      %v487 = vld [vmem:[%s2 + $0x24] sm:$0xff]
      %v488 = vld [vmem:[%s2 + $0x2c] sm:$0xf]
      %v489 = vld [vmem:[%s2 + $0x30] sm:$0xff]
      %v490 = vld [vmem:[%s2 + $0x38] sm:$0xf]
      %v491 = vld [vmem:[%s2 + $0x3c] sm:$0xff]
      %v492 = vld [vmem:[%s2 + $0x44] sm:$0xf]
      %v493 = vld [vmem:[%s2 + $0x48] sm:$0xff]
      %v494 = vld [vmem:[%s2 + $0x50] sm:$0xf]
      %v495 = vld [vmem:[%s2 + $0x54] sm:$0xff]
      %v496 = vld [vmem:[%s2 + $0x5c] sm:$0xf]
      %v497 = vld [vmem:[%s2 + $0x60] sm:$0xff]
      %v498 = vld [vmem:[%s2 + $0x68] sm:$0xf]
      %v499 = vld [vmem:[%s2 + $0x6c] sm:$0xff]
      %v500 = vld [vmem:[%s2 + $0x74] sm:$0xf]
      %v501 = vld [vmem:[%s2 + $0x78] sm:$0xff]
      %v502 = vld [vmem:[%s2 + $0x80] sm:$0xf]
      %v503 = vld [vmem:[%s2 + $0x84] sm:$0xff]
      %v504 = vld [vmem:[%s2 + $0x8c] sm:$0xf]
      %v505 = vld [vmem:[%s2 + $0x90] sm:$0xff]
      %v506 = vld [vmem:[%s2 + $0x98] sm:$0xf]
      %v507 = vld [vmem:[%s2 + $0x9c] sm:$0xff]
      %v508 = vld [vmem:[%s2 + $0xa4] sm:$0xf]
      %v509 = vld [vmem:[%s2 + $0xa8] sm:$0xff]
      %v510 = vld [vmem:[%s2 + $0xb0] sm:$0xf]
      %v511 = vld [vmem:[%s2 + $0xb4] sm:$0xff]
      %v512 = vld [vmem:[%s2 + $0xbc] sm:$0xf]
      %v513 = vld [vmem:[%s3] sm:$0x7]
      %v515 = vlaneseq
      %v516 = vshrl.u32 %v515, 7
      %v517 = vsub.s32 0, %v516
      %v518 = vrot.slane %v513, %v517
      %v519 = vlaneseq
      %v520 = vshrl.u32 %v519, 7
      %v521 = vsub.s32 1, %v520
      %v522 = vrot.slane %v513, %v521
      %v523 = vlaneseq
      %v524 = vshrl.u32 %v523, 7
      %v525 = vsub.s32 2, %v524
      %v526 = vrot.slane %v513, %v525
      %v562 = vunpack.c.l.b16 %v481
      %v563 = vunpack.c.h.b16 %v481
      %v564 = vunpack.c.l.b16 %v482
      %v565 = vunpack.c.l.b16 %v483
      %v566 = vunpack.c.h.b16 %v483
      %v567 = vunpack.c.l.b16 %v484
      %v568 = vunpack.c.l.b16 %v485
      %v569 = vunpack.c.h.b16 %v485
      %v570 = vunpack.c.l.b16 %v486
      %v571 = vunpack.c.l.b16 %v487
      %v572 = vunpack.c.h.b16 %v487
      %v573 = vunpack.c.l.b16 %v488
      %v574 = vunpack.c.l.b16 %v489
      %v575 = vunpack.c.h.b16 %v489
      %v576 = vunpack.c.l.b16 %v490
      %v577 = vunpack.c.l.b16 %v491
      %v578 = vunpack.c.h.b16 %v491
      %v579 = vunpack.c.l.b16 %v492
      %v580 = vunpack.c.l.b16 %v493
      %v581 = vunpack.c.h.b16 %v493
      %v582 = vunpack.c.l.b16 %v494
      %v583 = vunpack.c.l.b16 %v495
      %v584 = vunpack.c.h.b16 %v495
      %v585 = vunpack.c.l.b16 %v496
      %v586 = vunpack.c.l.b16 %v497
      %v587 = vunpack.c.h.b16 %v497
      %v588 = vunpack.c.l.b16 %v498
      %v589 = vunpack.c.l.b16 %v499
      %v590 = vunpack.c.h.b16 %v499
      %v591 = vunpack.c.l.b16 %v500
      %v592 = vunpack.c.l.b16 %v501
      %v593 = vunpack.c.h.b16 %v501
      %v594 = vunpack.c.l.b16 %v502
      %v595 = vunpack.c.l.b16 %v503
      %v596 = vunpack.c.h.b16 %v503
      %v597 = vunpack.c.l.b16 %v504
      %v598 = vunpack.c.l.b16 %v505
      %v599 = vunpack.c.h.b16 %v505
      %v600 = vunpack.c.l.b16 %v506
      %v601 = vunpack.c.l.b16 %v507
      %v602 = vunpack.c.h.b16 %v507
      %v603 = vunpack.c.l.b16 %v508
      %v604 = vunpack.c.l.b16 %v509
      %v605 = vunpack.c.h.b16 %v509
      %v606 = vunpack.c.l.b16 %v510
      %v607 = vunpack.c.l.b16 %v511
      %v608 = vunpack.c.h.b16 %v511
      %v609 = vunpack.c.l.b16 %v512
      %v610 = vpack.c.b16 %v565, %v562
      %v611 = vpack.c.b16 %v566, %v563
      %v612 = vpack.c.b16 %v567, %v564
      %v613 = vpack.c.b16 %v571, %v568
      %v614 = vpack.c.b16 %v572, %v569
      %v615 = vpack.c.b16 %v573, %v570
      %v616 = vpack.c.b16 %v577, %v574
      %v617 = vpack.c.b16 %v578, %v575
      %v618 = vpack.c.b16 %v579, %v576
      %v619 = vpack.c.b16 %v583, %v580
      %v620 = vpack.c.b16 %v584, %v581
      %v621 = vpack.c.b16 %v585, %v582
      %v622 = vpack.c.b16 %v589, %v586
      %v623 = vpack.c.b16 %v590, %v587
      %v624 = vpack.c.b16 %v591, %v588
      %v625 = vpack.c.b16 %v595, %v592
      %v626 = vpack.c.b16 %v596, %v593
      %v627 = vpack.c.b16 %v597, %v594
      %v628 = vpack.c.b16 %v601, %v598
      %v629 = vpack.c.b16 %v602, %v599
      %v630 = vpack.c.b16 %v603, %v600
      %v631 = vpack.c.b16 %v607, %v604
      %v632 = vpack.c.b16 %v608, %v605
      %v633 = vpack.c.b16 %v609, %v606
      %658 = vmatprep.subr.bf16.mxu0 %v611
      %659 = vmatpush1.bf16.msra.mxu0 %v610
      %660 = vmatprep.subr.bf16.mxu0 %v614
      %661 = vmatpush1.bf16.msra.mxu0 %v613
      %662 = vmatprep.subr.bf16.mxu0 %v617
      %663 = vmatpush1.bf16.msra.mxu0 %v616
      %664 = vmatprep.subr.bf16.mxu0 %v620
      %665 = vmatpush1.bf16.msra.mxu0 %v619
      %666 = vmatprep.subr.bf16.mxu0 %v623
      %667 = vmatpush1.bf16.msra.mxu0 %v622
      %668 = vmatprep.subr.bf16.mxu0 %v626
      %669 = vmatpush1.bf16.msra.mxu0 %v625
      %670 = vmatprep.subr.bf16.mxu0 %v629
      %671 = vmatpush1.bf16.msra.mxu0 %v628
      %672 = vmatprep.subr.bf16.mxu0 %v632
      %673 = vmatpush1.bf16.msra.mxu0 %v631
      %674 = vmatprep.subr.bf16.mxu0 0
      %675 = vmatpush1.bf16.msra.mxu0 0
      %676 = vmatprep.subr.bf16.mxu0 0
      %677 = vmatpush1.bf16.msra.mxu0 0
      %678 = vmatprep.subr.bf16.mxu0 0
      %679 = vmatpush1.bf16.msra.mxu0 0
      %680 = vmatprep.subr.bf16.mxu0 0
      %681 = vmatpush1.bf16.msra.mxu0 0
      %682 = vmatprep.subr.bf16.mxu0 0
      %683 = vmatpush1.bf16.msra.mxu0 0
      %684 = vmatprep.subr.bf16.mxu0 0
      %685 = vmatpush1.bf16.msra.mxu0 0
      %686 = vmatprep.subr.bf16.mxu0 0
      %687 = vmatpush1.bf16.msra.mxu0 0
      %688 = vmatprep.subr.bf16.mxu0 0
      %689 = vmatpush1.bf16.msra.mxu0 0
      %690 = vmatprep.mubr.bf16.mxu0 0
      %691 = vmatmul.mubr.bf16.gmra.mrb[0].mxu0 %v480
      %v692 = vpop.f32.mrb[0].mxu0
      %v693 = vadd.f32 %v518, %v692
      %v694 = vpop.f32.mrb[0].mxu0
      %v695 = vadd.f32 %v522, %v694
      %v696 = vpop.f32.mrb[0].mxu0
      %v697 = vpop.f32.mrb[0].mxu0
      %698 = vdwg.mxu0
      %699 = vmatprep.subr.bf16.mxu0 0
      %700 = vmatpush1.bf16.msra.mxu0 %v612
      %701 = vmatprep.subr.bf16.mxu0 0
      %702 = vmatpush1.bf16.msra.mxu0 %v615
      %703 = vmatprep.subr.bf16.mxu0 0
      %704 = vmatpush1.bf16.msra.mxu0 %v618
      %705 = vmatprep.subr.bf16.mxu0 0
      %706 = vmatpush1.bf16.msra.mxu0 %v621
      %707 = vmatprep.subr.bf16.mxu0 0
      %708 = vmatpush1.bf16.msra.mxu0 %v624
      %709 = vmatprep.subr.bf16.mxu0 0
      %710 = vmatpush1.bf16.msra.mxu0 %v627
      %711 = vmatprep.subr.bf16.mxu0 0
      %712 = vmatpush1.bf16.msra.mxu0 %v630
      %713 = vmatprep.subr.bf16.mxu0 0
      %714 = vmatpush1.bf16.msra.mxu0 %v633
      %715 = vmatprep.subr.bf16.mxu0 0
      %716 = vmatpush1.bf16.msra.mxu0 0
      %717 = vmatprep.subr.bf16.mxu0 0
      %718 = vmatpush1.bf16.msra.mxu0 0
      %719 = vmatprep.subr.bf16.mxu0 0
      %720 = vmatpush1.bf16.msra.mxu0 0
      %721 = vmatprep.subr.bf16.mxu0 0
      %722 = vmatpush1.bf16.msra.mxu0 0
      %723 = vmatprep.subr.bf16.mxu0 0
      %724 = vmatpush1.bf16.msra.mxu0 0
      %725 = vmatprep.subr.bf16.mxu0 0
      %726 = vmatpush1.bf16.msra.mxu0 0
      %727 = vmatprep.subr.bf16.mxu0 0
      %728 = vmatpush1.bf16.msra.mxu0 0
      %729 = vmatprep.subr.bf16.mxu0 0
      %730 = vmatpush1.bf16.msra.mxu0 0
      %731 = vmatprep.mubr.bf16.mxu0 0
      %732 = vmatmul.mubr.bf16.gmra.mrb[0].mxu0 %v480
      %v733 = vpop.f32.mrb[0].mxu0
      %v734 = vadd.f32 %v526, %v733
      %v735 = vpop.f32.mrb[0].mxu0
      %v736 = vpop.f32.mrb[0].mxu0
      %v737 = vpop.f32.mrb[0].mxu0
      %738 = vdwg.mxu0
      %v739 = vld [vmem:[%s4] sm:$0xf]
      %v740 = vld [vmem:[%s4 + $0x4] sm:$0xf]
      %v741 = vld [vmem:[%s4 + $0x8] sm:$0xf]
      %v742 = vld [vmem:[%s4 + $0xc] sm:$0xf]
      %v743 = vld [vmem:[%s4 + $0x10] sm:$0xf]
      %v744 = vld [vmem:[%s4 + $0x14] sm:$0xf]
      %v745 = vld [vmem:[%s4 + $0x18] sm:$0xf]
      %v746 = vld [vmem:[%s4 + $0x1c] sm:$0xf]
      %v747 = vld [vmem:[%s4 + $0x20] sm:$0xf]
      %v748 = vld [vmem:[%s4 + $0x24] sm:$0xf]
      %v749 = vld [vmem:[%s4 + $0x28] sm:$0xf]
      %v750 = vld [vmem:[%s4 + $0x2c] sm:$0xf]
      %v751 = vld [vmem:[%s4 + $0x30] sm:$0xf]
      %v752 = vld [vmem:[%s4 + $0x34] sm:$0xf]
      %v753 = vld [vmem:[%s4 + $0x38] sm:$0xf]
      %v754 = vld [vmem:[%s4 + $0x3c] sm:$0xf]
      %vm755 = vcmask 261120
      %v757 = vsel %vm755, %v693, 0
      %v760 = vsel %vm755, %v695, 0
      %762 = vmatprep.subr.mxu0 0.0
      %763 = vmatpush1.xpose.msra.mxu0 %v760
      %764 = vmatprep.subr.mxu0 0.0
      %765 = vmatpush1.xpose.msra.mxu0 0.0
      %766 = vmatprep.subr.mxu0 0.0
      %767 = vmatpush1.xpose.msra.mxu0 0.0
      %768 = vmatprep.subr.mxu0 0.0
      %769 = vmatpush1.xpose.msra.mxu0 0.0
      %770 = vmatprep.subr.mxu0 0.0
      %771 = vmatpush1.xpose.msra.mxu0 0.0
      %772 = vmatprep.subr.mxu0 0.0
      %773 = vmatpush1.xpose.msra.mxu0 0.0
      %774 = vmatprep.subr.mxu0 0.0
      %775 = vmatpush1.xpose.msra.mxu0 0.0
      %776 = vmatprep.subr.mxu0 0.0
      %777 = vmatpush1.xpose.msra.mxu0 0.0
      %778 = vmatprep.subr.mxu0 0.0
      %779 = vmatpush1.xpose.msra.mxu0 0.0
      %780 = vmatprep.subr.mxu0 0.0
      %781 = vmatpush1.xpose.msra.mxu0 0.0
      %782 = vmatprep.subr.mxu0 0.0
      %783 = vmatpush1.xpose.msra.mxu0 0.0
      %784 = vmatprep.subr.mxu0 0.0
      %785 = vmatpush1.xpose.msra.mxu0 0.0
      %786 = vmatprep.subr.mxu0 0.0
      %787 = vmatpush1.xpose.msra.mxu0 0.0
      %788 = vmatprep.subr.mxu0 0.0
      %789 = vmatpush1.xpose.msra.mxu0 0.0
      %790 = vmatprep.subr.mxu0 0.0
      %791 = vmatpush1.xpose.msra.mxu0 0.0
      %792 = vmatprep.subr.mxu0 0.0
      %793 = vmatpush1.xpose.msra.mxu0 0.0
      %794 = vmatprep.subr.mxu0 0.0
      %795 = vmatpush1.xpose.msra.mxu0 0.0
      %796 = vmatprep.subr.mxu0 0.0
      %797 = vmatpush1.xpose.msra.mxu0 0.0
      %798 = vmatprep.subr.mxu0 0.0
      %799 = vmatpush1.xpose.msra.mxu0 0.0
      %800 = vmatprep.subr.mxu0 0.0
      %801 = vmatpush1.xpose.msra.mxu0 0.0
      %802 = vmatprep.subr.mxu0 0.0
      %803 = vmatpush1.xpose.msra.mxu0 0.0
      %804 = vmatprep.subr.mxu0 0.0
      %805 = vmatpush1.xpose.msra.mxu0 0.0
      %806 = vmatprep.subr.mxu0 0.0
      %807 = vmatpush1.xpose.msra.mxu0 0.0
      %808 = vmatprep.subr.mxu0 0.0
      %809 = vmatpush1.xpose.msra.mxu0 0.0
      %810 = vmatprep.subr.mxu0 0.0
      %811 = vmatpush1.xpose.msra.mxu0 0.0
      %812 = vmatprep.subr.mxu0 0.0
      %813 = vmatpush1.xpose.msra.mxu0 0.0
      %814 = vmatprep.subr.mxu0 0.0
      %815 = vmatpush1.xpose.msra.mxu0 0.0
      %816 = vmatprep.subr.mxu0 0.0
      %817 = vmatpush1.xpose.msra.mxu0 0.0
      %818 = vmatprep.subr.mxu0 0.0
      %819 = vmatpush1.xpose.msra.mxu0 0.0
      %820 = vmatprep.subr.mxu0 0.0
      %821 = vmatpush1.xpose.msra.mxu0 0.0
      %822 = vmatprep.subr.mxu0 0.0
      %823 = vmatpush1.xpose.msra.mxu0 0.0
      %824 = vmatprep.subr.mxu0 0.0
      %825 = vmatpush1.xpose.msra.mxu0 0.0
      %826 = vmatprep.mubr.f32.mxu0 0.0
      %827 = vmatmul.mubr.f32.gmra.mrb[0].mxu0 %v757
      %v828 = vpop.f32.mrb[0].mxu0
      %v829 = vadd.f32 0.0, %v828
      %v830 = vpop.f32.mrb[0].mxu0
      %831 = vdwg.mxu0
      %v832 = vmul.f32 %v829, 0.17677669
      %v834 = vlaneseq
      %v835 = vshrl.u32 %v834, 7
      %v836 = vsub.s32 0, %v835
      %v837 = vrot.slane %v479, %v836
      %v839 = vadd.f32 %v832, %v837
      %vm840 = vcmask 64512
      %v841 = vsel %vm840, %v839, -inf
      %842 = vmax.xlane.f32.xlu0 %v841
      %v843 = vpop.xlane.xlu0 %842
      %v844 = vsub.f32 %v839, %v843
      %v845 = vmul.f32 %v844, 1.442695
      %v846 = vpow.pop %v845
      %v847 = vsel %vm840, %v846, 0.0
      %848 = vadd.xlane.f32.xlu0 %v847
      %v849 = vpop.xlane.xlu0 %848
      %v850 = vrcp.pop %v849
      %v851 = vmul.f32 %v846, %v850
      %v853 = vsel %vm840, %v851, 0
      %855 = vmatprep.subr.mxu0 0.0
      %856 = vmatpush1.msra.mxu0 %v734
      %857 = vmatprep.subr.mxu0 0.0
      %858 = vmatpush1.msra.mxu0 0.0
      %859 = vmatprep.subr.mxu0 0.0
      %860 = vmatpush1.msra.mxu0 0.0
      %861 = vmatprep.subr.mxu0 0.0
      %862 = vmatpush1.msra.mxu0 0.0
      %863 = vmatprep.subr.mxu0 0.0
      %864 = vmatpush1.msra.mxu0 0.0
      %865 = vmatprep.subr.mxu0 0.0
      %866 = vmatpush1.msra.mxu0 0.0
      %867 = vmatprep.subr.mxu0 0.0
      %868 = vmatpush1.msra.mxu0 0.0
      %869 = vmatprep.subr.mxu0 0.0
      %870 = vmatpush1.msra.mxu0 0.0
      %871 = vmatprep.subr.mxu0 0.0
      %872 = vmatpush1.msra.mxu0 0.0
      %873 = vmatprep.subr.mxu0 0.0
      %874 = vmatpush1.msra.mxu0 0.0
      %875 = vmatprep.subr.mxu0 0.0
      %876 = vmatpush1.msra.mxu0 0.0
      %877 = vmatprep.subr.mxu0 0.0
      %878 = vmatpush1.msra.mxu0 0.0
      %879 = vmatprep.subr.mxu0 0.0
      %880 = vmatpush1.msra.mxu0 0.0
      %881 = vmatprep.subr.mxu0 0.0
      %882 = vmatpush1.msra.mxu0 0.0
      %883 = vmatprep.subr.mxu0 0.0
      %884 = vmatpush1.msra.mxu0 0.0
      %885 = vmatprep.subr.mxu0 0.0
      %886 = vmatpush1.msra.mxu0 0.0
      %887 = vmatprep.subr.mxu0 0.0
      %888 = vmatpush1.msra.mxu0 0.0
      %889 = vmatprep.subr.mxu0 0.0
      %890 = vmatpush1.msra.mxu0 0.0
      %891 = vmatprep.subr.mxu0 0.0
      %892 = vmatpush1.msra.mxu0 0.0
      %893 = vmatprep.subr.mxu0 0.0
      %894 = vmatpush1.msra.mxu0 0.0
      %895 = vmatprep.subr.mxu0 0.0
      %896 = vmatpush1.msra.mxu0 0.0
      %897 = vmatprep.subr.mxu0 0.0
      %898 = vmatpush1.msra.mxu0 0.0
      %899 = vmatprep.subr.mxu0 0.0
      %900 = vmatpush1.msra.mxu0 0.0
      %901 = vmatprep.subr.mxu0 0.0
      %902 = vmatpush1.msra.mxu0 0.0
      %903 = vmatprep.subr.mxu0 0.0
      %904 = vmatpush1.msra.mxu0 0.0
      %905 = vmatprep.subr.mxu0 0.0
      %906 = vmatpush1.msra.mxu0 0.0
      %907 = vmatprep.subr.mxu0 0.0
      %908 = vmatpush1.msra.mxu0 0.0
      %909 = vmatprep.subr.mxu0 0.0
      %910 = vmatpush1.msra.mxu0 0.0
      %911 = vmatprep.subr.mxu0 0.0
      %912 = vmatpush1.msra.mxu0 0.0
      %913 = vmatprep.subr.mxu0 0.0
      %914 = vmatpush1.msra.mxu0 0.0
      %915 = vmatprep.subr.mxu0 0.0
      %916 = vmatpush1.msra.mxu0 0.0
      %917 = vmatprep.subr.mxu0 0.0
      %918 = vmatpush1.msra.mxu0 0.0
      %919 = vmatprep.mubr.f32.mxu0 0.0
      %920 = vmatmul.mubr.f32.gmra.mrb[0].mxu0 %v853
      %v921 = vpop.f32.mrb[0].mxu0
      %v922 = vadd.f32 0.0, %v921
      %v923 = vpop.f32.mrb[0].mxu0
      %924 = vdwg.mxu0
      %v925 = vpack.c.bf16 %v922, %v922
      %926 = vrot.lane.b32.xlu0 %v693, 96
      %v927 = vpop.permute.xlu0 %926
      %928 = vrot.lane.b32.xlu0 %v695, 96
      %v929 = vpop.permute.xlu0 %928
      %v930 = vsel %vm755, %v927, 0
      %v932 = vsel %vm755, %v929, 0
      %934 = vmatprep.subr.mxu0 0.0
      %935 = vmatpush1.xpose.msra.mxu0 %v932
      %936 = vmatprep.subr.mxu0 0.0
      %937 = vmatpush1.xpose.msra.mxu0 0.0
      %938 = vmatprep.subr.mxu0 0.0
      %939 = vmatpush1.xpose.msra.mxu0 0.0
      %940 = vmatprep.subr.mxu0 0.0
      %941 = vmatpush1.xpose.msra.mxu0 0.0
      %942 = vmatprep.subr.mxu0 0.0
      %943 = vmatpush1.xpose.msra.mxu0 0.0
      %944 = vmatprep.subr.mxu0 0.0
      %945 = vmatpush1.xpose.msra.mxu0 0.0
      %946 = vmatprep.subr.mxu0 0.0
      %947 = vmatpush1.xpose.msra.mxu0 0.0
      %948 = vmatprep.subr.mxu0 0.0
      %949 = vmatpush1.xpose.msra.mxu0 0.0
      %950 = vmatprep.subr.mxu0 0.0
      %951 = vmatpush1.xpose.msra.mxu0 0.0
      %952 = vmatprep.subr.mxu0 0.0
      %953 = vmatpush1.xpose.msra.mxu0 0.0
      %954 = vmatprep.subr.mxu0 0.0
      %955 = vmatpush1.xpose.msra.mxu0 0.0
      %956 = vmatprep.subr.mxu0 0.0
      %957 = vmatpush1.xpose.msra.mxu0 0.0
      %958 = vmatprep.subr.mxu0 0.0
      %959 = vmatpush1.xpose.msra.mxu0 0.0
      %960 = vmatprep.subr.mxu0 0.0
      %961 = vmatpush1.xpose.msra.mxu0 0.0
      %962 = vmatprep.subr.mxu0 0.0
      %963 = vmatpush1.xpose.msra.mxu0 0.0
      %964 = vmatprep.subr.mxu0 0.0
      %965 = vmatpush1.xpose.msra.mxu0 0.0
      %966 = vmatprep.subr.mxu0 0.0
      %967 = vmatpush1.xpose.msra.mxu0 0.0
      %968 = vmatprep.subr.mxu0 0.0
      %969 = vmatpush1.xpose.msra.mxu0 0.0
      %970 = vmatprep.subr.mxu0 0.0
      %971 = vmatpush1.xpose.msra.mxu0 0.0
      %972 = vmatprep.subr.mxu0 0.0
      %973 = vmatpush1.xpose.msra.mxu0 0.0
      %974 = vmatprep.subr.mxu0 0.0
      %975 = vmatpush1.xpose.msra.mxu0 0.0
      %976 = vmatprep.subr.mxu0 0.0
      %977 = vmatpush1.xpose.msra.mxu0 0.0
      %978 = vmatprep.subr.mxu0 0.0
      %979 = vmatpush1.xpose.msra.mxu0 0.0
      %980 = vmatprep.subr.mxu0 0.0
      %981 = vmatpush1.xpose.msra.mxu0 0.0
      %982 = vmatprep.subr.mxu0 0.0
      %983 = vmatpush1.xpose.msra.mxu0 0.0
      %984 = vmatprep.subr.mxu0 0.0
      %985 = vmatpush1.xpose.msra.mxu0 0.0
      %986 = vmatprep.subr.mxu0 0.0
      %987 = vmatpush1.xpose.msra.mxu0 0.0
      %988 = vmatprep.subr.mxu0 0.0
      %989 = vmatpush1.xpose.msra.mxu0 0.0
      %990 = vmatprep.subr.mxu0 0.0
      %991 = vmatpush1.xpose.msra.mxu0 0.0
      %992 = vmatprep.subr.mxu0 0.0
      %993 = vmatpush1.xpose.msra.mxu0 0.0
      %994 = vmatprep.subr.mxu0 0.0
      %995 = vmatpush1.xpose.msra.mxu0 0.0
      %996 = vmatprep.subr.mxu0 0.0
      %997 = vmatpush1.xpose.msra.mxu0 0.0
      %998 = vmatprep.mubr.f32.mxu0 0.0
      %999 = vmatmul.mubr.f32.gmra.mrb[0].mxu0 %v930
      %v1000 = vpop.f32.mrb[0].mxu0
      %v1001 = vadd.f32 0.0, %v1000
      %v1002 = vpop.f32.mrb[0].mxu0
      %1003 = vdwg.mxu0
      %v1004 = vmul.f32 %v1001, 0.17677669
      %v1005 = vadd.f32 %v1004, %v837
      %v1006 = vsel %vm840, %v1005, -inf
      %1007 = vmax.xlane.f32.xlu0 %v1006
      %v1008 = vpop.xlane.xlu0 %1007
      %v1009 = vsub.f32 %v1005, %v1008
      %v1010 = vmul.f32 %v1009, 1.442695
      %v1011 = vpow.pop %v1010
      %v1012 = vsel %vm840, %v1011, 0.0
      %1013 = vadd.xlane.f32.xlu0 %v1012
      %v1014 = vpop.xlane.xlu0 %1013
      %v1015 = vrcp.pop %v1014
      %v1016 = vmul.f32 %v1011, %v1015
      %1018 = vrot.lane.b32.xlu0 %v734, 96
      %v1019 = vpop.permute.xlu0 %1018
      %v1022 = vsel %vm840, %v1016, 0
      %1024 = vmatprep.subr.mxu0 0.0
      %1025 = vmatpush1.msra.mxu0 %v1019
      %1026 = vmatprep.subr.mxu0 0.0
      %1027 = vmatpush1.msra.mxu0 0.0
      %1028 = vmatprep.subr.mxu0 0.0
      %1029 = vmatpush1.msra.mxu0 0.0
      %1030 = vmatprep.subr.mxu0 0.0
      %1031 = vmatpush1.msra.mxu0 0.0
      %1032 = vmatprep.subr.mxu0 0.0
      %1033 = vmatpush1.msra.mxu0 0.0
      %1034 = vmatprep.subr.mxu0 0.0
      %1035 = vmatpush1.msra.mxu0 0.0
      %1036 = vmatprep.subr.mxu0 0.0
      %1037 = vmatpush1.msra.mxu0 0.0
      %1038 = vmatprep.subr.mxu0 0.0
      %1039 = vmatpush1.msra.mxu0 0.0
      %1040 = vmatprep.subr.mxu0 0.0
      %1041 = vmatpush1.msra.mxu0 0.0
      %1042 = vmatprep.subr.mxu0 0.0
      %1043 = vmatpush1.msra.mxu0 0.0
      %1044 = vmatprep.subr.mxu0 0.0
      %1045 = vmatpush1.msra.mxu0 0.0
      %1046 = vmatprep.subr.mxu0 0.0
      %1047 = vmatpush1.msra.mxu0 0.0
      %1048 = vmatprep.subr.mxu0 0.0
      %1049 = vmatpush1.msra.mxu0 0.0
      %1050 = vmatprep.subr.mxu0 0.0
      %1051 = vmatpush1.msra.mxu0 0.0
      %1052 = vmatprep.subr.mxu0 0.0
      %1053 = vmatpush1.msra.mxu0 0.0
      %1054 = vmatprep.subr.mxu0 0.0
      %1055 = vmatpush1.msra.mxu0 0.0
      %1056 = vmatprep.subr.mxu0 0.0
      %1057 = vmatpush1.msra.mxu0 0.0
      %1058 = vmatprep.subr.mxu0 0.0
      %1059 = vmatpush1.msra.mxu0 0.0
      %1060 = vmatprep.subr.mxu0 0.0
      %1061 = vmatpush1.msra.mxu0 0.0
      %1062 = vmatprep.subr.mxu0 0.0
      %1063 = vmatpush1.msra.mxu0 0.0
      %1064 = vmatprep.subr.mxu0 0.0
      %1065 = vmatpush1.msra.mxu0 0.0
      %1066 = vmatprep.subr.mxu0 0.0
      %1067 = vmatpush1.msra.mxu0 0.0
      %1068 = vmatprep.subr.mxu0 0.0
      %1069 = vmatpush1.msra.mxu0 0.0
      %1070 = vmatprep.subr.mxu0 0.0
      %1071 = vmatpush1.msra.mxu0 0.0
      %1072 = vmatprep.subr.mxu0 0.0
      %1073 = vmatpush1.msra.mxu0 0.0
      %1074 = vmatprep.subr.mxu0 0.0
      %1075 = vmatpush1.msra.mxu0 0.0
      %1076 = vmatprep.subr.mxu0 0.0
      %1077 = vmatpush1.msra.mxu0 0.0
      %1078 = vmatprep.subr.mxu0 0.0
      %1079 = vmatpush1.msra.mxu0 0.0
      %1080 = vmatprep.subr.mxu0 0.0
      %1081 = vmatpush1.msra.mxu0 0.0
      %1082 = vmatprep.subr.mxu0 0.0
      %1083 = vmatpush1.msra.mxu0 0.0
      %1084 = vmatprep.subr.mxu0 0.0
      %1085 = vmatpush1.msra.mxu0 0.0
      %1086 = vmatprep.subr.mxu0 0.0
      %1087 = vmatpush1.msra.mxu0 0.0
      %1088 = vmatprep.mubr.f32.mxu0 0.0
      %1089 = vmatmul.mubr.f32.gmra.mrb[0].mxu0 %v1022
      %v1090 = vpop.f32.mrb[0].mxu0
      %v1091 = vadd.f32 0.0, %v1090
      %v1092 = vpop.f32.mrb[0].mxu0
      %1093 = vdwg.mxu0
      %v1094 = vpack.c.bf16 %v1091, %v1091
      %v1099 = vunpack.c.l.b16 %v743
      %v1100 = vunpack.c.l.b16 %v744
      %v1101 = vunpack.c.l.b16 %v745
      %v1102 = vunpack.c.l.b16 %v746
      %v1103 = vpack.c.b16 %v1100, %v1099
      %v1104 = vpack.c.b16 %v1102, %v1101
      %v1108 = vsel %vm755, %v1094, 0
      %1110 = vmatprep.subr.bf16.mxu0 0
      %1111 = vmatpush1.bf16.msra.mxu0 %v1103
      %1112 = vmatprep.subr.bf16.mxu0 0
      %1113 = vmatpush1.bf16.msra.mxu0 %v1104
      %1114 = vmatprep.subr.bf16.mxu0 0
      %1115 = vmatpush1.bf16.msra.mxu0 0
      %1116 = vmatprep.subr.bf16.mxu0 0
      %1117 = vmatpush1.bf16.msra.mxu0 0
      %1118 = vmatprep.subr.bf16.mxu0 0
      %1119 = vmatpush1.bf16.msra.mxu0 0
      %1120 = vmatprep.subr.bf16.mxu0 0
      %1121 = vmatpush1.bf16.msra.mxu0 0
      %1122 = vmatprep.subr.bf16.mxu0 0
      %1123 = vmatpush1.bf16.msra.mxu0 0
      %1124 = vmatprep.subr.bf16.mxu0 0
      %1125 = vmatpush1.bf16.msra.mxu0 0
      %1126 = vmatprep.subr.bf16.mxu0 0
      %1127 = vmatpush1.bf16.msra.mxu0 0
      %1128 = vmatprep.subr.bf16.mxu0 0
      %1129 = vmatpush1.bf16.msra.mxu0 0
      %1130 = vmatprep.subr.bf16.mxu0 0
      %1131 = vmatpush1.bf16.msra.mxu0 0
      %1132 = vmatprep.subr.bf16.mxu0 0
      %1133 = vmatpush1.bf16.msra.mxu0 0
      %1134 = vmatprep.subr.bf16.mxu0 0
      %1135 = vmatpush1.bf16.msra.mxu0 0
      %1136 = vmatprep.subr.bf16.mxu0 0
      %1137 = vmatpush1.bf16.msra.mxu0 0
      %1138 = vmatprep.subr.bf16.mxu0 0
      %1139 = vmatpush1.bf16.msra.mxu0 0
      %1140 = vmatprep.subr.bf16.mxu0 0
      %1141 = vmatpush1.bf16.msra.mxu0 0
      %1142 = vmatprep.mubr.bf16.mxu0 0
      %1143 = vmatmul.mubr.bf16.gmra.mrb[0].mxu0 %v1108
      %v1144 = vpop.f32.mrb[0].mxu0
      %v1145 = vadd.f32 0.0, %v1144
      %v1146 = vpop.f32.mrb[0].mxu0
      %v1147 = vpop.f32.mrb[0].mxu0
      %v1148 = vpop.f32.mrb[0].mxu0
      %1149 = vdwg.mxu0
      %v1154 = vunpack.c.l.b16 %v739
      %v1155 = vunpack.c.l.b16 %v740
      %v1156 = vunpack.c.l.b16 %v741
      %v1157 = vunpack.c.l.b16 %v742
      %v1158 = vpack.c.b16 %v1155, %v1154
      %v1159 = vpack.c.b16 %v1157, %v1156
      %v1163 = vsel %vm755, %v925, 0
      %1165 = vmatprep.subr.bf16.mxu0 0
      %1166 = vmatpush1.bf16.msra.mxu0 %v1158
      %1167 = vmatprep.subr.bf16.mxu0 0
      %1168 = vmatpush1.bf16.msra.mxu0 %v1159
      %1169 = vmatprep.subr.bf16.mxu0 0
      %1170 = vmatpush1.bf16.msra.mxu0 0
      %1171 = vmatprep.subr.bf16.mxu0 0
      %1172 = vmatpush1.bf16.msra.mxu0 0
      %1173 = vmatprep.subr.bf16.mxu0 0
      %1174 = vmatpush1.bf16.msra.mxu0 0
      %1175 = vmatprep.subr.bf16.mxu0 0
      %1176 = vmatpush1.bf16.msra.mxu0 0
      %1177 = vmatprep.subr.bf16.mxu0 0
      %1178 = vmatpush1.bf16.msra.mxu0 0
      %1179 = vmatprep.subr.bf16.mxu0 0
      %1180 = vmatpush1.bf16.msra.mxu0 0
      %1181 = vmatprep.subr.bf16.mxu0 0
      %1182 = vmatpush1.bf16.msra.mxu0 0
      %1183 = vmatprep.subr.bf16.mxu0 0
      %1184 = vmatpush1.bf16.msra.mxu0 0
      %1185 = vmatprep.subr.bf16.mxu0 0
      %1186 = vmatpush1.bf16.msra.mxu0 0
      %1187 = vmatprep.subr.bf16.mxu0 0
      %1188 = vmatpush1.bf16.msra.mxu0 0
      %1189 = vmatprep.subr.bf16.mxu0 0
      %1190 = vmatpush1.bf16.msra.mxu0 0
      %1191 = vmatprep.subr.bf16.mxu0 0
      %1192 = vmatpush1.bf16.msra.mxu0 0
      %1193 = vmatprep.subr.bf16.mxu0 0
      %1194 = vmatpush1.bf16.msra.mxu0 0
      %1195 = vmatprep.subr.bf16.mxu0 0
      %1196 = vmatpush1.bf16.msra.mxu0 0
      %1197 = vmatprep.mubr.bf16.mxu0 0
      %1198 = vmatmul.mubr.bf16.gmra.mrb[0].mxu0 %v1163
      %v1199 = vpop.f32.mrb[0].mxu0
      %v1200 = vadd.f32 %v1145, %v1199
      %v1201 = vpop.f32.mrb[0].mxu0
      %v1202 = vpop.f32.mrb[0].mxu0
      %v1203 = vpop.f32.mrb[0].mxu0
      %1204 = vdwg.mxu0
      %1205 = vrot.lane.b32.xlu0 %v693, 64
      %v1206 = vpop.permute.xlu0 %1205
      %1207 = vrot.lane.b32.xlu0 %v695, 64
      %v1208 = vpop.permute.xlu0 %1207
      %v1209 = vsel %vm755, %v1206, 0
      %v1211 = vsel %vm755, %v1208, 0
      %1213 = vmatprep.subr.mxu0 0.0
      %1214 = vmatpush1.xpose.msra.mxu0 %v1211
      %1215 = vmatprep.subr.mxu0 0.0
      %1216 = vmatpush1.xpose.msra.mxu0 0.0
      %1217 = vmatprep.subr.mxu0 0.0
      %1218 = vmatpush1.xpose.msra.mxu0 0.0
      %1219 = vmatprep.subr.mxu0 0.0
      %1220 = vmatpush1.xpose.msra.mxu0 0.0
      %1221 = vmatprep.subr.mxu0 0.0
      %1222 = vmatpush1.xpose.msra.mxu0 0.0
      %1223 = vmatprep.subr.mxu0 0.0
      %1224 = vmatpush1.xpose.msra.mxu0 0.0
      %1225 = vmatprep.subr.mxu0 0.0
      %1226 = vmatpush1.xpose.msra.mxu0 0.0
      %1227 = vmatprep.subr.mxu0 0.0
      %1228 = vmatpush1.xpose.msra.mxu0 0.0
      %1229 = vmatprep.subr.mxu0 0.0
      %1230 = vmatpush1.xpose.msra.mxu0 0.0
      %1231 = vmatprep.subr.mxu0 0.0
      %1232 = vmatpush1.xpose.msra.mxu0 0.0
      %1233 = vmatprep.subr.mxu0 0.0
      %1234 = vmatpush1.xpose.msra.mxu0 0.0
      %1235 = vmatprep.subr.mxu0 0.0
      %1236 = vmatpush1.xpose.msra.mxu0 0.0
      %1237 = vmatprep.subr.mxu0 0.0
      %1238 = vmatpush1.xpose.msra.mxu0 0.0
      %1239 = vmatprep.subr.mxu0 0.0
      %1240 = vmatpush1.xpose.msra.mxu0 0.0
      %1241 = vmatprep.subr.mxu0 0.0
      %1242 = vmatpush1.xpose.msra.mxu0 0.0
      %1243 = vmatprep.subr.mxu0 0.0
      %1244 = vmatpush1.xpose.msra.mxu0 0.0
      %1245 = vmatprep.subr.mxu0 0.0
      %1246 = vmatpush1.xpose.msra.mxu0 0.0
      %1247 = vmatprep.subr.mxu0 0.0
      %1248 = vmatpush1.xpose.msra.mxu0 0.0
      %1249 = vmatprep.subr.mxu0 0.0
      %1250 = vmatpush1.xpose.msra.mxu0 0.0
      %1251 = vmatprep.subr.mxu0 0.0
      %1252 = vmatpush1.xpose.msra.mxu0 0.0
      %1253 = vmatprep.subr.mxu0 0.0
      %1254 = vmatpush1.xpose.msra.mxu0 0.0
      %1255 = vmatprep.subr.mxu0 0.0
      %1256 = vmatpush1.xpose.msra.mxu0 0.0
      %1257 = vmatprep.subr.mxu0 0.0
      %1258 = vmatpush1.xpose.msra.mxu0 0.0
      %1259 = vmatprep.subr.mxu0 0.0
      %1260 = vmatpush1.xpose.msra.mxu0 0.0
      %1261 = vmatprep.subr.mxu0 0.0
      %1262 = vmatpush1.xpose.msra.mxu0 0.0
      %1263 = vmatprep.subr.mxu0 0.0
      %1264 = vmatpush1.xpose.msra.mxu0 0.0
      %1265 = vmatprep.subr.mxu0 0.0
      %1266 = vmatpush1.xpose.msra.mxu0 0.0
      %1267 = vmatprep.subr.mxu0 0.0
      %1268 = vmatpush1.xpose.msra.mxu0 0.0
      %1269 = vmatprep.subr.mxu0 0.0
      %1270 = vmatpush1.xpose.msra.mxu0 0.0
      %1271 = vmatprep.subr.mxu0 0.0
      %1272 = vmatpush1.xpose.msra.mxu0 0.0
      %1273 = vmatprep.subr.mxu0 0.0
      %1274 = vmatpush1.xpose.msra.mxu0 0.0
      %1275 = vmatprep.subr.mxu0 0.0
      %1276 = vmatpush1.xpose.msra.mxu0 0.0
      %1277 = vmatprep.mubr.f32.mxu0 0.0
      %1278 = vmatmul.mubr.f32.gmra.mrb[0].mxu0 %v1209
      %v1279 = vpop.f32.mrb[0].mxu0
      %v1280 = vadd.f32 0.0, %v1279
      %v1281 = vpop.f32.mrb[0].mxu0
      %1282 = vdwg.mxu0
      %v1283 = vmul.f32 %v1280, 0.17677669
      %v1284 = vadd.f32 %v1283, %v837
      %v1285 = vsel %vm840, %v1284, -inf
      %1286 = vmax.xlane.f32.xlu0 %v1285
      %v1287 = vpop.xlane.xlu0 %1286
      %v1288 = vsub.f32 %v1284, %v1287
      %v1289 = vmul.f32 %v1288, 1.442695
      %v1290 = vpow.pop %v1289
      %v1291 = vsel %vm840, %v1290, 0.0
      %1292 = vadd.xlane.f32.xlu0 %v1291
      %v1293 = vpop.xlane.xlu0 %1292
      %v1294 = vrcp.pop %v1293
      %v1295 = vmul.f32 %v1290, %v1294
      %1296 = vrot.lane.b32.xlu0 %v734, 64
      %v1297 = vpop.permute.xlu0 %1296
      %v1300 = vsel %vm840, %v1295, 0
      %1302 = vmatprep.subr.mxu0 0.0
      %1303 = vmatpush1.msra.mxu0 %v1297
      %1304 = vmatprep.subr.mxu0 0.0
      %1305 = vmatpush1.msra.mxu0 0.0
      %1306 = vmatprep.subr.mxu0 0.0
      %1307 = vmatpush1.msra.mxu0 0.0
      %1308 = vmatprep.subr.mxu0 0.0
      %1309 = vmatpush1.msra.mxu0 0.0
      %1310 = vmatprep.subr.mxu0 0.0
      %1311 = vmatpush1.msra.mxu0 0.0
      %1312 = vmatprep.subr.mxu0 0.0
      %1313 = vmatpush1.msra.mxu0 0.0
      %1314 = vmatprep.subr.mxu0 0.0
      %1315 = vmatpush1.msra.mxu0 0.0
      %1316 = vmatprep.subr.mxu0 0.0
      %1317 = vmatpush1.msra.mxu0 0.0
      %1318 = vmatprep.subr.mxu0 0.0
      %1319 = vmatpush1.msra.mxu0 0.0
      %1320 = vmatprep.subr.mxu0 0.0
      %1321 = vmatpush1.msra.mxu0 0.0
      %1322 = vmatprep.subr.mxu0 0.0
      %1323 = vmatpush1.msra.mxu0 0.0
      %1324 = vmatprep.subr.mxu0 0.0
      %1325 = vmatpush1.msra.mxu0 0.0
      %1326 = vmatprep.subr.mxu0 0.0
      %1327 = vmatpush1.msra.mxu0 0.0
      %1328 = vmatprep.subr.mxu0 0.0
      %1329 = vmatpush1.msra.mxu0 0.0
      %1330 = vmatprep.subr.mxu0 0.0
      %1331 = vmatpush1.msra.mxu0 0.0
      %1332 = vmatprep.subr.mxu0 0.0
      %1333 = vmatpush1.msra.mxu0 0.0
      %1334 = vmatprep.subr.mxu0 0.0
      %1335 = vmatpush1.msra.mxu0 0.0
      %1336 = vmatprep.subr.mxu0 0.0
      %1337 = vmatpush1.msra.mxu0 0.0
      %1338 = vmatprep.subr.mxu0 0.0
      %1339 = vmatpush1.msra.mxu0 0.0
      %1340 = vmatprep.subr.mxu0 0.0
      %1341 = vmatpush1.msra.mxu0 0.0
      %1342 = vmatprep.subr.mxu0 0.0
      %1343 = vmatpush1.msra.mxu0 0.0
      %1344 = vmatprep.subr.mxu0 0.0
      %1345 = vmatpush1.msra.mxu0 0.0
      %1346 = vmatprep.subr.mxu0 0.0
      %1347 = vmatpush1.msra.mxu0 0.0
      %1348 = vmatprep.subr.mxu0 0.0
      %1349 = vmatpush1.msra.mxu0 0.0
      %1350 = vmatprep.subr.mxu0 0.0
      %1351 = vmatpush1.msra.mxu0 0.0
      %1352 = vmatprep.subr.mxu0 0.0
      %1353 = vmatpush1.msra.mxu0 0.0
      %1354 = vmatprep.subr.mxu0 0.0
      %1355 = vmatpush1.msra.mxu0 0.0
      %1356 = vmatprep.subr.mxu0 0.0
      %1357 = vmatpush1.msra.mxu0 0.0
      %1358 = vmatprep.subr.mxu0 0.0
      %1359 = vmatpush1.msra.mxu0 0.0
      %1360 = vmatprep.subr.mxu0 0.0
      %1361 = vmatpush1.msra.mxu0 0.0
      %1362 = vmatprep.subr.mxu0 0.0
      %1363 = vmatpush1.msra.mxu0 0.0
      %1364 = vmatprep.subr.mxu0 0.0
      %1365 = vmatpush1.msra.mxu0 0.0
      %1366 = vmatprep.mubr.f32.mxu0 0.0
      %1367 = vmatmul.mubr.f32.gmra.mrb[0].mxu0 %v1300
      %v1368 = vpop.f32.mrb[0].mxu0
      %v1369 = vadd.f32 0.0, %v1368
      %v1370 = vpop.f32.mrb[0].mxu0
      %1371 = vdwg.mxu0
      %v1372 = vpack.c.bf16 %v1369, %v1369
      %v1377 = vunpack.c.l.b16 %v747
      %v1378 = vunpack.c.l.b16 %v748
      %v1379 = vunpack.c.l.b16 %v749
      %v1380 = vunpack.c.l.b16 %v750
      %v1381 = vpack.c.b16 %v1378, %v1377
      %v1382 = vpack.c.b16 %v1380, %v1379
      %v1386 = vsel %vm755, %v1372, 0
      %1388 = vmatprep.subr.bf16.mxu0 0
      %1389 = vmatpush1.bf16.msra.mxu0 %v1381
      %1390 = vmatprep.subr.bf16.mxu0 0
      %1391 = vmatpush1.bf16.msra.mxu0 %v1382
      %1392 = vmatprep.subr.bf16.mxu0 0
      %1393 = vmatpush1.bf16.msra.mxu0 0
      %1394 = vmatprep.subr.bf16.mxu0 0
      %1395 = vmatpush1.bf16.msra.mxu0 0
      %1396 = vmatprep.subr.bf16.mxu0 0
      %1397 = vmatpush1.bf16.msra.mxu0 0
      %1398 = vmatprep.subr.bf16.mxu0 0
      %1399 = vmatpush1.bf16.msra.mxu0 0
      %1400 = vmatprep.subr.bf16.mxu0 0
      %1401 = vmatpush1.bf16.msra.mxu0 0
      %1402 = vmatprep.subr.bf16.mxu0 0
      %1403 = vmatpush1.bf16.msra.mxu0 0
      %1404 = vmatprep.subr.bf16.mxu0 0
      %1405 = vmatpush1.bf16.msra.mxu0 0
      %1406 = vmatprep.subr.bf16.mxu0 0
      %1407 = vmatpush1.bf16.msra.mxu0 0
      %1408 = vmatprep.subr.bf16.mxu0 0
      %1409 = vmatpush1.bf16.msra.mxu0 0
      %1410 = vmatprep.subr.bf16.mxu0 0
      %1411 = vmatpush1.bf16.msra.mxu0 0
      %1412 = vmatprep.subr.bf16.mxu0 0
      %1413 = vmatpush1.bf16.msra.mxu0 0
      %1414 = vmatprep.subr.bf16.mxu0 0
      %1415 = vmatpush1.bf16.msra.mxu0 0
      %1416 = vmatprep.subr.bf16.mxu0 0
      %1417 = vmatpush1.bf16.msra.mxu0 0
      %1418 = vmatprep.subr.bf16.mxu0 0
      %1419 = vmatpush1.bf16.msra.mxu0 0
      %1420 = vmatprep.mubr.bf16.mxu0 0
      %1421 = vmatmul.mubr.bf16.gmra.mrb[0].mxu0 %v1386
      %v1422 = vpop.f32.mrb[0].mxu0
      %v1423 = vadd.f32 0.0, %v1422
      %v1424 = vpop.f32.mrb[0].mxu0
      %v1425 = vpop.f32.mrb[0].mxu0
      %v1426 = vpop.f32.mrb[0].mxu0
      %1427 = vdwg.mxu0
      %v1428 = vadd.f32 %v1200, %v1423
      %1429 = vrot.lane.b32.xlu0 %v693, 32
      %v1430 = vpop.permute.xlu0 %1429
      %1431 = vrot.lane.b32.xlu0 %v695, 32
      %v1432 = vpop.permute.xlu0 %1431
      %v1433 = vsel %vm755, %v1430, 0
      %v1435 = vsel %vm755, %v1432, 0
      %1437 = vmatprep.subr.mxu0 0.0
      %1438 = vmatpush1.xpose.msra.mxu0 %v1435
      %1439 = vmatprep.subr.mxu0 0.0
      %1440 = vmatpush1.xpose.msra.mxu0 0.0
      %1441 = vmatprep.subr.mxu0 0.0
      %1442 = vmatpush1.xpose.msra.mxu0 0.0
      %1443 = vmatprep.subr.mxu0 0.0
      %1444 = vmatpush1.xpose.msra.mxu0 0.0
      %1445 = vmatprep.subr.mxu0 0.0
      %1446 = vmatpush1.xpose.msra.mxu0 0.0
      %1447 = vmatprep.subr.mxu0 0.0
      %1448 = vmatpush1.xpose.msra.mxu0 0.0
      %1449 = vmatprep.subr.mxu0 0.0
      %1450 = vmatpush1.xpose.msra.mxu0 0.0
      %1451 = vmatprep.subr.mxu0 0.0
      %1452 = vmatpush1.xpose.msra.mxu0 0.0
      %1453 = vmatprep.subr.mxu0 0.0
      %1454 = vmatpush1.xpose.msra.mxu0 0.0
      %1455 = vmatprep.subr.mxu0 0.0
      %1456 = vmatpush1.xpose.msra.mxu0 0.0
      %1457 = vmatprep.subr.mxu0 0.0
      %1458 = vmatpush1.xpose.msra.mxu0 0.0
      %1459 = vmatprep.subr.mxu0 0.0
      %1460 = vmatpush1.xpose.msra.mxu0 0.0
      %1461 = vmatprep.subr.mxu0 0.0
      %1462 = vmatpush1.xpose.msra.mxu0 0.0
      %1463 = vmatprep.subr.mxu0 0.0
      %1464 = vmatpush1.xpose.msra.mxu0 0.0
      %1465 = vmatprep.subr.mxu0 0.0
      %1466 = vmatpush1.xpose.msra.mxu0 0.0
      %1467 = vmatprep.subr.mxu0 0.0
      %1468 = vmatpush1.xpose.msra.mxu0 0.0
      %1469 = vmatprep.subr.mxu0 0.0
      %1470 = vmatpush1.xpose.msra.mxu0 0.0
      %1471 = vmatprep.subr.mxu0 0.0
      %1472 = vmatpush1.xpose.msra.mxu0 0.0
      %1473 = vmatprep.subr.mxu0 0.0
      %1474 = vmatpush1.xpose.msra.mxu0 0.0
      %1475 = vmatprep.subr.mxu0 0.0
      %1476 = vmatpush1.xpose.msra.mxu0 0.0
      %1477 = vmatprep.subr.mxu0 0.0
      %1478 = vmatpush1.xpose.msra.mxu0 0.0
      %1479 = vmatprep.subr.mxu0 0.0
      %1480 = vmatpush1.xpose.msra.mxu0 0.0
      %1481 = vmatprep.subr.mxu0 0.0
      %1482 = vmatpush1.xpose.msra.mxu0 0.0
      %1483 = vmatprep.subr.mxu0 0.0
      %1484 = vmatpush1.xpose.msra.mxu0 0.0
      %1485 = vmatprep.subr.mxu0 0.0
      %1486 = vmatpush1.xpose.msra.mxu0 0.0
      %1487 = vmatprep.subr.mxu0 0.0
      %1488 = vmatpush1.xpose.msra.mxu0 0.0
      %1489 = vmatprep.subr.mxu0 0.0
      %1490 = vmatpush1.xpose.msra.mxu0 0.0
      %1491 = vmatprep.subr.mxu0 0.0
      %1492 = vmatpush1.xpose.msra.mxu0 0.0
      %1493 = vmatprep.subr.mxu0 0.0
      %1494 = vmatpush1.xpose.msra.mxu0 0.0
      %1495 = vmatprep.subr.mxu0 0.0
      %1496 = vmatpush1.xpose.msra.mxu0 0.0
      %1497 = vmatprep.subr.mxu0 0.0
      %1498 = vmatpush1.xpose.msra.mxu0 0.0
      %1499 = vmatprep.subr.mxu0 0.0
      %1500 = vmatpush1.xpose.msra.mxu0 0.0
      %1501 = vmatprep.mubr.f32.mxu0 0.0
      %1502 = vmatmul.mubr.f32.gmra.mrb[0].mxu0 %v1433
      %v1503 = vpop.f32.mrb[0].mxu0
      %v1504 = vadd.f32 0.0, %v1503
      %v1505 = vpop.f32.mrb[0].mxu0
      %1506 = vdwg.mxu0
      %v1507 = vmul.f32 %v1504, 0.17677669
      %v1508 = vadd.f32 %v1507, %v837
      %v1509 = vsel %vm840, %v1508, -inf
      %1510 = vmax.xlane.f32.xlu0 %v1509
      %v1511 = vpop.xlane.xlu0 %1510
      %v1512 = vsub.f32 %v1508, %v1511
      %v1513 = vmul.f32 %v1512, 1.442695
      %v1514 = vpow.pop %v1513
      %v1515 = vsel %vm840, %v1514, 0.0
      %1516 = vadd.xlane.f32.xlu0 %v1515
      %v1517 = vpop.xlane.xlu0 %1516
      %v1518 = vrcp.pop %v1517
      %v1519 = vmul.f32 %v1514, %v1518
      %1520 = vrot.lane.b32.xlu0 %v734, 32
      %v1521 = vpop.permute.xlu0 %1520
      %v1524 = vsel %vm840, %v1519, 0
      %1526 = vmatprep.subr.mxu0 0.0
      %1527 = vmatpush1.msra.mxu0 %v1521
      %1528 = vmatprep.subr.mxu0 0.0
      %1529 = vmatpush1.msra.mxu0 0.0
      %1530 = vmatprep.subr.mxu0 0.0
      %1531 = vmatpush1.msra.mxu0 0.0
      %1532 = vmatprep.subr.mxu0 0.0
      %1533 = vmatpush1.msra.mxu0 0.0
      %1534 = vmatprep.subr.mxu0 0.0
      %1535 = vmatpush1.msra.mxu0 0.0
      %1536 = vmatprep.subr.mxu0 0.0
      %1537 = vmatpush1.msra.mxu0 0.0
      %1538 = vmatprep.subr.mxu0 0.0
      %1539 = vmatpush1.msra.mxu0 0.0
      %1540 = vmatprep.subr.mxu0 0.0
      %1541 = vmatpush1.msra.mxu0 0.0
      %1542 = vmatprep.subr.mxu0 0.0
      %1543 = vmatpush1.msra.mxu0 0.0
      %1544 = vmatprep.subr.mxu0 0.0
      %1545 = vmatpush1.msra.mxu0 0.0
      %1546 = vmatprep.subr.mxu0 0.0
      %1547 = vmatpush1.msra.mxu0 0.0
      %1548 = vmatprep.subr.mxu0 0.0
      %1549 = vmatpush1.msra.mxu0 0.0
      %1550 = vmatprep.subr.mxu0 0.0
      %1551 = vmatpush1.msra.mxu0 0.0
      %1552 = vmatprep.subr.mxu0 0.0
      %1553 = vmatpush1.msra.mxu0 0.0
      %1554 = vmatprep.subr.mxu0 0.0
      %1555 = vmatpush1.msra.mxu0 0.0
      %1556 = vmatprep.subr.mxu0 0.0
      %1557 = vmatpush1.msra.mxu0 0.0
      %1558 = vmatprep.subr.mxu0 0.0
      %1559 = vmatpush1.msra.mxu0 0.0
      %1560 = vmatprep.subr.mxu0 0.0
      %1561 = vmatpush1.msra.mxu0 0.0
      %1562 = vmatprep.subr.mxu0 0.0
      %1563 = vmatpush1.msra.mxu0 0.0
      %1564 = vmatprep.subr.mxu0 0.0
      %1565 = vmatpush1.msra.mxu0 0.0
      %1566 = vmatprep.subr.mxu0 0.0
      %1567 = vmatpush1.msra.mxu0 0.0
      %1568 = vmatprep.subr.mxu0 0.0
      %1569 = vmatpush1.msra.mxu0 0.0
      %1570 = vmatprep.subr.mxu0 0.0
      %1571 = vmatpush1.msra.mxu0 0.0
      %1572 = vmatprep.subr.mxu0 0.0
      %1573 = vmatpush1.msra.mxu0 0.0
      %1574 = vmatprep.subr.mxu0 0.0
      %1575 = vmatpush1.msra.mxu0 0.0
      %1576 = vmatprep.subr.mxu0 0.0
      %1577 = vmatpush1.msra.mxu0 0.0
      %1578 = vmatprep.subr.mxu0 0.0
      %1579 = vmatpush1.msra.mxu0 0.0
      %1580 = vmatprep.subr.mxu0 0.0
      %1581 = vmatpush1.msra.mxu0 0.0
      %1582 = vmatprep.subr.mxu0 0.0
      %1583 = vmatpush1.msra.mxu0 0.0
      %1584 = vmatprep.subr.mxu0 0.0
      %1585 = vmatpush1.msra.mxu0 0.0
      %1586 = vmatprep.subr.mxu0 0.0
      %1587 = vmatpush1.msra.mxu0 0.0
      %1588 = vmatprep.subr.mxu0 0.0
      %1589 = vmatpush1.msra.mxu0 0.0
      %1590 = vmatprep.mubr.f32.mxu0 0.0
      %1591 = vmatmul.mubr.f32.gmra.mrb[0].mxu0 %v1524
      %v1592 = vpop.f32.mrb[0].mxu0
      %v1593 = vadd.f32 0.0, %v1592
      %v1594 = vpop.f32.mrb[0].mxu0
      %1595 = vdwg.mxu0
      %v1596 = vpack.c.bf16 %v1593, %v1593
      %v1601 = vunpack.c.l.b16 %v751
      %v1602 = vunpack.c.l.b16 %v752
      %v1603 = vunpack.c.l.b16 %v753
      %v1604 = vunpack.c.l.b16 %v754
      %v1605 = vpack.c.b16 %v1602, %v1601
      %v1606 = vpack.c.b16 %v1604, %v1603
      %v1610 = vsel %vm755, %v1596, 0
      %1612 = vmatprep.subr.bf16.mxu0 0
      %1613 = vmatpush1.bf16.msra.mxu0 %v1605
      %1614 = vmatprep.subr.bf16.mxu0 0
      %1615 = vmatpush1.bf16.msra.mxu0 %v1606
      %1616 = vmatprep.subr.bf16.mxu0 0
      %1617 = vmatpush1.bf16.msra.mxu0 0
      %1618 = vmatprep.subr.bf16.mxu0 0
      %1619 = vmatpush1.bf16.msra.mxu0 0
      %1620 = vmatprep.subr.bf16.mxu0 0
      %1621 = vmatpush1.bf16.msra.mxu0 0
      %1622 = vmatprep.subr.bf16.mxu0 0
      %1623 = vmatpush1.bf16.msra.mxu0 0
      %1624 = vmatprep.subr.bf16.mxu0 0
      %1625 = vmatpush1.bf16.msra.mxu0 0
      %1626 = vmatprep.subr.bf16.mxu0 0
      %1627 = vmatpush1.bf16.msra.mxu0 0
      %1628 = vmatprep.subr.bf16.mxu0 0
      %1629 = vmatpush1.bf16.msra.mxu0 0
      %1630 = vmatprep.subr.bf16.mxu0 0
      %1631 = vmatpush1.bf16.msra.mxu0 0
      %1632 = vmatprep.subr.bf16.mxu0 0
      %1633 = vmatpush1.bf16.msra.mxu0 0
      %1634 = vmatprep.subr.bf16.mxu0 0
      %1635 = vmatpush1.bf16.msra.mxu0 0
      %1636 = vmatprep.subr.bf16.mxu0 0
      %1637 = vmatpush1.bf16.msra.mxu0 0
      %1638 = vmatprep.subr.bf16.mxu0 0
      %1639 = vmatpush1.bf16.msra.mxu0 0
      %1640 = vmatprep.subr.bf16.mxu0 0
      %1641 = vmatpush1.bf16.msra.mxu0 0
      %1642 = vmatprep.subr.bf16.mxu0 0
      %1643 = vmatpush1.bf16.msra.mxu0 0
      %1644 = vmatprep.mubr.bf16.mxu0 0
      %1645 = vmatmul.mubr.bf16.gmra.mrb[0].mxu0 %v1610
      %v1646 = vpop.f32.mrb[0].mxu0
      %v1647 = vadd.f32 0.0, %v1646
      %v1648 = vpop.f32.mrb[0].mxu0
      %v1649 = vpop.f32.mrb[0].mxu0
      %v1650 = vpop.f32.mrb[0].mxu0
      %1651 = vdwg.mxu0
      %v1652 = vadd.f32 %v1428, %v1647
      %v1653 = vld [vmem:[%s5] sm:$0x1]
      %v1655 = vlaneseq
      %v1656 = vshrl.u32 %v1655, 7
      %v1657 = vsub.s32 0, %v1656
      %v1658 = vrot.slane %v1653, %v1657
      %v1660 = vadd.f32 %v1652, %v1658
      %v1661 = vadd.f32 %v1660, %v478
      %v1662 = vld [vmem:[%s6] sm:$0x1]
      %v1663 = vld [vmem:[%s7] sm:$0x1]
      %1664 = vadd.xlane.f32.xlu0 %v1661
      %v1665 = vpop.xlane.xlu0 %1664
      %v1666 = vrcp.pop 128.0
      %v1667 = vmul.f32 %v1665, %v1666
      %v1668 = vsub.f32 %v1661, %v1667
      %v1669 = vmul.f32 %v1668, %v1668
      %1670 = vadd.xlane.f32.xlu0 %v1669
      %v1671 = vpop.xlane.xlu0 %1670
      %v1672 = vmul.f32 %v1671, %v1666
      %v1673 = vadd.f32 %v1672, 1e-12
      %v1674 = vrsqrt.pop %v1673
      %v1675 = vmul.f32 %v1668, %v1674
      %v1677 = vlaneseq
      %v1678 = vshrl.u32 %v1677, 7
      %v1679 = vsub.s32 0, %v1678
      %v1680 = vrot.slane %v1662, %v1679
      %v1682 = vmul.f32 %v1675, %v1680
      %v1684 = vlaneseq
      %v1685 = vshrl.u32 %v1684, 7
      %v1686 = vsub.s32 0, %v1685
      %v1687 = vrot.slane %v1663, %v1686
      %v1689 = vadd.f32 %v1682, %v1687
      %v1690 = vpack.c.bf16 %v1689, %v1689
      %v1691 = vld [vmem:[%s8] sm:$0xff]
      %v1692 = vld [vmem:[%s8 + $0x8] sm:$0xff]
      %v1693 = vld [vmem:[%s8 + $0x10] sm:$0xff]
      %v1694 = vld [vmem:[%s8 + $0x18] sm:$0xff]
      %v1695 = vld [vmem:[%s8 + $0x20] sm:$0xff]
      %v1696 = vld [vmem:[%s8 + $0x28] sm:$0xff]
      %v1697 = vld [vmem:[%s8 + $0x30] sm:$0xff]
      %v1698 = vld [vmem:[%s8 + $0x38] sm:$0xff]
      %v1699 = vld [vmem:[%s8 + $0x40] sm:$0xff]
      %v1700 = vld [vmem:[%s8 + $0x48] sm:$0xff]
      %v1701 = vld [vmem:[%s8 + $0x50] sm:$0xff]
      %v1702 = vld [vmem:[%s8 + $0x58] sm:$0xff]
      %v1703 = vld [vmem:[%s8 + $0x60] sm:$0xff]
      %v1704 = vld [vmem:[%s8 + $0x68] sm:$0xff]
      %v1705 = vld [vmem:[%s8 + $0x70] sm:$0xff]
      %v1706 = vld [vmem:[%s8 + $0x78] sm:$0xff]
      %v1707 = vld [vmem:[%s9] sm:$0x3]
      %v1709 = vlaneseq
      %v1710 = vshrl.u32 %v1709, 7
      %v1711 = vsub.s32 0, %v1710
      %v1712 = vrot.slane %v1707, %v1711
      %v1713 = vlaneseq
      %v1714 = vshrl.u32 %v1713, 7
      %v1715 = vsub.s32 1, %v1714
      %v1716 = vrot.slane %v1707, %v1715
      %v1735 = vunpack.c.l.b16 %v1691
      %v1736 = vunpack.c.h.b16 %v1691
      %v1737 = vunpack.c.l.b16 %v1692
      %v1738 = vunpack.c.h.b16 %v1692
      %v1739 = vunpack.c.l.b16 %v1693
      %v1740 = vunpack.c.h.b16 %v1693
      %v1741 = vunpack.c.l.b16 %v1694
      %v1742 = vunpack.c.h.b16 %v1694
      %v1743 = vunpack.c.l.b16 %v1695
      %v1744 = vunpack.c.h.b16 %v1695
      %v1745 = vunpack.c.l.b16 %v1696
      %v1746 = vunpack.c.h.b16 %v1696
      %v1747 = vunpack.c.l.b16 %v1697
      %v1748 = vunpack.c.h.b16 %v1697
      %v1749 = vunpack.c.l.b16 %v1698
      %v1750 = vunpack.c.h.b16 %v1698
      %v1751 = vunpack.c.l.b16 %v1699
      %v1752 = vunpack.c.h.b16 %v1699
      %v1753 = vunpack.c.l.b16 %v1700
      %v1754 = vunpack.c.h.b16 %v1700
      %v1755 = vunpack.c.l.b16 %v1701
      %v1756 = vunpack.c.h.b16 %v1701
      %v1757 = vunpack.c.l.b16 %v1702
      %v1758 = vunpack.c.h.b16 %v1702
      %v1759 = vunpack.c.l.b16 %v1703
      %v1760 = vunpack.c.h.b16 %v1703
      %v1761 = vunpack.c.l.b16 %v1704
      %v1762 = vunpack.c.h.b16 %v1704
      %v1763 = vunpack.c.l.b16 %v1705
      %v1764 = vunpack.c.h.b16 %v1705
      %v1765 = vunpack.c.l.b16 %v1706
      %v1766 = vunpack.c.h.b16 %v1706
      %v1767 = vpack.c.b16 %v1737, %v1735
      %v1768 = vpack.c.b16 %v1738, %v1736
      %v1769 = vpack.c.b16 %v1741, %v1739
      %v1770 = vpack.c.b16 %v1742, %v1740
      %v1771 = vpack.c.b16 %v1745, %v1743
      %v1772 = vpack.c.b16 %v1746, %v1744
      %v1773 = vpack.c.b16 %v1749, %v1747
      %v1774 = vpack.c.b16 %v1750, %v1748
      %v1775 = vpack.c.b16 %v1753, %v1751
      %v1776 = vpack.c.b16 %v1754, %v1752
      %v1777 = vpack.c.b16 %v1757, %v1755
      %v1778 = vpack.c.b16 %v1758, %v1756
      %v1779 = vpack.c.b16 %v1761, %v1759
      %v1780 = vpack.c.b16 %v1762, %v1760
      %v1781 = vpack.c.b16 %v1765, %v1763
      %v1782 = vpack.c.b16 %v1766, %v1764
      %1799 = vmatprep.subr.bf16.mxu0 %v1768
      %1800 = vmatpush1.bf16.msra.mxu0 %v1767
      %1801 = vmatprep.subr.bf16.mxu0 %v1770
      %1802 = vmatpush1.bf16.msra.mxu0 %v1769
      %1803 = vmatprep.subr.bf16.mxu0 %v1772
      %1804 = vmatpush1.bf16.msra.mxu0 %v1771
      %1805 = vmatprep.subr.bf16.mxu0 %v1774
      %1806 = vmatpush1.bf16.msra.mxu0 %v1773
      %1807 = vmatprep.subr.bf16.mxu0 %v1776
      %1808 = vmatpush1.bf16.msra.mxu0 %v1775
      %1809 = vmatprep.subr.bf16.mxu0 %v1778
      %1810 = vmatpush1.bf16.msra.mxu0 %v1777
      %1811 = vmatprep.subr.bf16.mxu0 %v1780
      %1812 = vmatpush1.bf16.msra.mxu0 %v1779
      %1813 = vmatprep.subr.bf16.mxu0 %v1782
      %1814 = vmatpush1.bf16.msra.mxu0 %v1781
      %1815 = vmatprep.subr.bf16.mxu0 0
      %1816 = vmatpush1.bf16.msra.mxu0 0
      %1817 = vmatprep.subr.bf16.mxu0 0
      %1818 = vmatpush1.bf16.msra.mxu0 0
      %1819 = vmatprep.subr.bf16.mxu0 0
      %1820 = vmatpush1.bf16.msra.mxu0 0
      %1821 = vmatprep.subr.bf16.mxu0 0
      %1822 = vmatpush1.bf16.msra.mxu0 0
      %1823 = vmatprep.subr.bf16.mxu0 0
      %1824 = vmatpush1.bf16.msra.mxu0 0
      %1825 = vmatprep.subr.bf16.mxu0 0
      %1826 = vmatpush1.bf16.msra.mxu0 0
      %1827 = vmatprep.subr.bf16.mxu0 0
      %1828 = vmatpush1.bf16.msra.mxu0 0
      %1829 = vmatprep.subr.bf16.mxu0 0
      %1830 = vmatpush1.bf16.msra.mxu0 0
      %1831 = vmatprep.mubr.bf16.mxu0 0
      %1832 = vmatmul.mubr.bf16.gmra.mrb[0].mxu0 %v1690
      %v1833 = vpop.f32.mrb[0].mxu0
      %v1834 = vadd.f32 %v1712, %v1833
      %v1835 = vpop.f32.mrb[0].mxu0
      %v1836 = vadd.f32 %v1716, %v1835
      %v1837 = vpop.f32.mrb[0].mxu0
      %v1838 = vpop.f32.mrb[0].mxu0
      %1839 = vdwg.mxu0
      %v1840 = vmul.f32 %v1834, %v1834
      %v1841 = vmul.f32 %v1836, %v1836
      %v1842 = vmul.f32 %v1834, %v1840
      %v1843 = vmul.f32 %v1836, %v1841
      %v1844 = vmul.f32 %v1842, 0.044715
      %v1845 = vmul.f32 %v1843, 0.044715
      %v1846 = vadd.f32 %v1834, %v1844
      %v1847 = vadd.f32 %v1836, %v1845
      %v1848 = vmul.f32 %v1846, 0.7978846
      %v1849 = vmul.f32 %v1847, 0.7978846
      %v1850 = vtanh.pop %v1848
      %v1851 = vtanh.pop %v1849
      %v1852 = vadd.f32 %v1850, 1.0
      %v1853 = vadd.f32 %v1851, 1.0
      %v1854 = vmul.f32 %v1852, 0.5
      %v1855 = vmul.f32 %v1853, 0.5
      %v1856 = vmul.f32 %v1834, %v1854
      %v1857 = vmul.f32 %v1836, %v1855
      %v1858 = vpack.c.bf16 %v1856, %v1856
      %v1859 = vpack.c.bf16 %v1857, %v1857
      %v1860 = vld [vmem:[%s10] sm:$0xf]
      %v1861 = vld [vmem:[%s10 + $0x4] sm:$0xf]
      %v1862 = vld [vmem:[%s10 + $0x8] sm:$0xf]
      %v1863 = vld [vmem:[%s10 + $0xc] sm:$0xf]
      %v1864 = vld [vmem:[%s10 + $0x10] sm:$0xf]
      %v1865 = vld [vmem:[%s10 + $0x14] sm:$0xf]
      %v1866 = vld [vmem:[%s10 + $0x18] sm:$0xf]
      %v1867 = vld [vmem:[%s10 + $0x1c] sm:$0xf]
      %v1868 = vld [vmem:[%s10 + $0x20] sm:$0xf]
      %v1869 = vld [vmem:[%s10 + $0x24] sm:$0xf]
      %v1870 = vld [vmem:[%s10 + $0x28] sm:$0xf]
      %v1871 = vld [vmem:[%s10 + $0x2c] sm:$0xf]
      %v1872 = vld [vmem:[%s10 + $0x30] sm:$0xf]
      %v1873 = vld [vmem:[%s10 + $0x34] sm:$0xf]
      %v1874 = vld [vmem:[%s10 + $0x38] sm:$0xf]
      %v1875 = vld [vmem:[%s10 + $0x3c] sm:$0xf]
      %v1876 = vld [vmem:[%s10 + $0x40] sm:$0xf]
      %v1877 = vld [vmem:[%s10 + $0x44] sm:$0xf]
      %v1878 = vld [vmem:[%s10 + $0x48] sm:$0xf]
      %v1879 = vld [vmem:[%s10 + $0x4c] sm:$0xf]
      %v1880 = vld [vmem:[%s10 + $0x50] sm:$0xf]
      %v1881 = vld [vmem:[%s10 + $0x54] sm:$0xf]
      %v1882 = vld [vmem:[%s10 + $0x58] sm:$0xf]
      %v1883 = vld [vmem:[%s10 + $0x5c] sm:$0xf]
      %v1884 = vld [vmem:[%s10 + $0x60] sm:$0xf]
      %v1885 = vld [vmem:[%s10 + $0x64] sm:$0xf]
      %v1886 = vld [vmem:[%s10 + $0x68] sm:$0xf]
      %v1887 = vld [vmem:[%s10 + $0x6c] sm:$0xf]
      %v1888 = vld [vmem:[%s10 + $0x70] sm:$0xf]
      %v1889 = vld [vmem:[%s10 + $0x74] sm:$0xf]
      %v1890 = vld [vmem:[%s10 + $0x78] sm:$0xf]
      %v1891 = vld [vmem:[%s10 + $0x7c] sm:$0xf]
      %v1892 = vld [vmem:[%s11] sm:$0x1]
      %v1894 = vlaneseq
      %v1895 = vshrl.u32 %v1894, 7
      %v1896 = vsub.s32 0, %v1895
      %v1897 = vrot.slane %v1892, %v1896
      %v1931 = vunpack.c.l.b16 %v1860
      %v1932 = vunpack.c.l.b16 %v1861
      %v1933 = vunpack.c.l.b16 %v1862
      %v1934 = vunpack.c.l.b16 %v1863
      %v1935 = vunpack.c.l.b16 %v1864
      %v1936 = vunpack.c.l.b16 %v1865
      %v1937 = vunpack.c.l.b16 %v1866
      %v1938 = vunpack.c.l.b16 %v1867
      %v1939 = vunpack.c.l.b16 %v1868
      %v1940 = vunpack.c.l.b16 %v1869
      %v1941 = vunpack.c.l.b16 %v1870
      %v1942 = vunpack.c.l.b16 %v1871
      %v1943 = vunpack.c.l.b16 %v1872
      %v1944 = vunpack.c.l.b16 %v1873
      %v1945 = vunpack.c.l.b16 %v1874
      %v1946 = vunpack.c.l.b16 %v1875
      %v1947 = vunpack.c.l.b16 %v1876
      %v1948 = vunpack.c.l.b16 %v1877
      %v1949 = vunpack.c.l.b16 %v1878
      %v1950 = vunpack.c.l.b16 %v1879
      %v1951 = vunpack.c.l.b16 %v1880
      %v1952 = vunpack.c.l.b16 %v1881
      %v1953 = vunpack.c.l.b16 %v1882
      %v1954 = vunpack.c.l.b16 %v1883
      %v1955 = vunpack.c.l.b16 %v1884
      %v1956 = vunpack.c.l.b16 %v1885
      %v1957 = vunpack.c.l.b16 %v1886
      %v1958 = vunpack.c.l.b16 %v1887
      %v1959 = vunpack.c.l.b16 %v1888
      %v1960 = vunpack.c.l.b16 %v1889
      %v1961 = vunpack.c.l.b16 %v1890
      %v1962 = vunpack.c.l.b16 %v1891
      %v1963 = vpack.c.b16 %v1932, %v1931
      %v1964 = vpack.c.b16 %v1934, %v1933
      %v1965 = vpack.c.b16 %v1936, %v1935
      %v1966 = vpack.c.b16 %v1938, %v1937
      %v1967 = vpack.c.b16 %v1940, %v1939
      %v1968 = vpack.c.b16 %v1942, %v1941
      %v1969 = vpack.c.b16 %v1944, %v1943
      %v1970 = vpack.c.b16 %v1946, %v1945
      %v1971 = vpack.c.b16 %v1948, %v1947
      %v1972 = vpack.c.b16 %v1950, %v1949
      %v1973 = vpack.c.b16 %v1952, %v1951
      %v1974 = vpack.c.b16 %v1954, %v1953
      %v1975 = vpack.c.b16 %v1956, %v1955
      %v1976 = vpack.c.b16 %v1958, %v1957
      %v1977 = vpack.c.b16 %v1960, %v1959
      %v1978 = vpack.c.b16 %v1962, %v1961
      %1995 = vmatprep.subr.bf16.mxu0 0
      %1996 = vmatpush1.bf16.msra.mxu0 %v1963
      %1997 = vmatprep.subr.bf16.mxu0 0
      %1998 = vmatpush1.bf16.msra.mxu0 %v1964
      %1999 = vmatprep.subr.bf16.mxu0 0
      %2000 = vmatpush1.bf16.msra.mxu0 %v1965
      %2001 = vmatprep.subr.bf16.mxu0 0
      %2002 = vmatpush1.bf16.msra.mxu0 %v1966
      %2003 = vmatprep.subr.bf16.mxu0 0
      %2004 = vmatpush1.bf16.msra.mxu0 %v1967
      %2005 = vmatprep.subr.bf16.mxu0 0
      %2006 = vmatpush1.bf16.msra.mxu0 %v1968
      %2007 = vmatprep.subr.bf16.mxu0 0
      %2008 = vmatpush1.bf16.msra.mxu0 %v1969
      %2009 = vmatprep.subr.bf16.mxu0 0
      %2010 = vmatpush1.bf16.msra.mxu0 %v1970
      %2011 = vmatprep.subr.bf16.mxu0 0
      %2012 = vmatpush1.bf16.msra.mxu0 %v1971
      %2013 = vmatprep.subr.bf16.mxu0 0
      %2014 = vmatpush1.bf16.msra.mxu0 %v1972
      %2015 = vmatprep.subr.bf16.mxu0 0
      %2016 = vmatpush1.bf16.msra.mxu0 %v1973
      %2017 = vmatprep.subr.bf16.mxu0 0
      %2018 = vmatpush1.bf16.msra.mxu0 %v1974
      %2019 = vmatprep.subr.bf16.mxu0 0
      %2020 = vmatpush1.bf16.msra.mxu0 %v1975
      %2021 = vmatprep.subr.bf16.mxu0 0
      %2022 = vmatpush1.bf16.msra.mxu0 %v1976
      %2023 = vmatprep.subr.bf16.mxu0 0
      %2024 = vmatpush1.bf16.msra.mxu0 %v1977
      %2025 = vmatprep.subr.bf16.mxu0 0
      %2026 = vmatpush1.bf16.msra.mxu0 %v1978
      %2027 = vmatprep.mubr.bf16.mxu0 %v1859
      %2028 = vmatmul.mubr.bf16.gmra.mrb[0].mxu0 %v1858
      %v2029 = vpop.f32.mrb[0].mxu0
      %v2030 = vadd.f32 %v1897, %v2029
      %v2031 = vpop.f32.mrb[0].mxu0
      %v2032 = vpop.f32.mrb[0].mxu0
      %v2033 = vpop.f32.mrb[0].mxu0
      %2034 = vdwg.mxu0
      %v2035 = vadd.f32 %v2030, %v1689
      %v2036 = vld [vmem:[%s12] sm:$0x1]
      %v2037 = vld [vmem:[%s13] sm:$0x1]
      %2038 = vadd.xlane.f32.xlu0 %v2035
      %v2039 = vpop.xlane.xlu0 %2038
      %v2040 = vmul.f32 %v2039, %v1666
      %v2041 = vsub.f32 %v2035, %v2040
      %v2042 = vmul.f32 %v2041, %v2041
      %2043 = vadd.xlane.f32.xlu0 %v2042
      %v2044 = vpop.xlane.xlu0 %2043
      %v2045 = vmul.f32 %v2044, %v1666
      %v2046 = vadd.f32 %v2045, 1e-12
      %v2047 = vrsqrt.pop %v2046
      %v2048 = vmul.f32 %v2041, %v2047
      %v2050 = vlaneseq
      %v2051 = vshrl.u32 %v2050, 7
      %v2052 = vsub.s32 0, %v2051
      %v2053 = vrot.slane %v2036, %v2052
      %v2055 = vmul.f32 %v2048, %v2053
      %v2057 = vlaneseq
      %v2058 = vshrl.u32 %v2057, 7
      %v2059 = vsub.s32 0, %v2058
      %v2060 = vrot.slane %v2037, %v2059
      %v2062 = vadd.f32 %v2055, %v2060
      %2063 = vst [vmem:[%s476] sm:$0xff] %v2062
      %p2064 = scmp.lt.s32.totalorder %s25, 1
      %s2065 = scalar_select %p2064, %s25, 1
      %s2066 = smul.addr %s2065, 8
      %s2067 = scalar_lea.vmem %s14, %s2066
      // Predicated region
      $region77: #{bert_classifier_forward.6} parent=75 // pred_check
        %p2068 = pneg %p347
      $region78: #{bert_classifier_forward.6} parent=75 // pred_check_branch
        %2070 = sbr.rel (%p2068) target = $region80
      $region79: #{bert_classifier_forward.6} parent=75 // pred_region
        _
      $region80: #{bert_classifier_forward.6} parent=75 // pred_fallthru
        _
    $region76: #{bert_classifier_forward.6} parent=5 // pred_fallthru
      _
    %p2071 = scmp.le.s32.totalorder 2, %s20
    // Predicated region
    $region81: #{bert_classifier_forward.6} parent=5 // pred_check
      %p2072 = pneg %p2071
    $region82: #{bert_classifier_forward.6} parent=5 // pred_check_branch
      %2074 = sbr.rel (%p2072) target = $region84
    $region83: #{bert_classifier_forward.6} parent=5 // pred_region
      %s2075 = ssub.s32 %s20, 2
      // Predicated region
      $region85: #{bert_classifier_forward.6} parent=83 // pred_check
        %p2076 = pneg %p353
      $region86: #{bert_classifier_forward.6} parent=83 // pred_check_branch
        %2078 = sbr.rel (%p2076) target = $region88
      $region87: #{bert_classifier_forward.6} parent=83 // pred_region
        %p2079 = scmp.lt.s32.totalorder %s26, 1
        %s2080 = scalar_select %p2079, %s26, 1
        %s2081 = smul.addr %s2080, 8
        %s2082 = scalar_lea.vmem %s14, %s2081
      $region88: #{bert_classifier_forward.6} parent=83 // pred_fallthru
        _
    $region84: #{bert_classifier_forward.6} parent=5 // pred_fallthru
      _
  $region6: #{bert_classifier_forward.6} parent=0 // loop_footer
    %s24 = sadd.s32 1, %s20
  $region7: #{bert_classifier_forward.6} parent=0 // loop_footer_branch
    %19 = sbr.rel target = $region3
  $region8: #{bert_classifier_forward.6} parent=0 // loop_exit
    _

</llo_original>
